<compile_context>
chip_gen: v7x
topology: tpu7x:2x2x1
jax: 0.10.0
libtpu: 0.0.40
codegen_flags: <defaults>
</compile_context>

<pallas_src>
import functools
import math

import jax
import jax.numpy as jnp
from jax import lax
from jax.experimental import pallas as pl
from jax.experimental.pallas import tpu as pltpu

LN_EPS = 1e-5  # nn.LayerNorm default eps


def _layer_norm(x, gamma, beta):
    mu = jnp.mean(x, axis=-1, keepdims=True)
    var = jnp.mean(jnp.square(x - mu), axis=-1, keepdims=True)
    return (x - mu) * lax.rsqrt(var + LN_EPS) * gamma + beta


def _gelu_tanh(x):
    # TODO(synk): PyTorch nn.GELU() defaults to the exact erf form; erf has no
    # guaranteed Mosaic lowering, so the tanh approximation (<~1e-3 abs error)
    # is used here and mirrored in the in-script reference.
    c = 0.7978845608028654  # sqrt(2/pi)
    return 0.5 * x * (1.0 + jnp.tanh(c * (x + 0.044715 * x * x * x)))


# ---------------------------------------------------------------------------
# Fused kernel: one batch *block* per grid step
# ---------------------------------------------------------------------------

def _block_kernel(num_heads,
                  x_ref,
                  ln1_g_ref, ln1_b_ref,
                  wqkv_ref,
                  wproj_ref, bproj_ref,
                  ln2_g_ref, ln2_b_ref,
                  w1_ref, b1_ref, w2_ref, b2_ref,
                  o_ref):
    bblk, n, c = x_ref.shape
    hd = c // num_heads
    scale = float(hd) ** -0.5              # qk_scale = head_dim ** -0.5
    mm_dtype = wqkv_ref.dtype              # matmul-operand dtype (bf16 or f32)

    x = x_ref[...]
    if x.dtype != jnp.float32:             # skip redundant cast when already f32
        x = x.astype(jnp.float32)
    x2d = x.reshape(bblk * n, c)           # (M, C) slab for all position-wise work

    # --------------------------- attention branch ---------------------------
    h = _layer_norm(x2d, ln1_g_ref[...], ln1_b_ref[...])              # f32
    # Fused QKV projection: ONE (M, C) @ (C, 3C) MXU matmul (qkv_bias=False).
    qkv = jnp.dot(h.astype(mm_dtype), wqkv_ref[...],
                  preferred_element_type=jnp.float32)                 # (M, 3C) f32

    # Lane-aligned slices at multiples of C (= multiples of 128): whole vregs.
    q3 = qkv[:, 0 * c:1 * c].reshape(bblk, n, c).astype(mm_dtype)
    k3 = qkv[:, 1 * c:2 * c].reshape(bblk, n, c).astype(mm_dtype)
    v3 = qkv[:, 2 * c:3 * c].reshape(bblk, n, c).astype(mm_dtype)

    # Per-head attention via lane masks (no 16-of-128 lane extraction, no
    # transposes): masked q keeps only head-h lanes, the batched score einsum
    # contracts the full C axis (other lanes contribute exact zeros), and the
    # per-head AV output is merged back at its own lane block.
    lane = lax.broadcasted_iota(jnp.int32, (1, 1, c), 2)              # hoisted

    def head_body(hidx, o_acc):
        lo = hidx * hd
        mask_f32 = ((lane >= lo) & (lane < lo + hd)).astype(jnp.float32)
        mask_mm = mask_f32.astype(mm_dtype)
        qm = q3 * mask_mm
        s = jnp.einsum('bnd,bmd->bnm', qm, k3,
                       preferred_element_type=jnp.float32) * scale    # (Bblk,N,N)
        s = s - jnp.max(s, axis=-1, keepdims=True)
        p = jnp.exp(s)
        p = p * pl.reciprocal(jnp.sum(p, axis=-1, keepdims=True), approx=True)
        av = jnp.einsum('bnm,bmd->bnd', p.astype(mm_dtype), v3,
                        preferred_element_type=jnp.float32)           # (Bblk,N,C)
        return o_acc + av * mask_f32      # disjoint masks -> exact merge

    o_heads = lax.fori_loop(0, num_heads, head_body,
                            jnp.zeros((bblk, n, c), jnp.float32), unroll=True)

    # ONE (M, C) @ (C, C) output projection (replaces 8 K=16 matmuls).
    proj = jnp.dot(o_heads.reshape(bblk * n, c).astype(mm_dtype), wproj_ref[...],
                   preferred_element_type=jnp.float32)
    x1 = x2d + proj + bproj_ref[...]       # residual 1 (dropout/droppath = id)

    # ------------------------------ MLP branch ------------------------------
    h2 = _layer_norm(x1, ln2_g_ref[...], ln2_b_ref[...])
    u = jnp.dot(h2.astype(mm_dtype), w1_ref[...],
                preferred_element_type=jnp.float32) + b1_ref[...]
    u = _gelu_tanh(u)
    y = jnp.dot(u.astype(mm_dtype), w2_ref[...],
                preferred_element_type=jnp.float32) + b2_ref[...]

    o_ref[...] = (x1 + y).reshape(bblk, n, c).astype(o_ref.dtype)     # residual 2


# ---------------------------------------------------------------------------
# pallas_call wrapper
# ---------------------------------------------------------------------------

def _rep_spec(shape):
    zeros = (0,) * len(shape)
    return pl.BlockSpec(shape, lambda b, _z=zeros: _z)


def block_forward(params, x, *, num_heads, compute_dtype=jnp.bfloat16,
                  batch_block=None):
    """Fused eval-mode Block.forward: x -> x + attn(LN1(x)) -> + mlp(LN2(.))."""
    B, N, C = x.shape
    Hm = params["w1"].shape[1]

    if batch_block is None:
        # Fold batch into the block, but keep >= 2 grid steps when possible so
        # both v7x TensorCores get work (on v5e/v6e one step would also be ok).
        batch_block = B // 2 if (B > 1 and B % 2 == 0) else 1
    assert B % batch_block == 0, (B, batch_block)
    grid = (B // batch_block,)

    wd = compute_dtype
    args = (x,
            params["ln1_g"], params["ln1_b"],
            params["wqkv"].astype(wd),
            params["wproj"].astype(wd), params["bproj"],
            params["ln2_g"], params["ln2_b"],
            params["w1"].astype(wd), params["b1"],
            params["w2"].astype(wd), params["b2"])

    in_specs = [pl.BlockSpec((batch_block, N, C), lambda b: (b, 0, 0))]
    in_specs += [_rep_spec(a.shape) for a in args[1:]]

    # Advisory cost estimate so XLA schedules surrounding ops sensibly.
    flops = B * (2 * N * C * 3 * C          # fused QKV
                 + 4 * num_heads * N * N * C  # masked scores + AV (all heads)
                 + 2 * N * C * C            # output projection
                 + 4 * N * C * Hm)          # MLP fc1 + fc2
    transcendentals = B * (num_heads * N * N + N * Hm)   # exp + tanh
    itemsize = jnp.dtype(wd).itemsize
    weight_bytes = itemsize * (3 * C * C + C * C + 2 * C * Hm) + 4 * (6 * C + Hm)
    bytes_accessed = 4 * 2 * B * N * C + weight_bytes

    return pl.pallas_call(
        functools.partial(_block_kernel, num_heads),
        out_shape=jax.ShapeDtypeStruct((B, N, C), x.dtype),
        grid=grid,
        in_specs=in_specs,
        out_specs=pl.BlockSpec((batch_block, N, C), lambda b: (b, 0, 0)),
        compiler_params=pltpu.CompilerParams(
            dimension_semantics=("parallel",),
            vmem_limit_bytes=32 * 1024 * 1024),
        cost_estimate=pl.CostEstimate(flops=flops,
                                      transcendentals=transcendentals,
                                      bytes_accessed=bytes_accessed),
    )(*args)


# ---------------------------------------------------------------------------
# Deterministic parameter construction (PyTorch-style init, weights stored
# pre-transposed as (fan_in, fan_out) so the kernel does x @ W).
# ---------------------------------------------------------------------------

def make_params(key, dim, hidden):
    ks = jax.random.split(key, 8)

    def lin(k, fin, fout, bias=True):
        bound = 1.0 / math.sqrt(fin)
        kw, kb = jax.random.split(k)
        w = jax.random.uniform(kw, (fin, fout), jnp.float32, -bound, bound)
        b = (jax.random.uniform(kb, (1, fout), jnp.float32, -bound, bound)
             if bias else None)
        return w, b

    p = {}
    # LayerNorm affine params (PyTorch default init is ones / zeros; perturbed
    # slightly so the affine path is actually exercised by the parity check).
    p["ln1_g"] = 1.0 + 0.05 * jax.random.normal(ks[0], (1, dim), jnp.float32)
    p["ln1_b"] = 0.05 * jax.random.normal(ks[1], (1, dim), jnp.float32)
    p["ln2_g"] = 1.0 + 0.05 * jax.random.normal(ks[2], (1, dim), jnp.float32)
    p["ln2_b"] = 0.05 * jax.random.normal(ks[3], (1, dim), jnp.float32)
    p["wqkv"], _ = lin(ks[4], dim, 3 * dim, bias=False)   # qkv_bias=False (default)
    p["wproj"], p["bproj"] = lin(ks[5], dim, dim)
    p["w1"], p["b1"] = lin(ks[6], dim, hidden)
    p["w2"], p["b2"] = lin(ks[7], hidden, dim)
    return p


# ---------------------------------------------------------------------------
# Pure-jnp reference (standard batched multi-head attention formulation).
# `mm_dtype` controls the matmul-operand dtype so the bf16 kernel can be
# checked against a numerically matched reference; accumulation and all
# elementwise math stay in f32 (== exact PyTorch math when mm_dtype=float32,
# modulo the tanh-GELU noted above).
# ---------------------------------------------------------------------------

def reference_forward(p, x, num_heads, mm_dtype=jnp.float32):
    B, N, C = x.shape
    hd = C // num_heads
    f32 = jnp.float32

    def ln(z, g, b):
        mu = z.mean(-1, keepdims=True)
        var = ((z - mu) ** 2).mean(-1, keepdims=True)
        return (z - mu) / jnp.sqrt(var + LN_EPS) * g + b

    h = ln(x, p["ln1_g"], p["ln1_b"])
    qkv = jnp.dot(h.astype(mm_dtype), p["wqkv"].astype(mm_dtype),
                  preferred_element_type=f32)
    qkv = qkv.reshape(B, N, 3, num_heads, hd).transpose(2, 0, 3, 1, 4)
    q, k, v = qkv[0], qkv[1], qkv[2]                      # (B, H, N, hd)
    attn = jnp.einsum('bhnd,bhmd->bhnm', q.astype(mm_dtype), k.astype(mm_dtype),
                      preferred_element_type=f32) * (hd ** -0.5)
    attn = jax.nn.softmax(attn, axis=-1)
    out = jnp.einsum('bhnm,bhmd->bhnd', attn.astype(mm_dtype), v.astype(mm_dtype),
                     preferred_element_type=f32)
    out = jnp.swapaxes(out, 1, 2).reshape(B, N, C)
    x = x + jnp.dot(out.astype(mm_dtype), p["wproj"].astype(mm_dtype),
                    preferred_element_type=f32) + p["bproj"]
    h2 = ln(x, p["ln2_g"], p["ln2_b"])
    u = _gelu_tanh(jnp.dot(h2.astype(mm_dtype), p["w1"].astype(mm_dtype),
                           preferred_element_type=f32) + p["b1"])
    return x + jnp.dot(u.astype(mm_dtype), p["w2"].astype(mm_dtype),
                       preferred_element_type=f32) + p["b2"]


# ---------------------------------------------------------------------------

if __name__ == "__main__":
    key = jax.random.PRNGKey(0)
    kp, kx = jax.random.split(key)

    B, N, C = 4, 16, 128          # batch, sequence length, embed dim
    num_heads = 8                 # head_dim = 16
    mlp_hidden = int(C * 4.0)     # mlp_ratio = 4.0

    params = make_params(kp, C, mlp_hidden)
    x = jax.random.normal(kx, (B, N, C), jnp.float32)

    # Mixed-precision path (bf16 matmul operands, f32 accumulation) — the
    # performance configuration.  Checked against a numerically matched
    # reference, and loosely against the exact f32 reference.
    out_bf16 = jax.block_until_ready(block_forward(params, x, num_heads=num_heads))
    assert out_bf16.shape == (B, N, C), out_bf16.shape

    ref_bf16 = reference_forward(params, x, num_heads, mm_dtype=jnp.bfloat16)
    ref_f32 = reference_forward(params, x, num_heads, mm_dtype=jnp.float32)
    err_matched = float(jnp.max(jnp.abs(out_bf16 - ref_bf16)))
    err_exact = float(jnp.max(jnp.abs(out_bf16 - ref_f32)))
    assert jnp.allclose(out_bf16, ref_bf16, atol=1e-2, rtol=1e-2), err_matched
    assert err_exact < 0.1, err_exact

    # Full-f32 matmul path: tight parity with the exact-math reference (only
    # the approximate softmax reciprocal and accumulation order differ).
    out_f32 = jax.block_until_ready(
        block_forward(params, x, num_heads=num_heads, compute_dtype=jnp.float32))
    err_f32 = float(jnp.max(jnp.abs(out_f32 - ref_f32)))
    assert jnp.allclose(out_f32, ref_f32, atol=5e-3, rtol=5e-3), err_f32

    print("KERNEL_OK")
</pallas_src>

<mosaic_0001>
module attributes {stable_mosaic.version = 11 : i64} {
  func.func @_block_kernel(%arg0: i32, %arg1: memref<2x16x128xf32, #tpu.memory_space<vmem>>, %arg2: memref<1x128xf32, #tpu.memory_space<vmem>>, %arg3: memref<1x128xf32, #tpu.memory_space<vmem>>, %arg4: memref<128x384xbf16, #tpu.memory_space<vmem>>, %arg5: memref<128x128xbf16, #tpu.memory_space<vmem>>, %arg6: memref<1x128xf32, #tpu.memory_space<vmem>>, %arg7: memref<1x128xf32, #tpu.memory_space<vmem>>, %arg8: memref<1x128xf32, #tpu.memory_space<vmem>>, %arg9: memref<128x512xbf16, #tpu.memory_space<vmem>>, %arg10: memref<1x512xf32, #tpu.memory_space<vmem>>, %arg11: memref<512x128xbf16, #tpu.memory_space<vmem>>, %arg12: memref<1x128xf32, #tpu.memory_space<vmem>>, %arg13: memref<2x16x128xf32, #tpu.memory_space<vmem>>) attributes {dimension_semantics = [#tpu.dimension_semantics<parallel>], iteration_bounds = array<i64: 2>, scalar_prefetch = 0 : i64, scratch_operands = 0 : i64, tpu.core_type = #tpu.core_type<tc>, window_params = [{transform_indices = @transform_0, window_bounds = array<i64: 2, 16, 128>}, {pipeline_mode = #tpu.pipeline_mode<synchronous>, transform_indices = @transform_1, window_bounds = array<i64: 1, 128>}, {pipeline_mode = #tpu.pipeline_mode<synchronous>, transform_indices = @transform_2, window_bounds = array<i64: 1, 128>}, {pipeline_mode = #tpu.pipeline_mode<synchronous>, transform_indices = @transform_3, window_bounds = array<i64: 128, 384>}, {pipeline_mode = #tpu.pipeline_mode<synchronous>, transform_indices = @transform_4, window_bounds = array<i64: 128, 128>}, {pipeline_mode = #tpu.pipeline_mode<synchronous>, transform_indices = @transform_5, window_bounds = array<i64: 1, 128>}, {pipeline_mode = #tpu.pipeline_mode<synchronous>, transform_indices = @transform_6, window_bounds = array<i64: 1, 128>}, {pipeline_mode = #tpu.pipeline_mode<synchronous>, transform_indices = @transform_7, window_bounds = array<i64: 1, 128>}, {pipeline_mode = #tpu.pipeline_mode<synchronous>, transform_indices = @transform_8, window_bounds = array<i64: 128, 512>}, {pipeline_mode = #tpu.pipeline_mode<synchronous>, transform_indices = @transform_9, window_bounds = array<i64: 1, 512>}, {pipeline_mode = #tpu.pipeline_mode<synchronous>, transform_indices = @transform_10, window_bounds = array<i64: 512, 128>}, {pipeline_mode = #tpu.pipeline_mode<synchronous>, transform_indices = @transform_11, window_bounds = array<i64: 1, 128>}, {transform_indices = @transform_12, window_bounds = array<i64: 2, 16, 128>}]} {
    %c0 = arith.constant 0 : index
    %c0_0 = arith.constant 0 : index
    %c0_1 = arith.constant 0 : index
    %0 = vector.load %arg1[%c0, %c0_0, %c0_1] : memref<2x16x128xf32, #tpu.memory_space<vmem>>, vector<2x16x128xf32>
    %1 = vector.shape_cast %0 : vector<2x16x128xf32> to vector<32x128xf32>
    %c0_2 = arith.constant 0 : index
    %c0_3 = arith.constant 0 : index
    %2 = vector.load %arg2[%c0_2, %c0_3] : memref<1x128xf32, #tpu.memory_space<vmem>>, vector<1x128xf32>
    %c0_4 = arith.constant 0 : index
    %c0_5 = arith.constant 0 : index
    %3 = vector.load %arg3[%c0_4, %c0_5] : memref<1x128xf32, #tpu.memory_space<vmem>>, vector<1x128xf32>
    %cst = arith.constant dense<0.000000e+00> : vector<32xf32>
    %4 = vector.multi_reduction <add>, %1, %cst [1] : vector<32x128xf32> to vector<32xf32>
    %5 = vector.shape_cast %4 : vector<32xf32> to vector<32x1xf32>
    %cst_6 = arith.constant 1.280000e+02 : f32
    %6 = vector.broadcast %cst_6 : f32 to vector<32x1xf32>
    %7 = arith.divf %5, %6 : vector<32x1xf32>
    %8 = vector.broadcast %7 : vector<32x1xf32> to vector<32x128xf32>
    %9 = arith.subf %1, %8 : vector<32x128xf32>
    %10 = arith.mulf %9, %9 : vector<32x128xf32>
    %cst_7 = arith.constant dense<0.000000e+00> : vector<32xf32>
    %11 = vector.multi_reduction <add>, %10, %cst_7 [1] : vector<32x128xf32> to vector<32xf32>
    %12 = vector.shape_cast %11 : vector<32xf32> to vector<32x1xf32>
    %cst_8 = arith.constant 1.280000e+02 : f32
    %13 = vector.broadcast %cst_8 : f32 to vector<32x1xf32>
    %14 = arith.divf %12, %13 : vector<32x1xf32>
    %15 = vector.broadcast %7 : vector<32x1xf32> to vector<32x128xf32>
    %16 = arith.subf %1, %15 : vector<32x128xf32>
    %cst_9 = arith.constant 9.99999974E-6 : f32
    %17 = vector.broadcast %cst_9 : f32 to vector<32x1xf32>
    %18 = arith.addf %14, %17 : vector<32x1xf32>
    %19 = math.rsqrt %18 : vector<32x1xf32>
    %20 = vector.broadcast %19 : vector<32x1xf32> to vector<32x128xf32>
    %21 = arith.mulf %16, %20 : vector<32x128xf32>
    %22 = vector.broadcast %2 : vector<1x128xf32> to vector<32x128xf32>
    %23 = arith.mulf %21, %22 : vector<32x128xf32>
    %24 = vector.broadcast %3 : vector<1x128xf32> to vector<32x128xf32>
    %25 = arith.addf %23, %24 : vector<32x128xf32>
    %26 = arith.truncf %25 : vector<32x128xf32> to vector<32x128xbf16>
    %c0_10 = arith.constant 0 : index
    %c0_11 = arith.constant 0 : index
    %27 = vector.load %arg4[%c0_10, %c0_11] : memref<128x384xbf16, #tpu.memory_space<vmem>>, vector<128x384xbf16>
    %cst_12 = arith.constant dense<0.000000e+00> : vector<32x384xf32>
    %28 = tpu.matmul %26, %27, %cst_12 {dimension_numbers = #tpu.dot_dimension_numbers<[1], [0], [0], [1], [0, 0, 1, 1], [], []>} : vector<32x128xbf16>, vector<128x384xbf16>, vector<32x384xf32> -> vector<32x384xf32>
    %29 = vector.extract_strided_slice %28 {offsets = [0, 0], sizes = [32, 128], strides = [1, 1]} : vector<32x384xf32> to vector<32x128xf32>
    %30 = vector.shape_cast %29 : vector<32x128xf32> to vector<2x16x128xf32>
    %31 = arith.truncf %30 : vector<2x16x128xf32> to vector<2x16x128xbf16>
    %32 = vector.extract_strided_slice %28 {offsets = [0, 128], sizes = [32, 128], strides = [1, 1]} : vector<32x384xf32> to vector<32x128xf32>
    %33 = vector.shape_cast %32 : vector<32x128xf32> to vector<2x16x128xf32>
    %34 = arith.truncf %33 : vector<2x16x128xf32> to vector<2x16x128xbf16>
    %35 = vector.extract_strided_slice %28 {offsets = [0, 256], sizes = [32, 128], strides = [1, 1]} : vector<32x384xf32> to vector<32x128xf32>
    %36 = vector.shape_cast %35 : vector<32x128xf32> to vector<2x16x128xf32>
    %37 = arith.truncf %36 : vector<2x16x128xf32> to vector<2x16x128xbf16>
    %38 = tpu.iota {dimensions = array<i32: 2>} : vector<1x1x128xi32>
    %cst_13 = arith.constant 0.000000e+00 : f32
    %39 = vector.broadcast %cst_13 : f32 to vector<2x16x128xf32>
    %c0_i32 = arith.constant 0 : i32
    %c16_i32 = arith.constant 16 : i32
    %40 = arith.muli %c0_i32, %c16_i32 : i32
    %41 = vector.broadcast %40 : i32 to vector<1x1x128xi32>
    %42 = arith.cmpi sge, %38, %41 : vector<1x1x128xi32>
    %c16_i32_14 = arith.constant 16 : i32
    %43 = arith.addi %40, %c16_i32_14 : i32
    %44 = vector.broadcast %43 : i32 to vector<1x1x128xi32>
    %45 = arith.cmpi slt, %38, %44 : vector<1x1x128xi32>
    %46 = arith.andi %42, %45 : vector<1x1x128xi1>
    %47 = arith.extui %46 : vector<1x1x128xi1> to vector<1x1x128xi32>
    %48 = arith.sitofp %47 : vector<1x1x128xi32> to vector<1x1x128xf32>
    %49 = arith.truncf %48 : vector<1x1x128xf32> to vector<1x1x128xbf16>
    %50 = vector.broadcast %49 : vector<1x1x128xbf16> to vector<2x16x128xbf16>
    %51 = arith.mulf %31, %50 : vector<2x16x128xbf16>
    "tpu.trace_start"() <{level = 10 : i32, message = "bnd,bmd->bnm"}> : () -> ()
    %cst_15 = arith.constant dense<0.000000e+00> : vector<2x16x16xf32>
    %52 = tpu.matmul %51, %34, %cst_15 {dimension_numbers = #tpu.dot_dimension_numbers<[2], [2], [1], [1], [0, 0, 0, 1, 1, 1], [0], [0]>} : vector<2x16x128xbf16>, vector<2x16x128xbf16>, vector<2x16x16xf32> -> vector<2x16x16xf32>
    "tpu.trace_stop"() : () -> ()
    %cst_16 = arith.constant 2.500000e-01 : f32
    %53 = vector.broadcast %cst_16 : f32 to vector<2x16x16xf32>
    %54 = arith.mulf %52, %53 : vector<2x16x16xf32>
    %cst_17 = arith.constant dense<0xFF800000> : vector<2x16xf32>
    %55 = vector.multi_reduction <maximumf>, %54, %cst_17 [2] : vector<2x16x16xf32> to vector<2x16xf32>
    %56 = vector.shape_cast %55 : vector<2x16xf32> to vector<2x16x1xf32>
    %57 = vector.broadcast %56 : vector<2x16x1xf32> to vector<2x16x16xf32>
    %58 = arith.subf %54, %57 : vector<2x16x16xf32>
    %59 = math.exp %58 : vector<2x16x16xf32>
    %cst_18 = arith.constant dense<0.000000e+00> : vector<2x16xf32>
    %60 = vector.multi_reduction <add>, %59, %cst_18 [2] : vector<2x16x16xf32> to vector<2x16xf32>
    %61 = vector.shape_cast %60 : vector<2x16xf32> to vector<2x16x1xf32>
    %62 = tpu.reciprocal %61 {approx = true} : vector<2x16x1xf32> -> vector<2x16x1xf32>
    %63 = vector.broadcast %62 : vector<2x16x1xf32> to vector<2x16x16xf32>
    %64 = arith.mulf %59, %63 : vector<2x16x16xf32>
    %65 = arith.truncf %64 : vector<2x16x16xf32> to vector<2x16x16xbf16>
    "tpu.trace_start"() <{level = 10 : i32, message = "bnm,bmd->bnd"}> : () -> ()
    %cst_19 = arith.constant dense<0.000000e+00> : vector<2x16x128xf32>
    %66 = tpu.matmul %65, %37, %cst_19 {dimension_numbers = #tpu.dot_dimension_numbers<[2], [1], [1], [2], [0, 0, 0, 1, 1, 2], [0], [0]>} : vector<2x16x16xbf16>, vector<2x16x128xbf16>, vector<2x16x128xf32> -> vector<2x16x128xf32>
    "tpu.trace_stop"() : () -> ()
    %67 = vector.broadcast %48 : vector<1x1x128xf32> to vector<2x16x128xf32>
    %68 = arith.mulf %66, %67 : vector<2x16x128xf32>
    %69 = arith.addf %39, %68 : vector<2x16x128xf32>
    %c1_i32 = arith.constant 1 : i32
    %c16_i32_20 = arith.constant 16 : i32
    %70 = arith.muli %c1_i32, %c16_i32_20 : i32
    %71 = vector.broadcast %70 : i32 to vector<1x1x128xi32>
    %72 = arith.cmpi sge, %38, %71 : vector<1x1x128xi32>
    %c16_i32_21 = arith.constant 16 : i32
    %73 = arith.addi %70, %c16_i32_21 : i32
    %74 = vector.broadcast %73 : i32 to vector<1x1x128xi32>
    %75 = arith.cmpi slt, %38, %74 : vector<1x1x128xi32>
    %76 = arith.andi %72, %75 : vector<1x1x128xi1>
    %77 = arith.extui %76 : vector<1x1x128xi1> to vector<1x1x128xi32>
    %78 = arith.sitofp %77 : vector<1x1x128xi32> to vector<1x1x128xf32>
    %79 = arith.truncf %78 : vector<1x1x128xf32> to vector<1x1x128xbf16>
    %80 = vector.broadcast %79 : vector<1x1x128xbf16> to vector<2x16x128xbf16>
    %81 = arith.mulf %31, %80 : vector<2x16x128xbf16>
    "tpu.trace_start"() <{level = 10 : i32, message = "bnd,bmd->bnm"}> : () -> ()
    %cst_22 = arith.constant dense<0.000000e+00> : vector<2x16x16xf32>
    %82 = tpu.matmul %81, %34, %cst_22 {dimension_numbers = #tpu.dot_dimension_numbers<[2], [2], [1], [1], [0, 0, 0, 1, 1, 1], [0], [0]>} : vector<2x16x128xbf16>, vector<2x16x128xbf16>, vector<2x16x16xf32> -> vector<2x16x16xf32>
    "tpu.trace_stop"() : () -> ()
    %cst_23 = arith.constant 2.500000e-01 : f32
    %83 = vector.broadcast %cst_23 : f32 to vector<2x16x16xf32>
    %84 = arith.mulf %82, %83 : vector<2x16x16xf32>
    %cst_24 = arith.constant dense<0xFF800000> : vector<2x16xf32>
    %85 = vector.multi_reduction <maximumf>, %84, %cst_24 [2] : vector<2x16x16xf32> to vector<2x16xf32>
    %86 = vector.shape_cast %85 : vector<2x16xf32> to vector<2x16x1xf32>
    %87 = vector.broadcast %86 : vector<2x16x1xf32> to vector<2x16x16xf32>
    %88 = arith.subf %84, %87 : vector<2x16x16xf32>
    %89 = math.exp %88 : vector<2x16x16xf32>
    %cst_25 = arith.constant dense<0.000000e+00> : vector<2x16xf32>
    %90 = vector.multi_reduction <add>, %89, %cst_25 [2] : vector<2x16x16xf32> to vector<2x16xf32>
    %91 = vector.shape_cast %90 : vector<2x16xf32> to vector<2x16x1xf32>
    %92 = tpu.reciprocal %91 {approx = true} : vector<2x16x1xf32> -> vector<2x16x1xf32>
    %93 = vector.broadcast %92 : vector<2x16x1xf32> to vector<2x16x16xf32>
    %94 = arith.mulf %89, %93 : vector<2x16x16xf32>
    %95 = arith.truncf %94 : vector<2x16x16xf32> to vector<2x16x16xbf16>
    "tpu.trace_start"() <{level = 10 : i32, message = "bnm,bmd->bnd"}> : () -> ()
    %cst_26 = arith.constant dense<0.000000e+00> : vector<2x16x128xf32>
    %96 = tpu.matmul %95, %37, %cst_26 {dimension_numbers = #tpu.dot_dimension_numbers<[2], [1], [1], [2], [0, 0, 0, 1, 1, 2], [0], [0]>} : vector<2x16x16xbf16>, vector<2x16x128xbf16>, vector<2x16x128xf32> -> vector<2x16x128xf32>
    "tpu.trace_stop"() : () -> ()
    %97 = vector.broadcast %78 : vector<1x1x128xf32> to vector<2x16x128xf32>
    %98 = arith.mulf %96, %97 : vector<2x16x128xf32>
    %99 = arith.addf %69, %98 : vector<2x16x128xf32>
    %c2_i32 = arith.constant 2 : i32
    %c16_i32_27 = arith.constant 16 : i32
    %100 = arith.muli %c2_i32, %c16_i32_27 : i32
    %101 = vector.broadcast %100 : i32 to vector<1x1x128xi32>
    %102 = arith.cmpi sge, %38, %101 : vector<1x1x128xi32>
    %c16_i32_28 = arith.constant 16 : i32
    %103 = arith.addi %100, %c16_i32_28 : i32
    %104 = vector.broadcast %103 : i32 to vector<1x1x128xi32>
    %105 = arith.cmpi slt, %38, %104 : vector<1x1x128xi32>
    %106 = arith.andi %102, %105 : vector<1x1x128xi1>
    %107 = arith.extui %106 : vector<1x1x128xi1> to vector<1x1x128xi32>
    %108 = arith.sitofp %107 : vector<1x1x128xi32> to vector<1x1x128xf32>
    %109 = arith.truncf %108 : vector<1x1x128xf32> to vector<1x1x128xbf16>
    %110 = vector.broadcast %109 : vector<1x1x128xbf16> to vector<2x16x128xbf16>
    %111 = arith.mulf %31, %110 : vector<2x16x128xbf16>
    "tpu.trace_start"() <{level = 10 : i32, message = "bnd,bmd->bnm"}> : () -> ()
    %cst_29 = arith.constant dense<0.000000e+00> : vector<2x16x16xf32>
    %112 = tpu.matmul %111, %34, %cst_29 {dimension_numbers = #tpu.dot_dimension_numbers<[2], [2], [1], [1], [0, 0, 0, 1, 1, 1], [0], [0]>} : vector<2x16x128xbf16>, vector<2x16x128xbf16>, vector<2x16x16xf32> -> vector<2x16x16xf32>
    "tpu.trace_stop"() : () -> ()
    %cst_30 = arith.constant 2.500000e-01 : f32
    %113 = vector.broadcast %cst_30 : f32 to vector<2x16x16xf32>
    %114 = arith.mulf %112, %113 : vector<2x16x16xf32>
    %cst_31 = arith.constant dense<0xFF800000> : vector<2x16xf32>
    %115 = vector.multi_reduction <maximumf>, %114, %cst_31 [2] : vector<2x16x16xf32> to vector<2x16xf32>
    %116 = vector.shape_cast %115 : vector<2x16xf32> to vector<2x16x1xf32>
    %117 = vector.broadcast %116 : vector<2x16x1xf32> to vector<2x16x16xf32>
    %118 = arith.subf %114, %117 : vector<2x16x16xf32>
    %119 = math.exp %118 : vector<2x16x16xf32>
    %cst_32 = arith.constant dense<0.000000e+00> : vector<2x16xf32>
    %120 = vector.multi_reduction <add>, %119, %cst_32 [2] : vector<2x16x16xf32> to vector<2x16xf32>
    %121 = vector.shape_cast %120 : vector<2x16xf32> to vector<2x16x1xf32>
    %122 = tpu.reciprocal %121 {approx = true} : vector<2x16x1xf32> -> vector<2x16x1xf32>
    %123 = vector.broadcast %122 : vector<2x16x1xf32> to vector<2x16x16xf32>
    %124 = arith.mulf %119, %123 : vector<2x16x16xf32>
    %125 = arith.truncf %124 : vector<2x16x16xf32> to vector<2x16x16xbf16>
    "tpu.trace_start"() <{level = 10 : i32, message = "bnm,bmd->bnd"}> : () -> ()
    %cst_33 = arith.constant dense<0.000000e+00> : vector<2x16x128xf32>
    %126 = tpu.matmul %125, %37, %cst_33 {dimension_numbers = #tpu.dot_dimension_numbers<[2], [1], [1], [2], [0, 0, 0, 1, 1, 2], [0], [0]>} : vector<2x16x16xbf16>, vector<2x16x128xbf16>, vector<2x16x128xf32> -> vector<2x16x128xf32>
    "tpu.trace_stop"() : () -> ()
    %127 = vector.broadcast %108 : vector<1x1x128xf32> to vector<2x16x128xf32>
    %128 = arith.mulf %126, %127 : vector<2x16x128xf32>
    %129 = arith.addf %99, %128 : vector<2x16x128xf32>
    %c3_i32 = arith.constant 3 : i32
    %c16_i32_34 = arith.constant 16 : i32
    %130 = arith.muli %c3_i32, %c16_i32_34 : i32
    %131 = vector.broadcast %130 : i32 to vector<1x1x128xi32>
    %132 = arith.cmpi sge, %38, %131 : vector<1x1x128xi32>
    %c16_i32_35 = arith.constant 16 : i32
    %133 = arith.addi %130, %c16_i32_35 : i32
    %134 = vector.broadcast %133 : i32 to vector<1x1x128xi32>
    %135 = arith.cmpi slt, %38, %134 : vector<1x1x128xi32>
    %136 = arith.andi %132, %135 : vector<1x1x128xi1>
    %137 = arith.extui %136 : vector<1x1x128xi1> to vector<1x1x128xi32>
    %138 = arith.sitofp %137 : vector<1x1x128xi32> to vector<1x1x128xf32>
    %139 = arith.truncf %138 : vector<1x1x128xf32> to vector<1x1x128xbf16>
    %140 = vector.broadcast %139 : vector<1x1x128xbf16> to vector<2x16x128xbf16>
    %141 = arith.mulf %31, %140 : vector<2x16x128xbf16>
    "tpu.trace_start"() <{level = 10 : i32, message = "bnd,bmd->bnm"}> : () -> ()
    %cst_36 = arith.constant dense<0.000000e+00> : vector<2x16x16xf32>
    %142 = tpu.matmul %141, %34, %cst_36 {dimension_numbers = #tpu.dot_dimension_numbers<[2], [2], [1], [1], [0, 0, 0, 1, 1, 1], [0], [0]>} : vector<2x16x128xbf16>, vector<2x16x128xbf16>, vector<2x16x16xf32> -> vector<2x16x16xf32>
    "tpu.trace_stop"() : () -> ()
    %cst_37 = arith.constant 2.500000e-01 : f32
    %143 = vector.broadcast %cst_37 : f32 to vector<2x16x16xf32>
    %144 = arith.mulf %142, %143 : vector<2x16x16xf32>
    %cst_38 = arith.constant dense<0xFF800000> : vector<2x16xf32>
    %145 = vector.multi_reduction <maximumf>, %144, %cst_38 [2] : vector<2x16x16xf32> to vector<2x16xf32>
    %146 = vector.shape_cast %145 : vector<2x16xf32> to vector<2x16x1xf32>
    %147 = vector.broadcast %146 : vector<2x16x1xf32> to vector<2x16x16xf32>
    %148 = arith.subf %144, %147 : vector<2x16x16xf32>
    %149 = math.exp %148 : vector<2x16x16xf32>
    %cst_39 = arith.constant dense<0.000000e+00> : vector<2x16xf32>
    %150 = vector.multi_reduction <add>, %149, %cst_39 [2] : vector<2x16x16xf32> to vector<2x16xf32>
    %151 = vector.shape_cast %150 : vector<2x16xf32> to vector<2x16x1xf32>
    %152 = tpu.reciprocal %151 {approx = true} : vector<2x16x1xf32> -> vector<2x16x1xf32>
    %153 = vector.broadcast %152 : vector<2x16x1xf32> to vector<2x16x16xf32>
    %154 = arith.mulf %149, %153 : vector<2x16x16xf32>
    %155 = arith.truncf %154 : vector<2x16x16xf32> to vector<2x16x16xbf16>
    "tpu.trace_start"() <{level = 10 : i32, message = "bnm,bmd->bnd"}> : () -> ()
    %cst_40 = arith.constant dense<0.000000e+00> : vector<2x16x128xf32>
    %156 = tpu.matmul %155, %37, %cst_40 {dimension_numbers = #tpu.dot_dimension_numbers<[2], [1], [1], [2], [0, 0, 0, 1, 1, 2], [0], [0]>} : vector<2x16x16xbf16>, vector<2x16x128xbf16>, vector<2x16x128xf32> -> vector<2x16x128xf32>
    "tpu.trace_stop"() : () -> ()
    %157 = vector.broadcast %138 : vector<1x1x128xf32> to vector<2x16x128xf32>
    %158 = arith.mulf %156, %157 : vector<2x16x128xf32>
    %159 = arith.addf %129, %158 : vector<2x16x128xf32>
    %c4_i32 = arith.constant 4 : i32
    %c16_i32_41 = arith.constant 16 : i32
    %160 = arith.muli %c4_i32, %c16_i32_41 : i32
    %161 = vector.broadcast %160 : i32 to vector<1x1x128xi32>
    %162 = arith.cmpi sge, %38, %161 : vector<1x1x128xi32>
    %c16_i32_42 = arith.constant 16 : i32
    %163 = arith.addi %160, %c16_i32_42 : i32
    %164 = vector.broadcast %163 : i32 to vector<1x1x128xi32>
    %165 = arith.cmpi slt, %38, %164 : vector<1x1x128xi32>
    %166 = arith.andi %162, %165 : vector<1x1x128xi1>
    %167 = arith.extui %166 : vector<1x1x128xi1> to vector<1x1x128xi32>
    %168 = arith.sitofp %167 : vector<1x1x128xi32> to vector<1x1x128xf32>
    %169 = arith.truncf %168 : vector<1x1x128xf32> to vector<1x1x128xbf16>
    %170 = vector.broadcast %169 : vector<1x1x128xbf16> to vector<2x16x128xbf16>
    %171 = arith.mulf %31, %170 : vector<2x16x128xbf16>
    "tpu.trace_start"() <{level = 10 : i32, message = "bnd,bmd->bnm"}> : () -> ()
    %cst_43 = arith.constant dense<0.000000e+00> : vector<2x16x16xf32>
    %172 = tpu.matmul %171, %34, %cst_43 {dimension_numbers = #tpu.dot_dimension_numbers<[2], [2], [1], [1], [0, 0, 0, 1, 1, 1], [0], [0]>} : vector<2x16x128xbf16>, vector<2x16x128xbf16>, vector<2x16x16xf32> -> vector<2x16x16xf32>
    "tpu.trace_stop"() : () -> ()
    %cst_44 = arith.constant 2.500000e-01 : f32
    %173 = vector.broadcast %cst_44 : f32 to vector<2x16x16xf32>
    %174 = arith.mulf %172, %173 : vector<2x16x16xf32>
    %cst_45 = arith.constant dense<0xFF800000> : vector<2x16xf32>
    %175 = vector.multi_reduction <maximumf>, %174, %cst_45 [2] : vector<2x16x16xf32> to vector<2x16xf32>
    %176 = vector.shape_cast %175 : vector<2x16xf32> to vector<2x16x1xf32>
    %177 = vector.broadcast %176 : vector<2x16x1xf32> to vector<2x16x16xf32>
    %178 = arith.subf %174, %177 : vector<2x16x16xf32>
    %179 = math.exp %178 : vector<2x16x16xf32>
    %cst_46 = arith.constant dense<0.000000e+00> : vector<2x16xf32>
    %180 = vector.multi_reduction <add>, %179, %cst_46 [2] : vector<2x16x16xf32> to vector<2x16xf32>
    %181 = vector.shape_cast %180 : vector<2x16xf32> to vector<2x16x1xf32>
    %182 = tpu.reciprocal %181 {approx = true} : vector<2x16x1xf32> -> vector<2x16x1xf32>
    %183 = vector.broadcast %182 : vector<2x16x1xf32> to vector<2x16x16xf32>
    %184 = arith.mulf %179, %183 : vector<2x16x16xf32>
    %185 = arith.truncf %184 : vector<2x16x16xf32> to vector<2x16x16xbf16>
    "tpu.trace_start"() <{level = 10 : i32, message = "bnm,bmd->bnd"}> : () -> ()
    %cst_47 = arith.constant dense<0.000000e+00> : vector<2x16x128xf32>
    %186 = tpu.matmul %185, %37, %cst_47 {dimension_numbers = #tpu.dot_dimension_numbers<[2], [1], [1], [2], [0, 0, 0, 1, 1, 2], [0], [0]>} : vector<2x16x16xbf16>, vector<2x16x128xbf16>, vector<2x16x128xf32> -> vector<2x16x128xf32>
    "tpu.trace_stop"() : () -> ()
    %187 = vector.broadcast %168 : vector<1x1x128xf32> to vector<2x16x128xf32>
    %188 = arith.mulf %186, %187 : vector<2x16x128xf32>
    %189 = arith.addf %159, %188 : vector<2x16x128xf32>
    %c5_i32 = arith.constant 5 : i32
    %c16_i32_48 = arith.constant 16 : i32
    %190 = arith.muli %c5_i32, %c16_i32_48 : i32
    %191 = vector.broadcast %190 : i32 to vector<1x1x128xi32>
    %192 = arith.cmpi sge, %38, %191 : vector<1x1x128xi32>
    %c16_i32_49 = arith.constant 16 : i32
    %193 = arith.addi %190, %c16_i32_49 : i32
    %194 = vector.broadcast %193 : i32 to vector<1x1x128xi32>
    %195 = arith.cmpi slt, %38, %194 : vector<1x1x128xi32>
    %196 = arith.andi %192, %195 : vector<1x1x128xi1>
    %197 = arith.extui %196 : vector<1x1x128xi1> to vector<1x1x128xi32>
    %198 = arith.sitofp %197 : vector<1x1x128xi32> to vector<1x1x128xf32>
    %199 = arith.truncf %198 : vector<1x1x128xf32> to vector<1x1x128xbf16>
    %200 = vector.broadcast %199 : vector<1x1x128xbf16> to vector<2x16x128xbf16>
    %201 = arith.mulf %31, %200 : vector<2x16x128xbf16>
    "tpu.trace_start"() <{level = 10 : i32, message = "bnd,bmd->bnm"}> : () -> ()
    %cst_50 = arith.constant dense<0.000000e+00> : vector<2x16x16xf32>
    %202 = tpu.matmul %201, %34, %cst_50 {dimension_numbers = #tpu.dot_dimension_numbers<[2], [2], [1], [1], [0, 0, 0, 1, 1, 1], [0], [0]>} : vector<2x16x128xbf16>, vector<2x16x128xbf16>, vector<2x16x16xf32> -> vector<2x16x16xf32>
    "tpu.trace_stop"() : () -> ()
    %cst_51 = arith.constant 2.500000e-01 : f32
    %203 = vector.broadcast %cst_51 : f32 to vector<2x16x16xf32>
    %204 = arith.mulf %202, %203 : vector<2x16x16xf32>
    %cst_52 = arith.constant dense<0xFF800000> : vector<2x16xf32>
    %205 = vector.multi_reduction <maximumf>, %204, %cst_52 [2] : vector<2x16x16xf32> to vector<2x16xf32>
    %206 = vector.shape_cast %205 : vector<2x16xf32> to vector<2x16x1xf32>
    %207 = vector.broadcast %206 : vector<2x16x1xf32> to vector<2x16x16xf32>
    %208 = arith.subf %204, %207 : vector<2x16x16xf32>
    %209 = math.exp %208 : vector<2x16x16xf32>
    %cst_53 = arith.constant dense<0.000000e+00> : vector<2x16xf32>
    %210 = vector.multi_reduction <add>, %209, %cst_53 [2] : vector<2x16x16xf32> to vector<2x16xf32>
    %211 = vector.shape_cast %210 : vector<2x16xf32> to vector<2x16x1xf32>
    %212 = tpu.reciprocal %211 {approx = true} : vector<2x16x1xf32> -> vector<2x16x1xf32>
    %213 = vector.broadcast %212 : vector<2x16x1xf32> to vector<2x16x16xf32>
    %214 = arith.mulf %209, %213 : vector<2x16x16xf32>
    %215 = arith.truncf %214 : vector<2x16x16xf32> to vector<2x16x16xbf16>
    "tpu.trace_start"() <{level = 10 : i32, message = "bnm,bmd->bnd"}> : () -> ()
    %cst_54 = arith.constant dense<0.000000e+00> : vector<2x16x128xf32>
    %216 = tpu.matmul %215, %37, %cst_54 {dimension_numbers = #tpu.dot_dimension_numbers<[2], [1], [1], [2], [0, 0, 0, 1, 1, 2], [0], [0]>} : vector<2x16x16xbf16>, vector<2x16x128xbf16>, vector<2x16x128xf32> -> vector<2x16x128xf32>
    "tpu.trace_stop"() : () -> ()
    %217 = vector.broadcast %198 : vector<1x1x128xf32> to vector<2x16x128xf32>
    %218 = arith.mulf %216, %217 : vector<2x16x128xf32>
    %219 = arith.addf %189, %218 : vector<2x16x128xf32>
    %c6_i32 = arith.constant 6 : i32
    %c16_i32_55 = arith.constant 16 : i32
    %220 = arith.muli %c6_i32, %c16_i32_55 : i32
    %221 = vector.broadcast %220 : i32 to vector<1x1x128xi32>
    %222 = arith.cmpi sge, %38, %221 : vector<1x1x128xi32>
    %c16_i32_56 = arith.constant 16 : i32
    %223 = arith.addi %220, %c16_i32_56 : i32
    %224 = vector.broadcast %223 : i32 to vector<1x1x128xi32>
    %225 = arith.cmpi slt, %38, %224 : vector<1x1x128xi32>
    %226 = arith.andi %222, %225 : vector<1x1x128xi1>
    %227 = arith.extui %226 : vector<1x1x128xi1> to vector<1x1x128xi32>
    %228 = arith.sitofp %227 : vector<1x1x128xi32> to vector<1x1x128xf32>
    %229 = arith.truncf %228 : vector<1x1x128xf32> to vector<1x1x128xbf16>
    %230 = vector.broadcast %229 : vector<1x1x128xbf16> to vector<2x16x128xbf16>
    %231 = arith.mulf %31, %230 : vector<2x16x128xbf16>
    "tpu.trace_start"() <{level = 10 : i32, message = "bnd,bmd->bnm"}> : () -> ()
    %cst_57 = arith.constant dense<0.000000e+00> : vector<2x16x16xf32>
    %232 = tpu.matmul %231, %34, %cst_57 {dimension_numbers = #tpu.dot_dimension_numbers<[2], [2], [1], [1], [0, 0, 0, 1, 1, 1], [0], [0]>} : vector<2x16x128xbf16>, vector<2x16x128xbf16>, vector<2x16x16xf32> -> vector<2x16x16xf32>
    "tpu.trace_stop"() : () -> ()
    %cst_58 = arith.constant 2.500000e-01 : f32
    %233 = vector.broadcast %cst_58 : f32 to vector<2x16x16xf32>
    %234 = arith.mulf %232, %233 : vector<2x16x16xf32>
    %cst_59 = arith.constant dense<0xFF800000> : vector<2x16xf32>
    %235 = vector.multi_reduction <maximumf>, %234, %cst_59 [2] : vector<2x16x16xf32> to vector<2x16xf32>
    %236 = vector.shape_cast %235 : vector<2x16xf32> to vector<2x16x1xf32>
    %237 = vector.broadcast %236 : vector<2x16x1xf32> to vector<2x16x16xf32>
    %238 = arith.subf %234, %237 : vector<2x16x16xf32>
    %239 = math.exp %238 : vector<2x16x16xf32>
    %cst_60 = arith.constant dense<0.000000e+00> : vector<2x16xf32>
    %240 = vector.multi_reduction <add>, %239, %cst_60 [2] : vector<2x16x16xf32> to vector<2x16xf32>
    %241 = vector.shape_cast %240 : vector<2x16xf32> to vector<2x16x1xf32>
    %242 = tpu.reciprocal %241 {approx = true} : vector<2x16x1xf32> -> vector<2x16x1xf32>
    %243 = vector.broadcast %242 : vector<2x16x1xf32> to vector<2x16x16xf32>
    %244 = arith.mulf %239, %243 : vector<2x16x16xf32>
    %245 = arith.truncf %244 : vector<2x16x16xf32> to vector<2x16x16xbf16>
    "tpu.trace_start"() <{level = 10 : i32, message = "bnm,bmd->bnd"}> : () -> ()
    %cst_61 = arith.constant dense<0.000000e+00> : vector<2x16x128xf32>
    %246 = tpu.matmul %245, %37, %cst_61 {dimension_numbers = #tpu.dot_dimension_numbers<[2], [1], [1], [2], [0, 0, 0, 1, 1, 2], [0], [0]>} : vector<2x16x16xbf16>, vector<2x16x128xbf16>, vector<2x16x128xf32> -> vector<2x16x128xf32>
    "tpu.trace_stop"() : () -> ()
    %247 = vector.broadcast %228 : vector<1x1x128xf32> to vector<2x16x128xf32>
    %248 = arith.mulf %246, %247 : vector<2x16x128xf32>
    %249 = arith.addf %219, %248 : vector<2x16x128xf32>
    %c7_i32 = arith.constant 7 : i32
    %c16_i32_62 = arith.constant 16 : i32
    %250 = arith.muli %c7_i32, %c16_i32_62 : i32
    %251 = vector.broadcast %250 : i32 to vector<1x1x128xi32>
    %252 = arith.cmpi sge, %38, %251 : vector<1x1x128xi32>
    %c16_i32_63 = arith.constant 16 : i32
    %253 = arith.addi %250, %c16_i32_63 : i32
    %254 = vector.broadcast %253 : i32 to vector<1x1x128xi32>
    %255 = arith.cmpi slt, %38, %254 : vector<1x1x128xi32>
    %256 = arith.andi %252, %255 : vector<1x1x128xi1>
    %257 = arith.extui %256 : vector<1x1x128xi1> to vector<1x1x128xi32>
    %258 = arith.sitofp %257 : vector<1x1x128xi32> to vector<1x1x128xf32>
    %259 = arith.truncf %258 : vector<1x1x128xf32> to vector<1x1x128xbf16>
    %260 = vector.broadcast %259 : vector<1x1x128xbf16> to vector<2x16x128xbf16>
    %261 = arith.mulf %31, %260 : vector<2x16x128xbf16>
    "tpu.trace_start"() <{level = 10 : i32, message = "bnd,bmd->bnm"}> : () -> ()
    %cst_64 = arith.constant dense<0.000000e+00> : vector<2x16x16xf32>
    %262 = tpu.matmul %261, %34, %cst_64 {dimension_numbers = #tpu.dot_dimension_numbers<[2], [2], [1], [1], [0, 0, 0, 1, 1, 1], [0], [0]>} : vector<2x16x128xbf16>, vector<2x16x128xbf16>, vector<2x16x16xf32> -> vector<2x16x16xf32>
    "tpu.trace_stop"() : () -> ()
    %cst_65 = arith.constant 2.500000e-01 : f32
    %263 = vector.broadcast %cst_65 : f32 to vector<2x16x16xf32>
    %264 = arith.mulf %262, %263 : vector<2x16x16xf32>
    %cst_66 = arith.constant dense<0xFF800000> : vector<2x16xf32>
    %265 = vector.multi_reduction <maximumf>, %264, %cst_66 [2] : vector<2x16x16xf32> to vector<2x16xf32>
    %266 = vector.shape_cast %265 : vector<2x16xf32> to vector<2x16x1xf32>
    %267 = vector.broadcast %266 : vector<2x16x1xf32> to vector<2x16x16xf32>
    %268 = arith.subf %264, %267 : vector<2x16x16xf32>
    %269 = math.exp %268 : vector<2x16x16xf32>
    %cst_67 = arith.constant dense<0.000000e+00> : vector<2x16xf32>
    %270 = vector.multi_reduction <add>, %269, %cst_67 [2] : vector<2x16x16xf32> to vector<2x16xf32>
    %271 = vector.shape_cast %270 : vector<2x16xf32> to vector<2x16x1xf32>
    %272 = tpu.reciprocal %271 {approx = true} : vector<2x16x1xf32> -> vector<2x16x1xf32>
    %273 = vector.broadcast %272 : vector<2x16x1xf32> to vector<2x16x16xf32>
    %274 = arith.mulf %269, %273 : vector<2x16x16xf32>
    %275 = arith.truncf %274 : vector<2x16x16xf32> to vector<2x16x16xbf16>
    "tpu.trace_start"() <{level = 10 : i32, message = "bnm,bmd->bnd"}> : () -> ()
    %cst_68 = arith.constant dense<0.000000e+00> : vector<2x16x128xf32>
    %276 = tpu.matmul %275, %37, %cst_68 {dimension_numbers = #tpu.dot_dimension_numbers<[2], [1], [1], [2], [0, 0, 0, 1, 1, 2], [0], [0]>} : vector<2x16x16xbf16>, vector<2x16x128xbf16>, vector<2x16x128xf32> -> vector<2x16x128xf32>
    "tpu.trace_stop"() : () -> ()
    %277 = vector.broadcast %258 : vector<1x1x128xf32> to vector<2x16x128xf32>
    %278 = arith.mulf %276, %277 : vector<2x16x128xf32>
    %279 = arith.addf %249, %278 : vector<2x16x128xf32>
    %c8_i32 = arith.constant 8 : i32
    %280 = vector.shape_cast %279 : vector<2x16x128xf32> to vector<32x128xf32>
    %281 = arith.truncf %280 : vector<32x128xf32> to vector<32x128xbf16>
    %c0_69 = arith.constant 0 : index
    %c0_70 = arith.constant 0 : index
    %282 = vector.load %arg5[%c0_69, %c0_70] : memref<128x128xbf16, #tpu.memory_space<vmem>>, vector<128x128xbf16>
    %cst_71 = arith.constant dense<0.000000e+00> : vector<32x128xf32>
    %283 = tpu.matmul %281, %282, %cst_71 {dimension_numbers = #tpu.dot_dimension_numbers<[1], [0], [0], [1], [0, 0, 1, 1], [], []>} : vector<32x128xbf16>, vector<128x128xbf16>, vector<32x128xf32> -> vector<32x128xf32>
    %284 = arith.addf %1, %283 : vector<32x128xf32>
    %c0_72 = arith.constant 0 : index
    %c0_73 = arith.constant 0 : index
    %285 = vector.load %arg6[%c0_72, %c0_73] : memref<1x128xf32, #tpu.memory_space<vmem>>, vector<1x128xf32>
    %286 = vector.broadcast %285 : vector<1x128xf32> to vector<32x128xf32>
    %287 = arith.addf %284, %286 : vector<32x128xf32>
    %c0_74 = arith.constant 0 : index
    %c0_75 = arith.constant 0 : index
    %288 = vector.load %arg7[%c0_74, %c0_75] : memref<1x128xf32, #tpu.memory_space<vmem>>, vector<1x128xf32>
    %c0_76 = arith.constant 0 : index
    %c0_77 = arith.constant 0 : index
    %289 = vector.load %arg8[%c0_76, %c0_77] : memref<1x128xf32, #tpu.memory_space<vmem>>, vector<1x128xf32>
    %cst_78 = arith.constant dense<0.000000e+00> : vector<32xf32>
    %290 = vector.multi_reduction <add>, %287, %cst_78 [1] : vector<32x128xf32> to vector<32xf32>
    %291 = vector.shape_cast %290 : vector<32xf32> to vector<32x1xf32>
    %cst_79 = arith.constant 1.280000e+02 : f32
    %292 = vector.broadcast %cst_79 : f32 to vector<32x1xf32>
    %293 = arith.divf %291, %292 : vector<32x1xf32>
    %294 = vector.broadcast %293 : vector<32x1xf32> to vector<32x128xf32>
    %295 = arith.subf %287, %294 : vector<32x128xf32>
    %296 = arith.mulf %295, %295 : vector<32x128xf32>
    %cst_80 = arith.constant dense<0.000000e+00> : vector<32xf32>
    %297 = vector.multi_reduction <add>, %296, %cst_80 [1] : vector<32x128xf32> to vector<32xf32>
    %298 = vector.shape_cast %297 : vector<32xf32> to vector<32x1xf32>
    %cst_81 = arith.constant 1.280000e+02 : f32
    %299 = vector.broadcast %cst_81 : f32 to vector<32x1xf32>
    %300 = arith.divf %298, %299 : vector<32x1xf32>
    %301 = vector.broadcast %293 : vector<32x1xf32> to vector<32x128xf32>
    %302 = arith.subf %287, %301 : vector<32x128xf32>
    %cst_82 = arith.constant 9.99999974E-6 : f32
    %303 = vector.broadcast %cst_82 : f32 to vector<32x1xf32>
    %304 = arith.addf %300, %303 : vector<32x1xf32>
    %305 = math.rsqrt %304 : vector<32x1xf32>
    %306 = vector.broadcast %305 : vector<32x1xf32> to vector<32x128xf32>
    %307 = arith.mulf %302, %306 : vector<32x128xf32>
    %308 = vector.broadcast %288 : vector<1x128xf32> to vector<32x128xf32>
    %309 = arith.mulf %307, %308 : vector<32x128xf32>
    %310 = vector.broadcast %289 : vector<1x128xf32> to vector<32x128xf32>
    %311 = arith.addf %309, %310 : vector<32x128xf32>
    %312 = arith.truncf %311 : vector<32x128xf32> to vector<32x128xbf16>
    %c0_83 = arith.constant 0 : index
    %c0_84 = arith.constant 0 : index
    %313 = vector.load %arg9[%c0_83, %c0_84] : memref<128x512xbf16, #tpu.memory_space<vmem>>, vector<128x512xbf16>
    %cst_85 = arith.constant dense<0.000000e+00> : vector<32x512xf32>
    %314 = tpu.matmul %312, %313, %cst_85 {dimension_numbers = #tpu.dot_dimension_numbers<[1], [0], [0], [1], [0, 0, 1, 1], [], []>} : vector<32x128xbf16>, vector<128x512xbf16>, vector<32x512xf32> -> vector<32x512xf32>
    %c0_86 = arith.constant 0 : index
    %c0_87 = arith.constant 0 : index
    %315 = vector.load %arg10[%c0_86, %c0_87] : memref<1x512xf32, #tpu.memory_space<vmem>>, vector<1x512xf32>
    %316 = vector.broadcast %315 : vector<1x512xf32> to vector<32x512xf32>
    %317 = arith.addf %314, %316 : vector<32x512xf32>
    %cst_88 = arith.constant 5.000000e-01 : f32
    %318 = vector.broadcast %cst_88 : f32 to vector<32x512xf32>
    %319 = arith.mulf %318, %317 : vector<32x512xf32>
    %cst_89 = arith.constant 4.471500e-02 : f32
    %320 = vector.broadcast %cst_89 : f32 to vector<32x512xf32>
    %321 = arith.mulf %320, %317 : vector<32x512xf32>
    %322 = arith.mulf %321, %317 : vector<32x512xf32>
    %323 = arith.mulf %322, %317 : vector<32x512xf32>
    %324 = arith.addf %317, %323 : vector<32x512xf32>
    %cst_90 = arith.constant 0.797884583 : f32
    %325 = vector.broadcast %cst_90 : f32 to vector<32x512xf32>
    %326 = arith.mulf %325, %324 : vector<32x512xf32>
    %327 = math.tanh %326 : vector<32x512xf32>
    %cst_91 = arith.constant 1.000000e+00 : f32
    %328 = vector.broadcast %cst_91 : f32 to vector<32x512xf32>
    %329 = arith.addf %328, %327 : vector<32x512xf32>
    %330 = arith.mulf %319, %329 : vector<32x512xf32>
    %331 = arith.truncf %330 : vector<32x512xf32> to vector<32x512xbf16>
    %c0_92 = arith.constant 0 : index
    %c0_93 = arith.constant 0 : index
    %332 = vector.load %arg11[%c0_92, %c0_93] : memref<512x128xbf16, #tpu.memory_space<vmem>>, vector<512x128xbf16>
    %cst_94 = arith.constant dense<0.000000e+00> : vector<32x128xf32>
    %333 = tpu.matmul %331, %332, %cst_94 {dimension_numbers = #tpu.dot_dimension_numbers<[1], [0], [0], [1], [0, 0, 1, 1], [], []>} : vector<32x512xbf16>, vector<512x128xbf16>, vector<32x128xf32> -> vector<32x128xf32>
    %c0_95 = arith.constant 0 : index
    %c0_96 = arith.constant 0 : index
    %334 = vector.load %arg12[%c0_95, %c0_96] : memref<1x128xf32, #tpu.memory_space<vmem>>, vector<1x128xf32>
    %335 = vector.broadcast %334 : vector<1x128xf32> to vector<32x128xf32>
    %336 = arith.addf %333, %335 : vector<32x128xf32>
    %337 = arith.addf %287, %336 : vector<32x128xf32>
    %338 = vector.shape_cast %337 : vector<32x128xf32> to vector<2x16x128xf32>
    %c0_97 = arith.constant 0 : index
    %c0_98 = arith.constant 0 : index
    %c0_99 = arith.constant 0 : index
    %339 = vector.load %arg13[%c0_97, %c0_98, %c0_99] : memref<2x16x128xf32, #tpu.memory_space<vmem>>, vector<2x16x128xf32>
    tpu.vector_store %arg13[%c0_97, %c0_98, %c0_99], %338 {strides = array<i32>} : memref<2x16x128xf32, #tpu.memory_space<vmem>>, vector<2x16x128xf32>,
    return
  }
  func.func @transform_0(%arg0: i32) -> (i32, i32, i32) {
    %c0_i32 = arith.constant 0 : i32
    %c0_i32_0 = arith.constant 0 : i32
    %c0_i32_1 = arith.constant 0 : i32
    return %arg0, %c0_i32, %c0_i32_0 : i32, i32, i32
  }
  func.func @transform_1(%arg0: i32) -> (i32, i32) {
    %c0_i32 = arith.constant 0 : i32
    %c0_i32_0 = arith.constant 0 : i32
    %c0_i32_1 = arith.constant 0 : i32
    return %c0_i32, %c0_i32_0 : i32, i32
  }
  func.func @transform_2(%arg0: i32) -> (i32, i32) {
    %c0_i32 = arith.constant 0 : i32
    %c0_i32_0 = arith.constant 0 : i32
    %c0_i32_1 = arith.constant 0 : i32
    return %c0_i32, %c0_i32_0 : i32, i32
  }
  func.func @transform_3(%arg0: i32) -> (i32, i32) {
    %c0_i32 = arith.constant 0 : i32
    %c0_i32_0 = arith.constant 0 : i32
    %c0_i32_1 = arith.constant 0 : i32
    return %c0_i32, %c0_i32_0 : i32, i32
  }
  func.func @transform_4(%arg0: i32) -> (i32, i32) {
    %c0_i32 = arith.constant 0 : i32
    %c0_i32_0 = arith.constant 0 : i32
    %c0_i32_1 = arith.constant 0 : i32
    return %c0_i32, %c0_i32_0 : i32, i32
  }
  func.func @transform_5(%arg0: i32) -> (i32, i32) {
    %c0_i32 = arith.constant 0 : i32
    %c0_i32_0 = arith.constant 0 : i32
    %c0_i32_1 = arith.constant 0 : i32
    return %c0_i32, %c0_i32_0 : i32, i32
  }
  func.func @transform_6(%arg0: i32) -> (i32, i32) {
    %c0_i32 = arith.constant 0 : i32
    %c0_i32_0 = arith.constant 0 : i32
    %c0_i32_1 = arith.constant 0 : i32
    return %c0_i32, %c0_i32_0 : i32, i32
  }
  func.func @transform_7(%arg0: i32) -> (i32, i32) {
    %c0_i32 = arith.constant 0 : i32
    %c0_i32_0 = arith.constant 0 : i32
    %c0_i32_1 = arith.constant 0 : i32
    return %c0_i32, %c0_i32_0 : i32, i32
  }
  func.func @transform_8(%arg0: i32) -> (i32, i32) {
    %c0_i32 = arith.constant 0 : i32
    %c0_i32_0 = arith.constant 0 : i32
    %c0_i32_1 = arith.constant 0 : i32
    return %c0_i32, %c0_i32_0 : i32, i32
  }
  func.func @transform_9(%arg0: i32) -> (i32, i32) {
    %c0_i32 = arith.constant 0 : i32
    %c0_i32_0 = arith.constant 0 : i32
    %c0_i32_1 = arith.constant 0 : i32
    return %c0_i32, %c0_i32_0 : i32, i32
  }
  func.func @transform_10(%arg0: i32) -> (i32, i32) {
    %c0_i32 = arith.constant 0 : i32
    %c0_i32_0 = arith.constant 0 : i32
    %c0_i32_1 = arith.constant 0 : i32
    return %c0_i32, %c0_i32_0 : i32, i32
  }
  func.func @transform_11(%arg0: i32) -> (i32, i32) {
    %c0_i32 = arith.constant 0 : i32
    %c0_i32_0 = arith.constant 0 : i32
    %c0_i32_1 = arith.constant 0 : i32
    return %c0_i32, %c0_i32_0 : i32, i32
  }
  func.func @transform_12(%arg0: i32) -> (i32, i32, i32) {
    %c0_i32 = arith.constant 0 : i32
    %c0_i32_0 = arith.constant 0 : i32
    %c0_i32_1 = arith.constant 0 : i32
    return %arg0, %c0_i32, %c0_i32_0 : i32, i32, i32
  }
}

</mosaic_0001>

<llo_original>
// kernel: tpu_custom_call.1
$region0: #{tpu_custom_call.1}
  #allocation0 [shape = 'u32[]', space=smem, size = 0x4, offset = 0x4, fixed_abs, tag = 'smem constant byte address 0x4 - core index']
  #allocation1 [shape = 'u32[144,128]{1,0:T(1,128)}', space=vmem, size = 0x12000, scoped, tag = 'internal scratch']
  %s0 = inlined_call_operand.hbm [shape: f32[4,16,128], index: 0, kind: input, shape index: {}]
  %s1 = inlined_call_operand.vmem [shape: f32[1,128], index: 1, kind: input, shape index: {}]
  %s2 = inlined_call_operand.vmem [shape: f32[1,128], index: 2, kind: input, shape index: {}]
  %s3 = inlined_call_operand.hbm [shape: bf16[128,384], index: 3, kind: input, shape index: {}]
  %s4 = inlined_call_operand.hbm [shape: bf16[128,128], index: 4, kind: input, shape index: {}]
  %s5 = inlined_call_operand.vmem [shape: f32[1,128], index: 5, kind: input, shape index: {}]
  %s6 = inlined_call_operand.vmem [shape: f32[1,128], index: 6, kind: input, shape index: {}]
  %s7 = inlined_call_operand.vmem [shape: f32[1,128], index: 7, kind: input, shape index: {}]
  %s8 = inlined_call_operand.hbm [shape: bf16[128,512], index: 8, kind: input, shape index: {}]
  %s9 = inlined_call_operand.vmem [shape: f32[1,512], index: 9, kind: input, shape index: {}]
  %s10 = inlined_call_operand.hbm [shape: bf16[512,128], index: 10, kind: input, shape index: {}]
  %s11 = inlined_call_operand.vmem [shape: f32[1,128], index: 11, kind: input, shape index: {}]
  %s12 = inlined_call_operand.hbm [shape: f32[4,16,128], index: 12, kind: output, shape index: {}]
  %s13 = sld [smem:[#allocation0]]
  $region101: #{tpu_custom_call.1} parent=0
    _
  %s15 = ssub.s32 1, %s13
  %s16 = scalar_select 0, %s15, %s13
  $region1: #{tpu_custom_call.1} parent=0
    #allocation2 [shape = 'u8[32768]{0}', space=vmem, size = 0x8000, scoped, tag = 'input window, operand 0']
    #allocation3 [shape = 's32[2]{0}', space=sflag, size = 0x8, scoped, tag = 'scoped memory for tpu_custom_call.1']
    #allocation4 [shape = 's32[2]{0}', space=sflag, size = 0x8, scoped, tag = 'scoped memory for tpu_custom_call.1']
    #allocation5 [shape = 'u8[98304]{0}', space=vmem, size = 0x18000, scoped, tag = 'input window, operand 3, single buffered']
    #allocation6 [shape = 's32[1]{0}', space=sflag, size = 0x4, scoped, tag = 'scoped memory for tpu_custom_call.1']
    #allocation7 [shape = 'u8[32768]{0}', space=vmem, size = 0x8000, scoped, tag = 'input window, operand 4, single buffered']
    #allocation8 [shape = 'u8[131072]{0}', space=vmem, size = 0x20000, scoped, tag = 'input window, operand 8, single buffered']
    #allocation9 [shape = 's32[1]{0}', space=sflag, size = 0x4, scoped, tag = 'scoped memory for tpu_custom_call.1']
    #allocation10 [shape = 'u8[131072]{0}', space=vmem, size = 0x20000, scoped, tag = 'input window, operand 10, single buffered']
    #allocation11 [shape = 'u8[32768]{0}', space=vmem, size = 0x8000, scoped, tag = 'output window, operand 0']
    %17 = vsyncpa [#allocation3], 0
    %s18 = scalar_lea.sflag [#allocation3], 1
    %19 = vsyncpa %s18, 0
    %20 = vsyncpa [#allocation6], 0
    %21 = vsyncpa [#allocation9], 0
    %22 = vsyncpa [#allocation4], 0
    %s23 = scalar_lea.sflag [#allocation4], 1
    %24 = vsyncpa %s23, 0
    loop: start=0, step=1, limit=4
    $region2: #{tpu_custom_call.1} parent=1 // loop_pre_header
      _
    $region3: #{tpu_custom_call.1} parent=1 // loop_header
      %s26 = sphi 0, %s30
      %p27 = scmp.ge.s32.totalorder %s26, 4
      %s36 = sphi 0, %s38
      %s39 = sphi 0, %s36
      %s40 = sphi 0, %s39
      %s56 = sphi 0, %s40
      %s60 = sphi 0, %s60
      %s62 = sphi 0, %s60
      %s63 = sphi 0, %s62
      %s77 = sphi 0, %s63
      %s81 = sphi 0, %s81
      %s83 = sphi 0, %s81
      %s84 = sphi 0, %s83
      %s98 = sphi 0, %s84
      %s102 = sphi 0, %s102
      %s104 = sphi 0, %s102
      %s105 = sphi 0, %s104
      %s119 = sphi 0, %s105
      %s123 = sphi 0, %s123
      %s125 = sphi 0, %s123
      %s126 = sphi 0, %s125
      %s140 = sphi 0, %s126
      %s144 = sphi 0, %s144
      %s146 = sphi 0, %s144
      %s147 = sphi 0, %s146
      %s161 = sphi 0, %s147
      %s165 = sphi 0, %s165
      %s167 = sphi 0, %s165
      %s168 = sphi 0, %s167
      %s182 = sphi 0, %s168
      %s186 = sphi 0, %s186
      %s188 = sphi 0, %s186
      %s189 = sphi 0, %s188
      %s203 = sphi 0, %s189
      %s207 = sphi 0, %s207
      %s209 = sphi 0, %s207
      %s210 = sphi 0, %s209
      %s224 = sphi 0, %s210
      %s228 = sphi 0, %s228
      %s230 = sphi 0, %s228
      %s231 = sphi 0, %s230
      %s245 = sphi 0, %s231
      %s249 = sphi 0, %s249
      %s251 = sphi 0, %s249
      %s252 = sphi 0, %s251
      %s266 = sphi 0, %s252
      %s270 = sphi 0, %s270
      %s272 = sphi 0, %s270
      %s273 = sphi 0, %s272
      %s287 = sphi 0, %s273
      %s293 = sphi 0, %s295
      %s296 = sphi 0, %s293
      %s297 = sphi 0, %s296
      %s313 = sphi 0, %s297
    $region4: #{tpu_custom_call.1} parent=1 // loop_header_branch
      %29 = sbr.rel (%p27) target = $region8
    $region5: #{tpu_custom_call.1} parent=1 // loop_body
      %s31 = ssub.s32 %s26, 1
      %s32 = ssub.s32 %s26, 2
      %s33 = sadd.s32 %s26, 1
      %s34 = ssub.s32 %s26, %s33
      %p35 = scmp.eq.s32.totalorder %s34, 0
      %s37 = sadd.s32 %s36, 1
      %s38 = scalar_select %p35, %s36, %s37
      %p41 = pneg %p35
      %p42 = scmp.eq.s32.totalorder %s26, 1
      %p43 = por %p41, %p42
      %p44 = scmp.ne.s32.totalorder %s36, %s39
      %p45 = scmp.eq.s32.totalorder %s26, 0
      %p46 = por %p44, %p45
      %p47 = scmp.ne.s32.totalorder %s36, %s39
      %p48 = scmp.eq.s32.totalorder %s31, 1
      %p49 = por %p47, %p48
      %p50 = scmp.ne.s32.totalorder %s39, %s40
      %p51 = scmp.eq.s32.totalorder %s31, 0
      %p52 = por %p50, %p51
      %p53 = scmp.ne.s32.totalorder %s39, %s40
      %p54 = scmp.eq.s32.totalorder %s32, 1
      %p55 = por %p53, %p54
      %p57 = scmp.ne.s32.totalorder %s40, %s56
      %p58 = scmp.eq.s32.totalorder %s32, 0
      %p59 = por %p57, %p58
      %s61 = sadd.s32 %s60, 1
      %p64 = scmp.eq.s32.totalorder %s26, 1
      %p65 = scmp.ne.s32.totalorder %s60, %s62
      %p66 = scmp.eq.s32.totalorder %s26, 0
      %p67 = por %p65, %p66
      %p68 = scmp.ne.s32.totalorder %s60, %s62
      %p69 = scmp.eq.s32.totalorder %s31, 1
      %p70 = por %p68, %p69
      %p71 = scmp.ne.s32.totalorder %s62, %s63
      %p72 = scmp.eq.s32.totalorder %s31, 0
      %p73 = por %p71, %p72
      %p74 = scmp.ne.s32.totalorder %s62, %s63
      %p75 = scmp.eq.s32.totalorder %s32, 1
      %p76 = por %p74, %p75
      %p78 = scmp.ne.s32.totalorder %s63, %s77
      %p79 = scmp.eq.s32.totalorder %s32, 0
      %p80 = por %p78, %p79
      %s82 = sadd.s32 %s81, 1
      %p85 = scmp.eq.s32.totalorder %s26, 1
      %p86 = scmp.ne.s32.totalorder %s81, %s83
      %p87 = scmp.eq.s32.totalorder %s26, 0
      %p88 = por %p86, %p87
      %p89 = scmp.ne.s32.totalorder %s81, %s83
      %p90 = scmp.eq.s32.totalorder %s31, 1
      %p91 = por %p89, %p90
      %p92 = scmp.ne.s32.totalorder %s83, %s84
      %p93 = scmp.eq.s32.totalorder %s31, 0
      %p94 = por %p92, %p93
      %p95 = scmp.ne.s32.totalorder %s83, %s84
      %p96 = scmp.eq.s32.totalorder %s32, 1
      %p97 = por %p95, %p96
      %p99 = scmp.ne.s32.totalorder %s84, %s98
      %p100 = scmp.eq.s32.totalorder %s32, 0
      %p101 = por %p99, %p100
      %s103 = sadd.s32 %s102, 1
      %p106 = scmp.eq.s32.totalorder %s26, 1
      %p107 = scmp.ne.s32.totalorder %s102, %s104
      %p108 = scmp.eq.s32.totalorder %s26, 0
      %p109 = por %p107, %p108
      %p110 = scmp.ne.s32.totalorder %s102, %s104
      %p111 = scmp.eq.s32.totalorder %s31, 1
      %p112 = por %p110, %p111
      %p113 = scmp.ne.s32.totalorder %s104, %s105
      %p114 = scmp.eq.s32.totalorder %s31, 0
      %p115 = por %p113, %p114
      %p116 = scmp.ne.s32.totalorder %s104, %s105
      %p117 = scmp.eq.s32.totalorder %s32, 1
      %p118 = por %p116, %p117
      %p120 = scmp.ne.s32.totalorder %s105, %s119
      %p121 = scmp.eq.s32.totalorder %s32, 0
      %p122 = por %p120, %p121
      %s124 = sadd.s32 %s123, 1
      %p127 = scmp.eq.s32.totalorder %s26, 1
      %p128 = scmp.ne.s32.totalorder %s123, %s125
      %p129 = scmp.eq.s32.totalorder %s26, 0
      %p130 = por %p128, %p129
      %p131 = scmp.ne.s32.totalorder %s123, %s125
      %p132 = scmp.eq.s32.totalorder %s31, 1
      %p133 = por %p131, %p132
      %p134 = scmp.ne.s32.totalorder %s125, %s126
      %p135 = scmp.eq.s32.totalorder %s31, 0
      %p136 = por %p134, %p135
      %p137 = scmp.ne.s32.totalorder %s125, %s126
      %p138 = scmp.eq.s32.totalorder %s32, 1
      %p139 = por %p137, %p138
      %p141 = scmp.ne.s32.totalorder %s126, %s140
      %p142 = scmp.eq.s32.totalorder %s32, 0
      %p143 = por %p141, %p142
      %s145 = sadd.s32 %s144, 1
      %p148 = scmp.eq.s32.totalorder %s26, 1
      %p149 = scmp.ne.s32.totalorder %s144, %s146
      %p150 = scmp.eq.s32.totalorder %s26, 0
      %p151 = por %p149, %p150
      %p152 = scmp.ne.s32.totalorder %s144, %s146
      %p153 = scmp.eq.s32.totalorder %s31, 1
      %p154 = por %p152, %p153
      %p155 = scmp.ne.s32.totalorder %s146, %s147
      %p156 = scmp.eq.s32.totalorder %s31, 0
      %p157 = por %p155, %p156
      %p158 = scmp.ne.s32.totalorder %s146, %s147
      %p159 = scmp.eq.s32.totalorder %s32, 1
      %p160 = por %p158, %p159
      %p162 = scmp.ne.s32.totalorder %s147, %s161
      %p163 = scmp.eq.s32.totalorder %s32, 0
      %p164 = por %p162, %p163
      %s166 = sadd.s32 %s165, 1
      %p169 = scmp.eq.s32.totalorder %s26, 1
      %p170 = scmp.ne.s32.totalorder %s165, %s167
      %p171 = scmp.eq.s32.totalorder %s26, 0
      %p172 = por %p170, %p171
      %p173 = scmp.ne.s32.totalorder %s165, %s167
      %p174 = scmp.eq.s32.totalorder %s31, 1
      %p175 = por %p173, %p174
      %p176 = scmp.ne.s32.totalorder %s167, %s168
      %p177 = scmp.eq.s32.totalorder %s31, 0
      %p178 = por %p176, %p177
      %p179 = scmp.ne.s32.totalorder %s167, %s168
      %p180 = scmp.eq.s32.totalorder %s32, 1
      %p181 = por %p179, %p180
      %p183 = scmp.ne.s32.totalorder %s168, %s182
      %p184 = scmp.eq.s32.totalorder %s32, 0
      %p185 = por %p183, %p184
      %s187 = sadd.s32 %s186, 1
      %p190 = scmp.eq.s32.totalorder %s26, 1
      %p191 = scmp.ne.s32.totalorder %s186, %s188
      %p192 = scmp.eq.s32.totalorder %s26, 0
      %p193 = por %p191, %p192
      %p194 = scmp.ne.s32.totalorder %s186, %s188
      %p195 = scmp.eq.s32.totalorder %s31, 1
      %p196 = por %p194, %p195
      %p197 = scmp.ne.s32.totalorder %s188, %s189
      %p198 = scmp.eq.s32.totalorder %s31, 0
      %p199 = por %p197, %p198
      %p200 = scmp.ne.s32.totalorder %s188, %s189
      %p201 = scmp.eq.s32.totalorder %s32, 1
      %p202 = por %p200, %p201
      %p204 = scmp.ne.s32.totalorder %s189, %s203
      %p205 = scmp.eq.s32.totalorder %s32, 0
      %p206 = por %p204, %p205
      %s208 = sadd.s32 %s207, 1
      %p211 = scmp.eq.s32.totalorder %s26, 1
      %p212 = scmp.ne.s32.totalorder %s207, %s209
      %p213 = scmp.eq.s32.totalorder %s26, 0
      %p214 = por %p212, %p213
      %p215 = scmp.ne.s32.totalorder %s207, %s209
      %p216 = scmp.eq.s32.totalorder %s31, 1
      %p217 = por %p215, %p216
      %p218 = scmp.ne.s32.totalorder %s209, %s210
      %p219 = scmp.eq.s32.totalorder %s31, 0
      %p220 = por %p218, %p219
      %p221 = scmp.ne.s32.totalorder %s209, %s210
      %p222 = scmp.eq.s32.totalorder %s32, 1
      %p223 = por %p221, %p222
      %p225 = scmp.ne.s32.totalorder %s210, %s224
      %p226 = scmp.eq.s32.totalorder %s32, 0
      %p227 = por %p225, %p226
      %s229 = sadd.s32 %s228, 1
      %p232 = scmp.eq.s32.totalorder %s26, 1
      %p233 = scmp.ne.s32.totalorder %s228, %s230
      %p234 = scmp.eq.s32.totalorder %s26, 0
      %p235 = por %p233, %p234
      %p236 = scmp.ne.s32.totalorder %s228, %s230
      %p237 = scmp.eq.s32.totalorder %s31, 1
      %p238 = por %p236, %p237
      %p239 = scmp.ne.s32.totalorder %s230, %s231
      %p240 = scmp.eq.s32.totalorder %s31, 0
      %p241 = por %p239, %p240
      %p242 = scmp.ne.s32.totalorder %s230, %s231
      %p243 = scmp.eq.s32.totalorder %s32, 1
      %p244 = por %p242, %p243
      %p246 = scmp.ne.s32.totalorder %s231, %s245
      %p247 = scmp.eq.s32.totalorder %s32, 0
      %p248 = por %p246, %p247
      %s250 = sadd.s32 %s249, 1
      %p253 = scmp.eq.s32.totalorder %s26, 1
      %p254 = scmp.ne.s32.totalorder %s249, %s251
      %p255 = scmp.eq.s32.totalorder %s26, 0
      %p256 = por %p254, %p255
      %p257 = scmp.ne.s32.totalorder %s249, %s251
      %p258 = scmp.eq.s32.totalorder %s31, 1
      %p259 = por %p257, %p258
      %p260 = scmp.ne.s32.totalorder %s251, %s252
      %p261 = scmp.eq.s32.totalorder %s31, 0
      %p262 = por %p260, %p261
      %p263 = scmp.ne.s32.totalorder %s251, %s252
      %p264 = scmp.eq.s32.totalorder %s32, 1
      %p265 = por %p263, %p264
      %p267 = scmp.ne.s32.totalorder %s252, %s266
      %p268 = scmp.eq.s32.totalorder %s32, 0
      %p269 = por %p267, %p268
      %s271 = sadd.s32 %s270, 1
      %p274 = scmp.eq.s32.totalorder %s26, 1
      %p275 = scmp.ne.s32.totalorder %s270, %s272
      %p276 = scmp.eq.s32.totalorder %s26, 0
      %p277 = por %p275, %p276
      %p278 = scmp.ne.s32.totalorder %s270, %s272
      %p279 = scmp.eq.s32.totalorder %s31, 1
      %p280 = por %p278, %p279
      %p281 = scmp.ne.s32.totalorder %s272, %s273
      %p282 = scmp.eq.s32.totalorder %s31, 0
      %p283 = por %p281, %p282
      %p284 = scmp.ne.s32.totalorder %s272, %s273
      %p285 = scmp.eq.s32.totalorder %s32, 1
      %p286 = por %p284, %p285
      %p288 = scmp.ne.s32.totalorder %s273, %s287
      %p289 = scmp.eq.s32.totalorder %s32, 0
      %p290 = por %p288, %p289
      %s291 = ssub.s32 %s26, %s33
      %p292 = scmp.eq.s32.totalorder %s291, 0
      %s294 = sadd.s32 %s293, 1
      %s295 = scalar_select %p292, %s293, %s294
      %p298 = pneg %p292
      %p299 = scmp.eq.s32.totalorder %s26, 1
      %p300 = por %p298, %p299
      %p301 = scmp.ne.s32.totalorder %s293, %s296
      %p302 = scmp.eq.s32.totalorder %s26, 0
      %p303 = por %p301, %p302
      %p304 = scmp.ne.s32.totalorder %s293, %s296
      %p305 = scmp.eq.s32.totalorder %s31, 1
      %p306 = por %p304, %p305
      %p307 = scmp.ne.s32.totalorder %s296, %s297
      %p308 = scmp.eq.s32.totalorder %s31, 0
      %p309 = por %p307, %p308
      %p310 = scmp.ne.s32.totalorder %s296, %s297
      %p311 = scmp.eq.s32.totalorder %s32, 1
      %p312 = por %p310, %p311
      %p314 = scmp.ne.s32.totalorder %s297, %s313
      %p315 = scmp.eq.s32.totalorder %s32, 0
      %p316 = por %p314, %p315
      %p317 = scmp.le.s32.totalorder 1, %s26
      %p318 = scmp.lt.s32.totalorder %s26, 3
      %p319 = pnand %p317, %p318
      %p320 = pneg %p319
      // Predicated region
      $region9: #{tpu_custom_call.1} parent=5 // pred_check
        _
      $region10: #{tpu_custom_call.1} parent=5 // pred_check_branch
        %322 = sbr.rel (%p319) target = $region12
      $region11: #{tpu_custom_call.1} parent=5 // pred_region
        %s323 = ssub.s32 %s26, 1
        // Predicated region
        $region13: #{tpu_custom_call.1} parent=11 // pred_check
          %p324 = pneg %p73
        $region14: #{tpu_custom_call.1} parent=11 // pred_check_branch
          %326 = sbr.rel (%p324) target = $region16
        $region15: #{tpu_custom_call.1} parent=11 // pred_region
          _
        $region16: #{tpu_custom_call.1} parent=11 // pred_fallthru
          _
        // Predicated region
        $region17: #{tpu_custom_call.1} parent=11 // pred_check
          %p327 = pneg %p94
        $region18: #{tpu_custom_call.1} parent=11 // pred_check_branch
          %329 = sbr.rel (%p327) target = $region20
        $region19: #{tpu_custom_call.1} parent=11 // pred_region
          _
        $region20: #{tpu_custom_call.1} parent=11 // pred_fallthru
          _
        // Predicated region
        $region21: #{tpu_custom_call.1} parent=11 // pred_check
          %p330 = pneg %p115
        $region22: #{tpu_custom_call.1} parent=11 // pred_check_branch
          %332 = sbr.rel (%p330) target = $region24
        $region23: #{tpu_custom_call.1} parent=11 // pred_region
          %s334 = ssub.s32 3072, 3072
          %335 = vsyncadd [#allocation6], %s334
          %s336 = sshll.u32 [#allocation5], 4
          %s337 = int_to_ptr.vmem [resolvable:$true] %s336
          %342 = dma.hbm_to_vmem [thread:$0]  %s3, 3072, %s337, [#allocation6], 192, 192, 12
        $region24: #{tpu_custom_call.1} parent=11 // pred_fallthru
          _
        // Predicated region
        $region25: #{tpu_custom_call.1} parent=11 // pred_check
          %p343 = pneg %p136
        $region26: #{tpu_custom_call.1} parent=11 // pred_check_branch
          %345 = sbr.rel (%p343) target = $region28
        $region27: #{tpu_custom_call.1} parent=11 // pred_region
          %s347 = ssub.s32 1024, 1024
          %348 = vsyncadd [#allocation6], %s347
          %s349 = sshll.u32 [#allocation7], 4
          %s350 = int_to_ptr.vmem [resolvable:$true] %s349
          %355 = dma.hbm_to_vmem [thread:$0]  %s4, 1024, %s350, [#allocation6], 64, 64, 4
        $region28: #{tpu_custom_call.1} parent=11 // pred_fallthru
          _
        // Predicated region
        $region29: #{tpu_custom_call.1} parent=11 // pred_check
          %p356 = pneg %p157
        $region30: #{tpu_custom_call.1} parent=11 // pred_check_branch
          %358 = sbr.rel (%p356) target = $region32
        $region31: #{tpu_custom_call.1} parent=11 // pred_region
          _
        $region32: #{tpu_custom_call.1} parent=11 // pred_fallthru
          _
        // Predicated region
        $region33: #{tpu_custom_call.1} parent=11 // pred_check
          %p359 = pneg %p178
        $region34: #{tpu_custom_call.1} parent=11 // pred_check_branch
          %361 = sbr.rel (%p359) target = $region36
        $region35: #{tpu_custom_call.1} parent=11 // pred_region
          _
        $region36: #{tpu_custom_call.1} parent=11 // pred_fallthru
          _
        // Predicated region
        $region37: #{tpu_custom_call.1} parent=11 // pred_check
          %p362 = pneg %p199
        $region38: #{tpu_custom_call.1} parent=11 // pred_check_branch
          %364 = sbr.rel (%p362) target = $region40
        $region39: #{tpu_custom_call.1} parent=11 // pred_region
          _
        $region40: #{tpu_custom_call.1} parent=11 // pred_fallthru
          _
        // Predicated region
        $region41: #{tpu_custom_call.1} parent=11 // pred_check
          %p365 = pneg %p220
        $region42: #{tpu_custom_call.1} parent=11 // pred_check_branch
          %367 = sbr.rel (%p365) target = $region44
        $region43: #{tpu_custom_call.1} parent=11 // pred_region
          %s369 = ssub.s32 4096, 4096
          %370 = vsyncadd [#allocation9], %s369
          %s371 = sshll.u32 [#allocation8], 4
          %s372 = int_to_ptr.vmem [resolvable:$true] %s371
          %377 = dma.hbm_to_vmem [thread:$0]  %s8, 4096, %s372, [#allocation9], 256, 256, 16
        $region44: #{tpu_custom_call.1} parent=11 // pred_fallthru
          _
        // Predicated region
        $region45: #{tpu_custom_call.1} parent=11 // pred_check
          %p378 = pneg %p241
        $region46: #{tpu_custom_call.1} parent=11 // pred_check_branch
          %380 = sbr.rel (%p378) target = $region48
        $region47: #{tpu_custom_call.1} parent=11 // pred_region
          _
        $region48: #{tpu_custom_call.1} parent=11 // pred_fallthru
          _
        // Predicated region
        $region49: #{tpu_custom_call.1} parent=11 // pred_check
          %p381 = pneg %p262
        $region50: #{tpu_custom_call.1} parent=11 // pred_check_branch
          %383 = sbr.rel (%p381) target = $region52
        $region51: #{tpu_custom_call.1} parent=11 // pred_region
          %s385 = ssub.s32 4096, 4096
          %386 = vsyncadd [#allocation9], %s385
          %s387 = sshll.u32 [#allocation10], 4
          %s388 = int_to_ptr.vmem [resolvable:$true] %s387
          %393 = dma.hbm_to_vmem [thread:$0]  %s10, 4096, %s388, [#allocation9], 64, 64, 4
        $region52: #{tpu_custom_call.1} parent=11 // pred_fallthru
          _
        // Predicated region
        $region53: #{tpu_custom_call.1} parent=11 // pred_check
          %p394 = pneg %p283
        $region54: #{tpu_custom_call.1} parent=11 // pred_check_branch
          %396 = sbr.rel (%p394) target = $region56
        $region55: #{tpu_custom_call.1} parent=11 // pred_region
          _
        $region56: #{tpu_custom_call.1} parent=11 // pred_fallthru
          _
      $region12: #{tpu_custom_call.1} parent=5 // pred_fallthru
        _
      %p397 = scmp.lt.s32.totalorder %s26, 2
      // Predicated region
      $region57: #{tpu_custom_call.1} parent=5 // pred_check
        %p398 = pneg %p397
      $region58: #{tpu_custom_call.1} parent=5 // pred_check_branch
        %400 = sbr.rel (%p398) target = $region60
      $region59: #{tpu_custom_call.1} parent=5 // pred_region
        // Predicated region
        $region61: #{tpu_custom_call.1} parent=59 // pred_check
          %p401 = pneg %p46
        $region62: #{tpu_custom_call.1} parent=59 // pred_check_branch
          %403 = sbr.rel (%p401) target = $region64
        $region63: #{tpu_custom_call.1} parent=59 // pred_region
          %s404 = sand.u32 %s36, 1
          %s405 = scalar_lea.sflag [#allocation3], %s404
          %s406 = sand.u32 %s36, 1
          %s407 = smul.addr %s406, 32
          %s408 = scalar_lea.vmem [#allocation2], %s407
          %s409 = smul.u32 2, %s26
          %s411 = ssub.s32 512, 512
          %412 = vsyncadd %s405, %s411
          %s413 = smul.addr %s409, 2
          %s414 = smul.addr %s413, 128
          %s415 = scalar_lea.hbm %s0, %s414
          %s416 = sshll.u32 %s408, 4
          %s417 = int_to_ptr.vmem [resolvable:$true] %s416
          %422 = dma.hbm_to_vmem [thread:$0]  %s415, 512, %s417, %s405, 128, 128, 8
        $region64: #{tpu_custom_call.1} parent=59 // pred_fallthru
          _
      $region60: #{tpu_custom_call.1} parent=5 // pred_fallthru
        _
      %p423 = scmp.le.s32.totalorder 1, %s26
      %p424 = scmp.lt.s32.totalorder %s26, 3
      %p425 = pnand %p423, %p424
      %p426 = pneg %p425
      // Predicated region
      $region65: #{tpu_custom_call.1} parent=5 // pred_check
        _
      $region66: #{tpu_custom_call.1} parent=5 // pred_check_branch
        %428 = sbr.rel (%p425) target = $region68
      $region67: #{tpu_custom_call.1} parent=5 // pred_region
        %s429 = ssub.s32 %s26, 1
        %s430 = sand.u32 %s39, 1
        %s431 = scalar_lea.sflag [#allocation3], %s430
        %s432 = sand.u32 %s39, 1
        %s433 = smul.addr %s432, 32
        %s434 = scalar_lea.vmem [#allocation2], %s433
        // Predicated region
        $region69: #{tpu_custom_call.1} parent=67 // pred_check
          %p435 = pneg %p52
        $region70: #{tpu_custom_call.1} parent=67 // pred_check_branch
          %437 = sbr.rel (%p435) target = $region72
        $region71: #{tpu_custom_call.1} parent=67 // pred_region
          %438 = dma.done %s431, 512
        $region72: #{tpu_custom_call.1} parent=67 // pred_fallthru
          _
        // Predicated region
        $region73: #{tpu_custom_call.1} parent=67 // pred_check
          %p439 = pneg %p115
        $region74: #{tpu_custom_call.1} parent=67 // pred_check_branch
          %441 = sbr.rel (%p439) target = $region76
        $region75: #{tpu_custom_call.1} parent=67 // pred_region
          %442 = dma.done [#allocation6], 3072
        $region76: #{tpu_custom_call.1} parent=67 // pred_fallthru
          _
        // Predicated region
        $region77: #{tpu_custom_call.1} parent=67 // pred_check
          %p443 = pneg %p136
        $region78: #{tpu_custom_call.1} parent=67 // pred_check_branch
          %445 = sbr.rel (%p443) target = $region80
        $region79: #{tpu_custom_call.1} parent=67 // pred_region
          %446 = dma.done [#allocation6], 1024
        $region80: #{tpu_custom_call.1} parent=67 // pred_fallthru
          _
        // Predicated region
        $region81: #{tpu_custom_call.1} parent=67 // pred_check
          %p447 = pneg %p220
        $region82: #{tpu_custom_call.1} parent=67 // pred_check_branch
          %449 = sbr.rel (%p447) target = $region84
        $region83: #{tpu_custom_call.1} parent=67 // pred_region
          %450 = dma.done [#allocation9], 4096
        $region84: #{tpu_custom_call.1} parent=67 // pred_fallthru
          _
        // Predicated region
        $region85: #{tpu_custom_call.1} parent=67 // pred_check
          %p451 = pneg %p262
        $region86: #{tpu_custom_call.1} parent=67 // pred_check_branch
          %453 = sbr.rel (%p451) target = $region88
        $region87: #{tpu_custom_call.1} parent=67 // pred_region
          %454 = dma.done [#allocation9], 4096
        $region88: #{tpu_custom_call.1} parent=67 // pred_fallthru
          _
        %s455 = sand.u32 %s39, 1
        %s456 = scalar_lea.sflag [#allocation3], %s455
        %s457 = sand.u32 %s39, 1
        %s458 = smul.addr %s457, 32
        %s459 = scalar_lea.vmem [#allocation2], %s458
        %p460 = pneg %p52
        %p461 = pneg %p49
        %p462 = pneg %p73
        %p463 = pneg %p70
        %p464 = pneg %p94
        %p465 = pneg %p91
        %p466 = pneg %p115
        %p467 = pneg %p112
        %p468 = pneg %p136
        %p469 = pneg %p133
        %p470 = pneg %p157
        %p471 = pneg %p154
        %p472 = pneg %p178
        %p473 = pneg %p175
        %p474 = pneg %p199
        %p475 = pneg %p196
        %p476 = pneg %p220
        %p477 = pneg %p217
        %p478 = pneg %p241
        %p479 = pneg %p238
        %p480 = pneg %p262
        %p481 = pneg %p259
        %p482 = pneg %p283
        %p483 = pneg %p280
        %p484 = pneg %p309
        %p485 = pneg %p306
        %s486 = sand.u32 %s296, 1
        %s487 = scalar_lea.sflag [#allocation4], %s486
        %s488 = sand.u32 %s296, 1
        %s489 = smul.addr %s488, 32
        %s490 = scalar_lea.vmem [#allocation11], %s489
        %s491 = smul.u32 2, %s31
        %s492 = smul.u32 2, %s31
        %v494 = vld [vmem:[%s434] sm:$0xff]
        %v495 = vld [vmem:[%s434 + $0x8] sm:$0xff]
        %v496 = vld [vmem:[%s434 + $0x10] sm:$0xff]
        %v497 = vld [vmem:[%s434 + $0x18] sm:$0xff]
        %v498 = vld [vmem:[%s1] sm:$0x1]
        %v499 = vld [vmem:[%s2] sm:$0x1]
        %500 = vadd.xlane.f32.xlu0 %v494
        %v501 = vpop.xlane.xlu0 %500
        %502 = vadd.xlane.f32.xlu0 %v495
        %v503 = vpop.xlane.xlu0 %502
        %504 = vadd.xlane.f32.xlu0 %v496
        %v505 = vpop.xlane.xlu0 %504
        %506 = vadd.xlane.f32.xlu0 %v497
        %v507 = vpop.xlane.xlu0 %506
        %v508 = vrcp.pop 128.0
        %v509 = vmul.f32 %v501, %v508
        %v510 = vmul.f32 %v503, %v508
        %v511 = vmul.f32 %v505, %v508
        %v512 = vmul.f32 %v507, %v508
        %v513 = vsub.f32 %v494, %v509
        %v514 = vsub.f32 %v495, %v510
        %v515 = vsub.f32 %v496, %v511
        %v516 = vsub.f32 %v497, %v512
        %v517 = vmul.f32 %v513, %v513
        %v518 = vmul.f32 %v514, %v514
        %v519 = vmul.f32 %v515, %v515
        %v520 = vmul.f32 %v516, %v516
        %521 = vadd.xlane.f32.xlu0 %v517
        %v522 = vpop.xlane.xlu0 %521
        %523 = vadd.xlane.f32.xlu0 %v518
        %v524 = vpop.xlane.xlu0 %523
        %525 = vadd.xlane.f32.xlu0 %v519
        %v526 = vpop.xlane.xlu0 %525
        %527 = vadd.xlane.f32.xlu0 %v520
        %v528 = vpop.xlane.xlu0 %527
        %v529 = vmul.f32 %v522, %v508
        %v530 = vmul.f32 %v524, %v508
        %v531 = vmul.f32 %v526, %v508
        %v532 = vmul.f32 %v528, %v508
        %v533 = vadd.f32 %v529, 1e-05
        %v534 = vadd.f32 %v530, 1e-05
        %v535 = vadd.f32 %v531, 1e-05
        %v536 = vadd.f32 %v532, 1e-05
        %v537 = vrsqrt.pop %v533
        %v538 = vrsqrt.pop %v534
        %v539 = vrsqrt.pop %v535
        %v540 = vrsqrt.pop %v536
        %v541 = vmul.f32 %v513, %v537
        %v542 = vmul.f32 %v514, %v538
        %v543 = vmul.f32 %v515, %v539
        %v544 = vmul.f32 %v516, %v540
        %v546 = vlaneseq
        %v547 = vshrl.u32 %v546, 7
        %v548 = vsub.s32 0, %v547
        %v549 = vrot.slane %v498, %v548
        %v551 = vmul.f32 %v541, %v549
        %v552 = vmul.f32 %v542, %v549
        %v553 = vmul.f32 %v543, %v549
        %v554 = vmul.f32 %v544, %v549
        %v556 = vlaneseq
        %v557 = vshrl.u32 %v556, 7
        %v558 = vsub.s32 0, %v557
        %v559 = vrot.slane %v499, %v558
        %v561 = vadd.f32 %v551, %v559
        %v562 = vadd.f32 %v552, %v559
        %v563 = vadd.f32 %v553, %v559
        %v564 = vadd.f32 %v554, %v559
        %v565 = vpack.c.bf16 %v562, %v561
        %v566 = vpack.c.bf16 %v564, %v563
        %v567 = vld [vmem:[#allocation5] sm:$0xff]
        %v568 = vld [vmem:[#allocation5 + $0x8] sm:$0xf]
        %v569 = vld [vmem:[#allocation5 + $0xc] sm:$0xff]
        %v570 = vld [vmem:[#allocation5 + $0x14] sm:$0xf]
        %v571 = vld [vmem:[#allocation5 + $0x18] sm:$0xff]
        %v572 = vld [vmem:[#allocation5 + $0x20] sm:$0xf]
        %v573 = vld [vmem:[#allocation5 + $0x24] sm:$0xff]
        %v574 = vld [vmem:[#allocation5 + $0x2c] sm:$0xf]
        %v575 = vld [vmem:[#allocation5 + $0x30] sm:$0xff]
        %v576 = vld [vmem:[#allocation5 + $0x38] sm:$0xf]
        %v577 = vld [vmem:[#allocation5 + $0x3c] sm:$0xff]
        %v578 = vld [vmem:[#allocation5 + $0x44] sm:$0xf]
        %v579 = vld [vmem:[#allocation5 + $0x48] sm:$0xff]
        %v580 = vld [vmem:[#allocation5 + $0x50] sm:$0xf]
        %v581 = vld [vmem:[#allocation5 + $0x54] sm:$0xff]
        %v582 = vld [vmem:[#allocation5 + $0x5c] sm:$0xf]
        %v583 = vld [vmem:[#allocation5 + $0x60] sm:$0xff]
        %v584 = vld [vmem:[#allocation5 + $0x68] sm:$0xf]
        %v585 = vld [vmem:[#allocation5 + $0x6c] sm:$0xff]
        %v586 = vld [vmem:[#allocation5 + $0x74] sm:$0xf]
        %v587 = vld [vmem:[#allocation5 + $0x78] sm:$0xff]
        %v588 = vld [vmem:[#allocation5 + $0x80] sm:$0xf]
        %v589 = vld [vmem:[#allocation5 + $0x84] sm:$0xff]
        %v590 = vld [vmem:[#allocation5 + $0x8c] sm:$0xf]
        %v591 = vld [vmem:[#allocation5 + $0x90] sm:$0xff]
        %v592 = vld [vmem:[#allocation5 + $0x98] sm:$0xf]
        %v593 = vld [vmem:[#allocation5 + $0x9c] sm:$0xff]
        %v594 = vld [vmem:[#allocation5 + $0xa4] sm:$0xf]
        %v595 = vld [vmem:[#allocation5 + $0xa8] sm:$0xff]
        %v596 = vld [vmem:[#allocation5 + $0xb0] sm:$0xf]
        %v597 = vld [vmem:[#allocation5 + $0xb4] sm:$0xff]
        %v598 = vld [vmem:[#allocation5 + $0xbc] sm:$0xf]
        %v631 = vunpack.c.l.b16 %v567
        %v632 = vunpack.c.h.b16 %v567
        %v633 = vunpack.c.l.b16 %v568
        %v634 = vunpack.c.l.b16 %v569
        %v635 = vunpack.c.h.b16 %v569
        %v636 = vunpack.c.l.b16 %v570
        %v637 = vunpack.c.l.b16 %v571
        %v638 = vunpack.c.h.b16 %v571
        %v639 = vunpack.c.l.b16 %v572
        %v640 = vunpack.c.l.b16 %v573
        %v641 = vunpack.c.h.b16 %v573
        %v642 = vunpack.c.l.b16 %v574
        %v643 = vunpack.c.l.b16 %v575
        %v644 = vunpack.c.h.b16 %v575
        %v645 = vunpack.c.l.b16 %v576
        %v646 = vunpack.c.l.b16 %v577
        %v647 = vunpack.c.h.b16 %v577
        %v648 = vunpack.c.l.b16 %v578
        %v649 = vunpack.c.l.b16 %v579
        %v650 = vunpack.c.h.b16 %v579
        %v651 = vunpack.c.l.b16 %v580
        %v652 = vunpack.c.l.b16 %v581
        %v653 = vunpack.c.h.b16 %v581
        %v654 = vunpack.c.l.b16 %v582
        %v655 = vunpack.c.l.b16 %v583
        %v656 = vunpack.c.h.b16 %v583
        %v657 = vunpack.c.l.b16 %v584
        %v658 = vunpack.c.l.b16 %v585
        %v659 = vunpack.c.h.b16 %v585
        %v660 = vunpack.c.l.b16 %v586
        %v661 = vunpack.c.l.b16 %v587
        %v662 = vunpack.c.h.b16 %v587
        %v663 = vunpack.c.l.b16 %v588
        %v664 = vunpack.c.l.b16 %v589
        %v665 = vunpack.c.h.b16 %v589
        %v666 = vunpack.c.l.b16 %v590
        %v667 = vunpack.c.l.b16 %v591
        %v668 = vunpack.c.h.b16 %v591
        %v669 = vunpack.c.l.b16 %v592
        %v670 = vunpack.c.l.b16 %v593
        %v671 = vunpack.c.h.b16 %v593
        %v672 = vunpack.c.l.b16 %v594
        %v673 = vunpack.c.l.b16 %v595
        %v674 = vunpack.c.h.b16 %v595
        %v675 = vunpack.c.l.b16 %v596
        %v676 = vunpack.c.l.b16 %v597
        %v677 = vunpack.c.h.b16 %v597
        %v678 = vunpack.c.l.b16 %v598
        %v679 = vpack.c.b16 %v634, %v631
        %v680 = vpack.c.b16 %v635, %v632
        %v681 = vpack.c.b16 %v636, %v633
        %v682 = vpack.c.b16 %v640, %v637
        %v683 = vpack.c.b16 %v641, %v638
        %v684 = vpack.c.b16 %v642, %v639
        %v685 = vpack.c.b16 %v646, %v643
        %v686 = vpack.c.b16 %v647, %v644
        %v687 = vpack.c.b16 %v648, %v645
        %v688 = vpack.c.b16 %v652, %v649
        %v689 = vpack.c.b16 %v653, %v650
        %v690 = vpack.c.b16 %v654, %v651
        %v691 = vpack.c.b16 %v658, %v655
        %v692 = vpack.c.b16 %v659, %v656
        %v693 = vpack.c.b16 %v660, %v657
        %v694 = vpack.c.b16 %v664, %v661
        %v695 = vpack.c.b16 %v665, %v662
        %v696 = vpack.c.b16 %v666, %v663
        %v697 = vpack.c.b16 %v670, %v667
        %v698 = vpack.c.b16 %v671, %v668
        %v699 = vpack.c.b16 %v672, %v669
        %v700 = vpack.c.b16 %v676, %v673
        %v701 = vpack.c.b16 %v677, %v674
        %v702 = vpack.c.b16 %v678, %v675
        %727 = vmatprep.subr.bf16.mxu0 %v680
        %728 = vmatpush1.bf16.msra.mxu0 %v679
        %729 = vmatprep.subr.bf16.mxu0 %v683
        %730 = vmatpush1.bf16.msra.mxu0 %v682
        %731 = vmatprep.subr.bf16.mxu0 %v686
        %732 = vmatpush1.bf16.msra.mxu0 %v685
        %733 = vmatprep.subr.bf16.mxu0 %v689
        %734 = vmatpush1.bf16.msra.mxu0 %v688
        %735 = vmatprep.subr.bf16.mxu0 %v692
        %736 = vmatpush1.bf16.msra.mxu0 %v691
        %737 = vmatprep.subr.bf16.mxu0 %v695
        %738 = vmatpush1.bf16.msra.mxu0 %v694
        %739 = vmatprep.subr.bf16.mxu0 %v698
        %740 = vmatpush1.bf16.msra.mxu0 %v697
        %741 = vmatprep.subr.bf16.mxu0 %v701
        %742 = vmatpush1.bf16.msra.mxu0 %v700
        %743 = vmatprep.subr.bf16.mxu0 0
        %744 = vmatpush1.bf16.msra.mxu0 0
        %745 = vmatprep.subr.bf16.mxu0 0
        %746 = vmatpush1.bf16.msra.mxu0 0
        %747 = vmatprep.subr.bf16.mxu0 0
        %748 = vmatpush1.bf16.msra.mxu0 0
        %749 = vmatprep.subr.bf16.mxu0 0
        %750 = vmatpush1.bf16.msra.mxu0 0
        %751 = vmatprep.subr.bf16.mxu0 0
        %752 = vmatpush1.bf16.msra.mxu0 0
        %753 = vmatprep.subr.bf16.mxu0 0
        %754 = vmatpush1.bf16.msra.mxu0 0
        %755 = vmatprep.subr.bf16.mxu0 0
        %756 = vmatpush1.bf16.msra.mxu0 0
        %757 = vmatprep.subr.bf16.mxu0 0
        %758 = vmatpush1.bf16.msra.mxu0 0
        %759 = vmatprep.mubr.bf16.mxu0 0
        %760 = vmatmul.mubr.bf16.gmra.mrb[0].mxu0 %v565
        %v761 = vpop.f32.mrb[0].mxu0
        %v762 = vadd.f32 0.0, %v761
        %v763 = vpop.f32.mrb[0].mxu0
        %v764 = vadd.f32 0.0, %v763
        %v765 = vpop.f32.mrb[0].mxu0
        %v766 = vadd.f32 0.0, %v765
        %v767 = vpop.f32.mrb[0].mxu0
        %v768 = vadd.f32 0.0, %v767
        %769 = vmatprep.mubr.bf16.mxu0 0
        %770 = vmatmul.mubr.bf16.gmra.mrb[0].mxu0 %v566
        %v771 = vpop.f32.mrb[0].mxu0
        %v772 = vadd.f32 0.0, %v771
        %v773 = vpop.f32.mrb[0].mxu0
        %v774 = vadd.f32 0.0, %v773
        %v775 = vpop.f32.mrb[0].mxu0
        %v776 = vadd.f32 0.0, %v775
        %v777 = vpop.f32.mrb[0].mxu0
        %v778 = vadd.f32 0.0, %v777
        %779 = vdwg.mxu0
        %780 = vmatprep.subr.bf16.mxu0 0
        %781 = vmatpush1.bf16.msra.mxu0 %v681
        %782 = vmatprep.subr.bf16.mxu0 0
        %783 = vmatpush1.bf16.msra.mxu0 %v684
        %784 = vmatprep.subr.bf16.mxu0 0
        %785 = vmatpush1.bf16.msra.mxu0 %v687
        %786 = vmatprep.subr.bf16.mxu0 0
        %787 = vmatpush1.bf16.msra.mxu0 %v690
        %788 = vmatprep.subr.bf16.mxu0 0
        %789 = vmatpush1.bf16.msra.mxu0 %v693
        %790 = vmatprep.subr.bf16.mxu0 0
        %791 = vmatpush1.bf16.msra.mxu0 %v696
        %792 = vmatprep.subr.bf16.mxu0 0
        %793 = vmatpush1.bf16.msra.mxu0 %v699
        %794 = vmatprep.subr.bf16.mxu0 0
        %795 = vmatpush1.bf16.msra.mxu0 %v702
        %796 = vmatprep.subr.bf16.mxu0 0
        %797 = vmatpush1.bf16.msra.mxu0 0
        %798 = vmatprep.subr.bf16.mxu0 0
        %799 = vmatpush1.bf16.msra.mxu0 0
        %800 = vmatprep.subr.bf16.mxu0 0
        %801 = vmatpush1.bf16.msra.mxu0 0
        %802 = vmatprep.subr.bf16.mxu0 0
        %803 = vmatpush1.bf16.msra.mxu0 0
        %804 = vmatprep.subr.bf16.mxu0 0
        %805 = vmatpush1.bf16.msra.mxu0 0
        %806 = vmatprep.subr.bf16.mxu0 0
        %807 = vmatpush1.bf16.msra.mxu0 0
        %808 = vmatprep.subr.bf16.mxu0 0
        %809 = vmatpush1.bf16.msra.mxu0 0
        %810 = vmatprep.subr.bf16.mxu0 0
        %811 = vmatpush1.bf16.msra.mxu0 0
        %812 = vmatprep.mubr.bf16.mxu0 0
        %813 = vmatmul.mubr.bf16.gmra.mrb[0].mxu0 %v565
        %v814 = vpop.f32.mrb[0].mxu0
        %v815 = vadd.f32 0.0, %v814
        %v816 = vpop.f32.mrb[0].mxu0
        %v817 = vpop.f32.mrb[0].mxu0
        %v818 = vadd.f32 0.0, %v817
        %v819 = vpop.f32.mrb[0].mxu0
        %820 = vmatprep.mubr.bf16.mxu0 0
        %821 = vmatmul.mubr.bf16.gmra.mrb[0].mxu0 %v566
        %v822 = vpop.f32.mrb[0].mxu0
        %v823 = vadd.f32 0.0, %v822
        %v824 = vpop.f32.mrb[0].mxu0
        %v825 = vpop.f32.mrb[0].mxu0
        %v826 = vadd.f32 0.0, %v825
        %v827 = vpop.f32.mrb[0].mxu0
        %828 = vdwg.mxu0
        %v829 = vpack.c.bf16 %v766, %v762
        %v830 = vpack.c.bf16 %v776, %v772
        %v831 = vpack.c.bf16 %v768, %v764
        %v832 = vpack.c.bf16 %v778, %v774
        %v833 = vpack.c.bf16 %v818, %v815
        %v834 = vpack.c.bf16 %v826, %v823
        %v835 = vlaneseq
        %v836 = vand.u32 %v835, 127
        %vm837 = vcmp.ge.s32.totalorder %v836, 0
        %vm838 = vcmp.lt.s32.totalorder %v836, 16
        %vm839 = vmand %vm837, %vm838
        %v840 = vsel %vm839, 1, 0
        %v841 = vcvt.s32.f32 %v840
        %v842 = vpack.c.bf16 %v841, %v841
        %v843 = vmul.bf16 %v829, %v842
        %v844 = vmul.bf16 %v830, %v842
        %845 = vmatprep.subr.bf16.mxu0 0
        %846 = vmatpush1.bf16.xpose.msra.mxu0 %v831
        %847 = vmatprep.subr.bf16.mxu0 0
        %848 = vmatpush1.bf16.xpose.msra.mxu0 0
        %849 = vmatprep.subr.bf16.mxu0 0
        %850 = vmatpush1.bf16.xpose.msra.mxu0 0
        %851 = vmatprep.subr.bf16.mxu0 0
        %852 = vmatpush1.bf16.xpose.msra.mxu0 0
        %853 = vmatprep.subr.bf16.mxu0 0
        %854 = vmatpush1.bf16.xpose.msra.mxu0 0
        %855 = vmatprep.subr.bf16.mxu0 0
        %856 = vmatpush1.bf16.xpose.msra.mxu0 0
        %857 = vmatprep.subr.bf16.mxu0 0
        %858 = vmatpush1.bf16.xpose.msra.mxu0 0
        %859 = vmatprep.subr.bf16.mxu0 0
        %860 = vmatpush1.bf16.xpose.msra.mxu0 0
        %861 = vmatprep.subr.bf16.mxu0 0
        %862 = vmatpush1.bf16.xpose.msra.mxu0 0
        %863 = vmatprep.subr.bf16.mxu0 0
        %864 = vmatpush1.bf16.xpose.msra.mxu0 0
        %865 = vmatprep.subr.bf16.mxu0 0
        %866 = vmatpush1.bf16.xpose.msra.mxu0 0
        %867 = vmatprep.subr.bf16.mxu0 0
        %868 = vmatpush1.bf16.xpose.msra.mxu0 0
        %869 = vmatprep.subr.bf16.mxu0 0
        %870 = vmatpush1.bf16.xpose.msra.mxu0 0
        %871 = vmatprep.subr.bf16.mxu0 0
        %872 = vmatpush1.bf16.xpose.msra.mxu0 0
        %873 = vmatprep.subr.bf16.mxu0 0
        %874 = vmatpush1.bf16.xpose.msra.mxu0 0
        %875 = vmatprep.subr.bf16.mxu0 0
        %876 = vmatpush1.bf16.xpose.msra.mxu0 0
        %877 = vmatprep.mubr.bf16.mxu0 0
        %878 = vmatmul.mubr.bf16.gmra.mrb[0].mxu0 %v843
        %v879 = vpop.f32.mrb[0].mxu0
        %v880 = vadd.f32 0.0, %v879
        %v881 = vpop.f32.mrb[0].mxu0
        %v882 = vpop.f32.mrb[0].mxu0
        %v883 = vadd.f32 0.0, %v882
        %v884 = vpop.f32.mrb[0].mxu0
        %885 = vdwg.mxu0
        %886 = vmatprep.subr.bf16.mxu0 0
        %887 = vmatpush1.bf16.xpose.msra.mxu0 %v832
        %888 = vmatprep.subr.bf16.mxu0 0
        %889 = vmatpush1.bf16.xpose.msra.mxu0 0
        %890 = vmatprep.subr.bf16.mxu0 0
        %891 = vmatpush1.bf16.xpose.msra.mxu0 0
        %892 = vmatprep.subr.bf16.mxu0 0
        %893 = vmatpush1.bf16.xpose.msra.mxu0 0
        %894 = vmatprep.subr.bf16.mxu0 0
        %895 = vmatpush1.bf16.xpose.msra.mxu0 0
        %896 = vmatprep.subr.bf16.mxu0 0
        %897 = vmatpush1.bf16.xpose.msra.mxu0 0
        %898 = vmatprep.subr.bf16.mxu0 0
        %899 = vmatpush1.bf16.xpose.msra.mxu0 0
        %900 = vmatprep.subr.bf16.mxu0 0
        %901 = vmatpush1.bf16.xpose.msra.mxu0 0
        %902 = vmatprep.subr.bf16.mxu0 0
        %903 = vmatpush1.bf16.xpose.msra.mxu0 0
        %904 = vmatprep.subr.bf16.mxu0 0
        %905 = vmatpush1.bf16.xpose.msra.mxu0 0
        %906 = vmatprep.subr.bf16.mxu0 0
        %907 = vmatpush1.bf16.xpose.msra.mxu0 0
        %908 = vmatprep.subr.bf16.mxu0 0
        %909 = vmatpush1.bf16.xpose.msra.mxu0 0
        %910 = vmatprep.subr.bf16.mxu0 0
        %911 = vmatpush1.bf16.xpose.msra.mxu0 0
        %912 = vmatprep.subr.bf16.mxu0 0
        %913 = vmatpush1.bf16.xpose.msra.mxu0 0
        %914 = vmatprep.subr.bf16.mxu0 0
        %915 = vmatpush1.bf16.xpose.msra.mxu0 0
        %916 = vmatprep.subr.bf16.mxu0 0
        %917 = vmatpush1.bf16.xpose.msra.mxu0 0
        %918 = vmatprep.mubr.bf16.mxu0 0
        %919 = vmatmul.mubr.bf16.gmra.mrb[0].mxu0 %v844
        %v920 = vpop.f32.mrb[0].mxu0
        %v921 = vadd.f32 0.0, %v920
        %v922 = vpop.f32.mrb[0].mxu0
        %v923 = vpop.f32.mrb[0].mxu0
        %v924 = vadd.f32 0.0, %v923
        %v925 = vpop.f32.mrb[0].mxu0
        %926 = vdwg.mxu0
        %v927 = vmul.f32 %v880, 0.25
        %v928 = vmul.f32 %v883, 0.25
        %v929 = vmul.f32 %v921, 0.25
        %v930 = vmul.f32 %v924, 0.25
        %vm931 = vcmask 130048
        %v932 = vsel %vm931, %v927, -inf
        %933 = vmax.xlane.f32.xlu0 %v932
        %v934 = vpop.xlane.xlu0 %933
        %v935 = vsel %vm931, %v928, -inf
        %936 = vmax.xlane.f32.xlu0 %v935
        %v937 = vpop.xlane.xlu0 %936
        %v938 = vsel %vm931, %v929, -inf
        %939 = vmax.xlane.f32.xlu0 %v938
        %v940 = vpop.xlane.xlu0 %939
        %v941 = vsel %vm931, %v930, -inf
        %942 = vmax.xlane.f32.xlu0 %v941
        %v943 = vpop.xlane.xlu0 %942
        %v944 = vsub.f32 %v927, %v934
        %v945 = vsub.f32 %v928, %v937
        %v946 = vsub.f32 %v929, %v940
        %v947 = vsub.f32 %v930, %v943
        %v948 = vmul.f32 %v944, 1.442695
        %v949 = vpow.pop %v948
        %v950 = vmul.f32 %v945, 1.442695
        %v951 = vpow.pop %v950
        %v952 = vmul.f32 %v946, 1.442695
        %v953 = vpow.pop %v952
        %v954 = vmul.f32 %v947, 1.442695
        %v955 = vpow.pop %v954
        %v956 = vsel %vm931, %v949, 0.0
        %957 = vadd.xlane.f32.xlu0 %v956
        %v958 = vpop.xlane.xlu0 %957
        %v959 = vsel %vm931, %v951, 0.0
        %960 = vadd.xlane.f32.xlu0 %v959
        %v961 = vpop.xlane.xlu0 %960
        %v962 = vsel %vm931, %v953, 0.0
        %963 = vadd.xlane.f32.xlu0 %v962
        %v964 = vpop.xlane.xlu0 %963
        %v965 = vsel %vm931, %v955, 0.0
        %966 = vadd.xlane.f32.xlu0 %v965
        %v967 = vpop.xlane.xlu0 %966
        %v968 = vrcp.pop %v958
        %v969 = vrcp.pop %v961
        %v970 = vrcp.pop %v964
        %v971 = vrcp.pop %v967
        %v972 = vmul.f32 %v949, %v968
        %v973 = vmul.f32 %v951, %v969
        %v974 = vmul.f32 %v953, %v970
        %v975 = vmul.f32 %v955, %v971
        %v976 = vpack.c.bf16 %v973, %v972
        %v977 = vpack.c.bf16 %v975, %v974
        %v979 = vsel %vm931, %v976, 0
        %981 = vmatprep.subr.bf16.mxu0 0
        %982 = vmatpush1.bf16.msra.mxu0 %v833
        %983 = vmatprep.subr.bf16.mxu0 0
        %984 = vmatpush1.bf16.msra.mxu0 0
        %985 = vmatprep.subr.bf16.mxu0 0
        %986 = vmatpush1.bf16.msra.mxu0 0
        %987 = vmatprep.subr.bf16.mxu0 0
        %988 = vmatpush1.bf16.msra.mxu0 0
        %989 = vmatprep.subr.bf16.mxu0 0
        %990 = vmatpush1.bf16.msra.mxu0 0
        %991 = vmatprep.subr.bf16.mxu0 0
        %992 = vmatpush1.bf16.msra.mxu0 0
        %993 = vmatprep.subr.bf16.mxu0 0
        %994 = vmatpush1.bf16.msra.mxu0 0
        %995 = vmatprep.subr.bf16.mxu0 0
        %996 = vmatpush1.bf16.msra.mxu0 0
        %997 = vmatprep.subr.bf16.mxu0 0
        %998 = vmatpush1.bf16.msra.mxu0 0
        %999 = vmatprep.subr.bf16.mxu0 0
        %1000 = vmatpush1.bf16.msra.mxu0 0
        %1001 = vmatprep.subr.bf16.mxu0 0
        %1002 = vmatpush1.bf16.msra.mxu0 0
        %1003 = vmatprep.subr.bf16.mxu0 0
        %1004 = vmatpush1.bf16.msra.mxu0 0
        %1005 = vmatprep.subr.bf16.mxu0 0
        %1006 = vmatpush1.bf16.msra.mxu0 0
        %1007 = vmatprep.subr.bf16.mxu0 0
        %1008 = vmatpush1.bf16.msra.mxu0 0
        %1009 = vmatprep.subr.bf16.mxu0 0
        %1010 = vmatpush1.bf16.msra.mxu0 0
        %1011 = vmatprep.subr.bf16.mxu0 0
        %1012 = vmatpush1.bf16.msra.mxu0 0
        %1013 = vmatprep.mubr.bf16.mxu0 0
        %1014 = vmatmul.mubr.bf16.gmra.mrb[0].mxu0 %v979
        %v1015 = vpop.f32.mrb[0].mxu0
        %v1016 = vadd.f32 0.0, %v1015
        %v1017 = vpop.f32.mrb[0].mxu0
        %v1018 = vpop.f32.mrb[0].mxu0
        %v1019 = vadd.f32 0.0, %v1018
        %v1020 = vpop.f32.mrb[0].mxu0
        %1021 = vdwg.mxu0
        %v1023 = vsel %vm931, %v977, 0
        %1025 = vmatprep.subr.bf16.mxu0 0
        %1026 = vmatpush1.bf16.msra.mxu0 %v834
        %1027 = vmatprep.subr.bf16.mxu0 0
        %1028 = vmatpush1.bf16.msra.mxu0 0
        %1029 = vmatprep.subr.bf16.mxu0 0
        %1030 = vmatpush1.bf16.msra.mxu0 0
        %1031 = vmatprep.subr.bf16.mxu0 0
        %1032 = vmatpush1.bf16.msra.mxu0 0
        %1033 = vmatprep.subr.bf16.mxu0 0
        %1034 = vmatpush1.bf16.msra.mxu0 0
        %1035 = vmatprep.subr.bf16.mxu0 0
        %1036 = vmatpush1.bf16.msra.mxu0 0
        %1037 = vmatprep.subr.bf16.mxu0 0
        %1038 = vmatpush1.bf16.msra.mxu0 0
        %1039 = vmatprep.subr.bf16.mxu0 0
        %1040 = vmatpush1.bf16.msra.mxu0 0
        %1041 = vmatprep.subr.bf16.mxu0 0
        %1042 = vmatpush1.bf16.msra.mxu0 0
        %1043 = vmatprep.subr.bf16.mxu0 0
        %1044 = vmatpush1.bf16.msra.mxu0 0
        %1045 = vmatprep.subr.bf16.mxu0 0
        %1046 = vmatpush1.bf16.msra.mxu0 0
        %1047 = vmatprep.subr.bf16.mxu0 0
        %1048 = vmatpush1.bf16.msra.mxu0 0
        %1049 = vmatprep.subr.bf16.mxu0 0
        %1050 = vmatpush1.bf16.msra.mxu0 0
        %1051 = vmatprep.subr.bf16.mxu0 0
        %1052 = vmatpush1.bf16.msra.mxu0 0
        %1053 = vmatprep.subr.bf16.mxu0 0
        %1054 = vmatpush1.bf16.msra.mxu0 0
        %1055 = vmatprep.subr.bf16.mxu0 0
        %1056 = vmatpush1.bf16.msra.mxu0 0
        %1057 = vmatprep.mubr.bf16.mxu0 0
        %1058 = vmatmul.mubr.bf16.gmra.mrb[0].mxu0 %v1023
        %v1059 = vpop.f32.mrb[0].mxu0
        %v1060 = vadd.f32 0.0, %v1059
        %v1061 = vpop.f32.mrb[0].mxu0
        %v1062 = vpop.f32.mrb[0].mxu0
        %v1063 = vadd.f32 0.0, %v1062
        %v1064 = vpop.f32.mrb[0].mxu0
        %1065 = vdwg.mxu0
        %v1066 = vmul.f32 %v1016, %v841
        %v1067 = vmul.f32 %v1019, %v841
        %v1068 = vmul.f32 %v1060, %v841
        %v1069 = vmul.f32 %v1063, %v841
        %v1070 = vadd.f32 %v1066, 0.0
        %v1071 = vadd.f32 %v1067, 0.0
        %v1072 = vadd.f32 %v1068, 0.0
        %v1073 = vadd.f32 %v1069, 0.0
        %vm1074 = vcmp.ge.s32.totalorder %v836, 16
        %vm1075 = vcmp.lt.s32.totalorder %v836, 32
        %vm1076 = vmand %vm1074, %vm1075
        %v1077 = vsel %vm1076, 1, 0
        %v1078 = vcvt.s32.f32 %v1077
        %v1079 = vpack.c.bf16 %v1078, %v1078
        %v1080 = vmul.bf16 %v829, %v1079
        %v1081 = vmul.bf16 %v830, %v1079
        %1082 = vmatprep.subr.bf16.mxu0 0
        %1083 = vmatpush1.bf16.xpose.msra.mxu0 %v831
        %1084 = vmatprep.subr.bf16.mxu0 0
        %1085 = vmatpush1.bf16.xpose.msra.mxu0 0
        %1086 = vmatprep.subr.bf16.mxu0 0
        %1087 = vmatpush1.bf16.xpose.msra.mxu0 0
        %1088 = vmatprep.subr.bf16.mxu0 0
        %1089 = vmatpush1.bf16.xpose.msra.mxu0 0
        %1090 = vmatprep.subr.bf16.mxu0 0
        %1091 = vmatpush1.bf16.xpose.msra.mxu0 0
        %1092 = vmatprep.subr.bf16.mxu0 0
        %1093 = vmatpush1.bf16.xpose.msra.mxu0 0
        %1094 = vmatprep.subr.bf16.mxu0 0
        %1095 = vmatpush1.bf16.xpose.msra.mxu0 0
        %1096 = vmatprep.subr.bf16.mxu0 0
        %1097 = vmatpush1.bf16.xpose.msra.mxu0 0
        %1098 = vmatprep.subr.bf16.mxu0 0
        %1099 = vmatpush1.bf16.xpose.msra.mxu0 0
        %1100 = vmatprep.subr.bf16.mxu0 0
        %1101 = vmatpush1.bf16.xpose.msra.mxu0 0
        %1102 = vmatprep.subr.bf16.mxu0 0
        %1103 = vmatpush1.bf16.xpose.msra.mxu0 0
        %1104 = vmatprep.subr.bf16.mxu0 0
        %1105 = vmatpush1.bf16.xpose.msra.mxu0 0
        %1106 = vmatprep.subr.bf16.mxu0 0
        %1107 = vmatpush1.bf16.xpose.msra.mxu0 0
        %1108 = vmatprep.subr.bf16.mxu0 0
        %1109 = vmatpush1.bf16.xpose.msra.mxu0 0
        %1110 = vmatprep.subr.bf16.mxu0 0
        %1111 = vmatpush1.bf16.xpose.msra.mxu0 0
        %1112 = vmatprep.subr.bf16.mxu0 0
        %1113 = vmatpush1.bf16.xpose.msra.mxu0 0
        %1114 = vmatprep.mubr.bf16.mxu0 0
        %1115 = vmatmul.mubr.bf16.gmra.mrb[0].mxu0 %v1080
        %v1116 = vpop.f32.mrb[0].mxu0
        %v1117 = vadd.f32 0.0, %v1116
        %v1118 = vpop.f32.mrb[0].mxu0
        %v1119 = vpop.f32.mrb[0].mxu0
        %v1120 = vadd.f32 0.0, %v1119
        %v1121 = vpop.f32.mrb[0].mxu0
        %1122 = vdwg.mxu0
        %1123 = vmatprep.subr.bf16.mxu0 0
        %1124 = vmatpush1.bf16.xpose.msra.mxu0 %v832
        %1125 = vmatprep.subr.bf16.mxu0 0
        %1126 = vmatpush1.bf16.xpose.msra.mxu0 0
        %1127 = vmatprep.subr.bf16.mxu0 0
        %1128 = vmatpush1.bf16.xpose.msra.mxu0 0
        %1129 = vmatprep.subr.bf16.mxu0 0
        %1130 = vmatpush1.bf16.xpose.msra.mxu0 0
        %1131 = vmatprep.subr.bf16.mxu0 0
        %1132 = vmatpush1.bf16.xpose.msra.mxu0 0
        %1133 = vmatprep.subr.bf16.mxu0 0
        %1134 = vmatpush1.bf16.xpose.msra.mxu0 0
        %1135 = vmatprep.subr.bf16.mxu0 0
        %1136 = vmatpush1.bf16.xpose.msra.mxu0 0
        %1137 = vmatprep.subr.bf16.mxu0 0
        %1138 = vmatpush1.bf16.xpose.msra.mxu0 0
        %1139 = vmatprep.subr.bf16.mxu0 0
        %1140 = vmatpush1.bf16.xpose.msra.mxu0 0
        %1141 = vmatprep.subr.bf16.mxu0 0
        %1142 = vmatpush1.bf16.xpose.msra.mxu0 0
        %1143 = vmatprep.subr.bf16.mxu0 0
        %1144 = vmatpush1.bf16.xpose.msra.mxu0 0
        %1145 = vmatprep.subr.bf16.mxu0 0
        %1146 = vmatpush1.bf16.xpose.msra.mxu0 0
        %1147 = vmatprep.subr.bf16.mxu0 0
        %1148 = vmatpush1.bf16.xpose.msra.mxu0 0
        %1149 = vmatprep.subr.bf16.mxu0 0
        %1150 = vmatpush1.bf16.xpose.msra.mxu0 0
        %1151 = vmatprep.subr.bf16.mxu0 0
        %1152 = vmatpush1.bf16.xpose.msra.mxu0 0
        %1153 = vmatprep.subr.bf16.mxu0 0
        %1154 = vmatpush1.bf16.xpose.msra.mxu0 0
        %1155 = vmatprep.mubr.bf16.mxu0 0
        %1156 = vmatmul.mubr.bf16.gmra.mrb[0].mxu0 %v1081
        %v1157 = vpop.f32.mrb[0].mxu0
        %v1158 = vadd.f32 0.0, %v1157
        %v1159 = vpop.f32.mrb[0].mxu0
        %v1160 = vpop.f32.mrb[0].mxu0
        %v1161 = vadd.f32 0.0, %v1160
        %v1162 = vpop.f32.mrb[0].mxu0
        %1163 = vdwg.mxu0
        %v1164 = vmul.f32 %v1117, 0.25
        %v1165 = vmul.f32 %v1120, 0.25
        %v1166 = vmul.f32 %v1158, 0.25
        %v1167 = vmul.f32 %v1161, 0.25
        %v1168 = vsel %vm931, %v1164, -inf
        %1169 = vmax.xlane.f32.xlu0 %v1168
        %v1170 = vpop.xlane.xlu0 %1169
        %v1171 = vsel %vm931, %v1165, -inf
        %1172 = vmax.xlane.f32.xlu0 %v1171
        %v1173 = vpop.xlane.xlu0 %1172
        %v1174 = vsel %vm931, %v1166, -inf
        %1175 = vmax.xlane.f32.xlu0 %v1174
        %v1176 = vpop.xlane.xlu0 %1175
        %v1177 = vsel %vm931, %v1167, -inf
        %1178 = vmax.xlane.f32.xlu0 %v1177
        %v1179 = vpop.xlane.xlu0 %1178
        %v1180 = vsub.f32 %v1164, %v1170
        %v1181 = vsub.f32 %v1165, %v1173
        %v1182 = vsub.f32 %v1166, %v1176
        %v1183 = vsub.f32 %v1167, %v1179
        %v1184 = vmul.f32 %v1180, 1.442695
        %v1185 = vpow.pop %v1184
        %v1186 = vmul.f32 %v1181, 1.442695
        %v1187 = vpow.pop %v1186
        %v1188 = vmul.f32 %v1182, 1.442695
        %v1189 = vpow.pop %v1188
        %v1190 = vmul.f32 %v1183, 1.442695
        %v1191 = vpow.pop %v1190
        %v1192 = vsel %vm931, %v1185, 0.0
        %1193 = vadd.xlane.f32.xlu0 %v1192
        %v1194 = vpop.xlane.xlu0 %1193
        %v1195 = vsel %vm931, %v1187, 0.0
        %1196 = vadd.xlane.f32.xlu0 %v1195
        %v1197 = vpop.xlane.xlu0 %1196
        %v1198 = vsel %vm931, %v1189, 0.0
        %1199 = vadd.xlane.f32.xlu0 %v1198
        %v1200 = vpop.xlane.xlu0 %1199
        %v1201 = vsel %vm931, %v1191, 0.0
        %1202 = vadd.xlane.f32.xlu0 %v1201
        %v1203 = vpop.xlane.xlu0 %1202
        %v1204 = vrcp.pop %v1194
        %v1205 = vrcp.pop %v1197
        %v1206 = vrcp.pop %v1200
        %v1207 = vrcp.pop %v1203
        %v1208 = vmul.f32 %v1185, %v1204
        %v1209 = vmul.f32 %v1187, %v1205
        %v1210 = vmul.f32 %v1189, %v1206
        %v1211 = vmul.f32 %v1191, %v1207
        %v1212 = vpack.c.bf16 %v1209, %v1208
        %v1213 = vpack.c.bf16 %v1211, %v1210
        %v1215 = vsel %vm931, %v1212, 0
        %1217 = vmatprep.subr.bf16.mxu0 0
        %1218 = vmatpush1.bf16.msra.mxu0 %v833
        %1219 = vmatprep.subr.bf16.mxu0 0
        %1220 = vmatpush1.bf16.msra.mxu0 0
        %1221 = vmatprep.subr.bf16.mxu0 0
        %1222 = vmatpush1.bf16.msra.mxu0 0
        %1223 = vmatprep.subr.bf16.mxu0 0
        %1224 = vmatpush1.bf16.msra.mxu0 0
        %1225 = vmatprep.subr.bf16.mxu0 0
        %1226 = vmatpush1.bf16.msra.mxu0 0
        %1227 = vmatprep.subr.bf16.mxu0 0
        %1228 = vmatpush1.bf16.msra.mxu0 0
        %1229 = vmatprep.subr.bf16.mxu0 0
        %1230 = vmatpush1.bf16.msra.mxu0 0
        %1231 = vmatprep.subr.bf16.mxu0 0
        %1232 = vmatpush1.bf16.msra.mxu0 0
        %1233 = vmatprep.subr.bf16.mxu0 0
        %1234 = vmatpush1.bf16.msra.mxu0 0
        %1235 = vmatprep.subr.bf16.mxu0 0
        %1236 = vmatpush1.bf16.msra.mxu0 0
        %1237 = vmatprep.subr.bf16.mxu0 0
        %1238 = vmatpush1.bf16.msra.mxu0 0
        %1239 = vmatprep.subr.bf16.mxu0 0
        %1240 = vmatpush1.bf16.msra.mxu0 0
        %1241 = vmatprep.subr.bf16.mxu0 0
        %1242 = vmatpush1.bf16.msra.mxu0 0
        %1243 = vmatprep.subr.bf16.mxu0 0
        %1244 = vmatpush1.bf16.msra.mxu0 0
        %1245 = vmatprep.subr.bf16.mxu0 0
        %1246 = vmatpush1.bf16.msra.mxu0 0
        %1247 = vmatprep.subr.bf16.mxu0 0
        %1248 = vmatpush1.bf16.msra.mxu0 0
        %1249 = vmatprep.mubr.bf16.mxu0 0
        %1250 = vmatmul.mubr.bf16.gmra.mrb[0].mxu0 %v1215
        %v1251 = vpop.f32.mrb[0].mxu0
        %v1252 = vadd.f32 0.0, %v1251
        %v1253 = vpop.f32.mrb[0].mxu0
        %v1254 = vpop.f32.mrb[0].mxu0
        %v1255 = vadd.f32 0.0, %v1254
        %v1256 = vpop.f32.mrb[0].mxu0
        %1257 = vdwg.mxu0
        %v1259 = vsel %vm931, %v1213, 0
        %1261 = vmatprep.subr.bf16.mxu0 0
        %1262 = vmatpush1.bf16.msra.mxu0 %v834
        %1263 = vmatprep.subr.bf16.mxu0 0
        %1264 = vmatpush1.bf16.msra.mxu0 0
        %1265 = vmatprep.subr.bf16.mxu0 0
        %1266 = vmatpush1.bf16.msra.mxu0 0
        %1267 = vmatprep.subr.bf16.mxu0 0
        %1268 = vmatpush1.bf16.msra.mxu0 0
        %1269 = vmatprep.subr.bf16.mxu0 0
        %1270 = vmatpush1.bf16.msra.mxu0 0
        %1271 = vmatprep.subr.bf16.mxu0 0
        %1272 = vmatpush1.bf16.msra.mxu0 0
        %1273 = vmatprep.subr.bf16.mxu0 0
        %1274 = vmatpush1.bf16.msra.mxu0 0
        %1275 = vmatprep.subr.bf16.mxu0 0
        %1276 = vmatpush1.bf16.msra.mxu0 0
        %1277 = vmatprep.subr.bf16.mxu0 0
        %1278 = vmatpush1.bf16.msra.mxu0 0
        %1279 = vmatprep.subr.bf16.mxu0 0
        %1280 = vmatpush1.bf16.msra.mxu0 0
        %1281 = vmatprep.subr.bf16.mxu0 0
        %1282 = vmatpush1.bf16.msra.mxu0 0
        %1283 = vmatprep.subr.bf16.mxu0 0
        %1284 = vmatpush1.bf16.msra.mxu0 0
        %1285 = vmatprep.subr.bf16.mxu0 0
        %1286 = vmatpush1.bf16.msra.mxu0 0
        %1287 = vmatprep.subr.bf16.mxu0 0
        %1288 = vmatpush1.bf16.msra.mxu0 0
        %1289 = vmatprep.subr.bf16.mxu0 0
        %1290 = vmatpush1.bf16.msra.mxu0 0
        %1291 = vmatprep.subr.bf16.mxu0 0
        %1292 = vmatpush1.bf16.msra.mxu0 0
        %1293 = vmatprep.mubr.bf16.mxu0 0
        %1294 = vmatmul.mubr.bf16.gmra.mrb[0].mxu0 %v1259
        %v1295 = vpop.f32.mrb[0].mxu0
        %v1296 = vadd.f32 0.0, %v1295
        %v1297 = vpop.f32.mrb[0].mxu0
        %v1298 = vpop.f32.mrb[0].mxu0
        %v1299 = vadd.f32 0.0, %v1298
        %v1300 = vpop.f32.mrb[0].mxu0
        %1301 = vdwg.mxu0
        %v1302 = vmul.f32 %v1252, %v1078
        %v1303 = vmul.f32 %v1255, %v1078
        %v1304 = vmul.f32 %v1296, %v1078
        %v1305 = vmul.f32 %v1299, %v1078
        %v1306 = vadd.f32 %v1070, %v1302
        %v1307 = vadd.f32 %v1071, %v1303
        %v1308 = vadd.f32 %v1072, %v1304
        %v1309 = vadd.f32 %v1073, %v1305
        %vm1310 = vcmp.ge.s32.totalorder %v836, 32
        %vm1311 = vcmp.lt.s32.totalorder %v836, 48
        %vm1312 = vmand %vm1310, %vm1311
        %v1313 = vsel %vm1312, 1, 0
        %v1314 = vcvt.s32.f32 %v1313
        %v1315 = vpack.c.bf16 %v1314, %v1314
        %v1316 = vmul.bf16 %v829, %v1315
        %v1317 = vmul.bf16 %v830, %v1315
        %1318 = vmatprep.subr.bf16.mxu0 0
        %1319 = vmatpush1.bf16.xpose.msra.mxu0 %v831
        %1320 = vmatprep.subr.bf16.mxu0 0
        %1321 = vmatpush1.bf16.xpose.msra.mxu0 0
        %1322 = vmatprep.subr.bf16.mxu0 0
        %1323 = vmatpush1.bf16.xpose.msra.mxu0 0
        %1324 = vmatprep.subr.bf16.mxu0 0
        %1325 = vmatpush1.bf16.xpose.msra.mxu0 0
        %1326 = vmatprep.subr.bf16.mxu0 0
        %1327 = vmatpush1.bf16.xpose.msra.mxu0 0
        %1328 = vmatprep.subr.bf16.mxu0 0
        %1329 = vmatpush1.bf16.xpose.msra.mxu0 0
        %1330 = vmatprep.subr.bf16.mxu0 0
        %1331 = vmatpush1.bf16.xpose.msra.mxu0 0
        %1332 = vmatprep.subr.bf16.mxu0 0
        %1333 = vmatpush1.bf16.xpose.msra.mxu0 0
        %1334 = vmatprep.subr.bf16.mxu0 0
        %1335 = vmatpush1.bf16.xpose.msra.mxu0 0
        %1336 = vmatprep.subr.bf16.mxu0 0
        %1337 = vmatpush1.bf16.xpose.msra.mxu0 0
        %1338 = vmatprep.subr.bf16.mxu0 0
        %1339 = vmatpush1.bf16.xpose.msra.mxu0 0
        %1340 = vmatprep.subr.bf16.mxu0 0
        %1341 = vmatpush1.bf16.xpose.msra.mxu0 0
        %1342 = vmatprep.subr.bf16.mxu0 0
        %1343 = vmatpush1.bf16.xpose.msra.mxu0 0
        %1344 = vmatprep.subr.bf16.mxu0 0
        %1345 = vmatpush1.bf16.xpose.msra.mxu0 0
        %1346 = vmatprep.subr.bf16.mxu0 0
        %1347 = vmatpush1.bf16.xpose.msra.mxu0 0
        %1348 = vmatprep.subr.bf16.mxu0 0
        %1349 = vmatpush1.bf16.xpose.msra.mxu0 0
        %1350 = vmatprep.mubr.bf16.mxu0 0
        %1351 = vmatmul.mubr.bf16.gmra.mrb[0].mxu0 %v1316
        %v1352 = vpop.f32.mrb[0].mxu0
        %v1353 = vadd.f32 0.0, %v1352
        %v1354 = vpop.f32.mrb[0].mxu0
        %v1355 = vpop.f32.mrb[0].mxu0
        %v1356 = vadd.f32 0.0, %v1355
        %v1357 = vpop.f32.mrb[0].mxu0
        %1358 = vdwg.mxu0
        %1359 = vmatprep.subr.bf16.mxu0 0
        %1360 = vmatpush1.bf16.xpose.msra.mxu0 %v832
        %1361 = vmatprep.subr.bf16.mxu0 0
        %1362 = vmatpush1.bf16.xpose.msra.mxu0 0
        %1363 = vmatprep.subr.bf16.mxu0 0
        %1364 = vmatpush1.bf16.xpose.msra.mxu0 0
        %1365 = vmatprep.subr.bf16.mxu0 0
        %1366 = vmatpush1.bf16.xpose.msra.mxu0 0
        %1367 = vmatprep.subr.bf16.mxu0 0
        %1368 = vmatpush1.bf16.xpose.msra.mxu0 0
        %1369 = vmatprep.subr.bf16.mxu0 0
        %1370 = vmatpush1.bf16.xpose.msra.mxu0 0
        %1371 = vmatprep.subr.bf16.mxu0 0
        %1372 = vmatpush1.bf16.xpose.msra.mxu0 0
        %1373 = vmatprep.subr.bf16.mxu0 0
        %1374 = vmatpush1.bf16.xpose.msra.mxu0 0
        %1375 = vmatprep.subr.bf16.mxu0 0
        %1376 = vmatpush1.bf16.xpose.msra.mxu0 0
        %1377 = vmatprep.subr.bf16.mxu0 0
        %1378 = vmatpush1.bf16.xpose.msra.mxu0 0
        %1379 = vmatprep.subr.bf16.mxu0 0
        %1380 = vmatpush1.bf16.xpose.msra.mxu0 0
        %1381 = vmatprep.subr.bf16.mxu0 0
        %1382 = vmatpush1.bf16.xpose.msra.mxu0 0
        %1383 = vmatprep.subr.bf16.mxu0 0
        %1384 = vmatpush1.bf16.xpose.msra.mxu0 0
        %1385 = vmatprep.subr.bf16.mxu0 0
        %1386 = vmatpush1.bf16.xpose.msra.mxu0 0
        %1387 = vmatprep.subr.bf16.mxu0 0
        %1388 = vmatpush1.bf16.xpose.msra.mxu0 0
        %1389 = vmatprep.subr.bf16.mxu0 0
        %1390 = vmatpush1.bf16.xpose.msra.mxu0 0
        %1391 = vmatprep.mubr.bf16.mxu0 0
        %1392 = vmatmul.mubr.bf16.gmra.mrb[0].mxu0 %v1317
        %v1393 = vpop.f32.mrb[0].mxu0
        %v1394 = vadd.f32 0.0, %v1393
        %v1395 = vpop.f32.mrb[0].mxu0
        %v1396 = vpop.f32.mrb[0].mxu0
        %v1397 = vadd.f32 0.0, %v1396
        %v1398 = vpop.f32.mrb[0].mxu0
        %1399 = vdwg.mxu0
        %v1400 = vmul.f32 %v1353, 0.25
        %v1401 = vmul.f32 %v1356, 0.25
        %v1402 = vmul.f32 %v1394, 0.25
        %v1403 = vmul.f32 %v1397, 0.25
        %v1404 = vsel %vm931, %v1400, -inf
        %1405 = vmax.xlane.f32.xlu0 %v1404
        %v1406 = vpop.xlane.xlu0 %1405
        %v1407 = vsel %vm931, %v1401, -inf
        %1408 = vmax.xlane.f32.xlu0 %v1407
        %v1409 = vpop.xlane.xlu0 %1408
        %v1410 = vsel %vm931, %v1402, -inf
        %1411 = vmax.xlane.f32.xlu0 %v1410
        %v1412 = vpop.xlane.xlu0 %1411
        %v1413 = vsel %vm931, %v1403, -inf
        %1414 = vmax.xlane.f32.xlu0 %v1413
        %v1415 = vpop.xlane.xlu0 %1414
        %v1416 = vsub.f32 %v1400, %v1406
        %v1417 = vsub.f32 %v1401, %v1409
        %v1418 = vsub.f32 %v1402, %v1412
        %v1419 = vsub.f32 %v1403, %v1415
        %v1420 = vmul.f32 %v1416, 1.442695
        %v1421 = vpow.pop %v1420
        %v1422 = vmul.f32 %v1417, 1.442695
        %v1423 = vpow.pop %v1422
        %v1424 = vmul.f32 %v1418, 1.442695
        %v1425 = vpow.pop %v1424
        %v1426 = vmul.f32 %v1419, 1.442695
        %v1427 = vpow.pop %v1426
        %v1428 = vsel %vm931, %v1421, 0.0
        %1429 = vadd.xlane.f32.xlu0 %v1428
        %v1430 = vpop.xlane.xlu0 %1429
        %v1431 = vsel %vm931, %v1423, 0.0
        %1432 = vadd.xlane.f32.xlu0 %v1431
        %v1433 = vpop.xlane.xlu0 %1432
        %v1434 = vsel %vm931, %v1425, 0.0
        %1435 = vadd.xlane.f32.xlu0 %v1434
        %v1436 = vpop.xlane.xlu0 %1435
        %v1437 = vsel %vm931, %v1427, 0.0
        %1438 = vadd.xlane.f32.xlu0 %v1437
        %v1439 = vpop.xlane.xlu0 %1438
        %v1440 = vrcp.pop %v1430
        %v1441 = vrcp.pop %v1433
        %v1442 = vrcp.pop %v1436
        %v1443 = vrcp.pop %v1439
        %v1444 = vmul.f32 %v1421, %v1440
        %v1445 = vmul.f32 %v1423, %v1441
        %v1446 = vmul.f32 %v1425, %v1442
        %v1447 = vmul.f32 %v1427, %v1443
        %v1448 = vpack.c.bf16 %v1445, %v1444
        %v1449 = vpack.c.bf16 %v1447, %v1446
        %v1451 = vsel %vm931, %v1448, 0
        %1453 = vmatprep.subr.bf16.mxu0 0
        %1454 = vmatpush1.bf16.msra.mxu0 %v833
        %1455 = vmatprep.subr.bf16.mxu0 0
        %1456 = vmatpush1.bf16.msra.mxu0 0
        %1457 = vmatprep.subr.bf16.mxu0 0
        %1458 = vmatpush1.bf16.msra.mxu0 0
        %1459 = vmatprep.subr.bf16.mxu0 0
        %1460 = vmatpush1.bf16.msra.mxu0 0
        %1461 = vmatprep.subr.bf16.mxu0 0
        %1462 = vmatpush1.bf16.msra.mxu0 0
        %1463 = vmatprep.subr.bf16.mxu0 0
        %1464 = vmatpush1.bf16.msra.mxu0 0
        %1465 = vmatprep.subr.bf16.mxu0 0
        %1466 = vmatpush1.bf16.msra.mxu0 0
        %1467 = vmatprep.subr.bf16.mxu0 0
        %1468 = vmatpush1.bf16.msra.mxu0 0
        %1469 = vmatprep.subr.bf16.mxu0 0
        %1470 = vmatpush1.bf16.msra.mxu0 0
        %1471 = vmatprep.subr.bf16.mxu0 0
        %1472 = vmatpush1.bf16.msra.mxu0 0
        %1473 = vmatprep.subr.bf16.mxu0 0
        %1474 = vmatpush1.bf16.msra.mxu0 0
        %1475 = vmatprep.subr.bf16.mxu0 0
        %1476 = vmatpush1.bf16.msra.mxu0 0
        %1477 = vmatprep.subr.bf16.mxu0 0
        %1478 = vmatpush1.bf16.msra.mxu0 0
        %1479 = vmatprep.subr.bf16.mxu0 0
        %1480 = vmatpush1.bf16.msra.mxu0 0
        %1481 = vmatprep.subr.bf16.mxu0 0
        %1482 = vmatpush1.bf16.msra.mxu0 0
        %1483 = vmatprep.subr.bf16.mxu0 0
        %1484 = vmatpush1.bf16.msra.mxu0 0
        %1485 = vmatprep.mubr.bf16.mxu0 0
        %1486 = vmatmul.mubr.bf16.gmra.mrb[0].mxu0 %v1451
        %v1487 = vpop.f32.mrb[0].mxu0
        %v1488 = vadd.f32 0.0, %v1487
        %v1489 = vpop.f32.mrb[0].mxu0
        %v1490 = vpop.f32.mrb[0].mxu0
        %v1491 = vadd.f32 0.0, %v1490
        %v1492 = vpop.f32.mrb[0].mxu0
        %1493 = vdwg.mxu0
        %v1495 = vsel %vm931, %v1449, 0
        %1497 = vmatprep.subr.bf16.mxu0 0
        %1498 = vmatpush1.bf16.msra.mxu0 %v834
        %1499 = vmatprep.subr.bf16.mxu0 0
        %1500 = vmatpush1.bf16.msra.mxu0 0
        %1501 = vmatprep.subr.bf16.mxu0 0
        %1502 = vmatpush1.bf16.msra.mxu0 0
        %1503 = vmatprep.subr.bf16.mxu0 0
        %1504 = vmatpush1.bf16.msra.mxu0 0
        %1505 = vmatprep.subr.bf16.mxu0 0
        %1506 = vmatpush1.bf16.msra.mxu0 0
        %1507 = vmatprep.subr.bf16.mxu0 0
        %1508 = vmatpush1.bf16.msra.mxu0 0
        %1509 = vmatprep.subr.bf16.mxu0 0
        %1510 = vmatpush1.bf16.msra.mxu0 0
        %1511 = vmatprep.subr.bf16.mxu0 0
        %1512 = vmatpush1.bf16.msra.mxu0 0
        %1513 = vmatprep.subr.bf16.mxu0 0
        %1514 = vmatpush1.bf16.msra.mxu0 0
        %1515 = vmatprep.subr.bf16.mxu0 0
        %1516 = vmatpush1.bf16.msra.mxu0 0
        %1517 = vmatprep.subr.bf16.mxu0 0
        %1518 = vmatpush1.bf16.msra.mxu0 0
        %1519 = vmatprep.subr.bf16.mxu0 0
        %1520 = vmatpush1.bf16.msra.mxu0 0
        %1521 = vmatprep.subr.bf16.mxu0 0
        %1522 = vmatpush1.bf16.msra.mxu0 0
        %1523 = vmatprep.subr.bf16.mxu0 0
        %1524 = vmatpush1.bf16.msra.mxu0 0
        %1525 = vmatprep.subr.bf16.mxu0 0
        %1526 = vmatpush1.bf16.msra.mxu0 0
        %1527 = vmatprep.subr.bf16.mxu0 0
        %1528 = vmatpush1.bf16.msra.mxu0 0
        %1529 = vmatprep.mubr.bf16.mxu0 0
        %1530 = vmatmul.mubr.bf16.gmra.mrb[0].mxu0 %v1495
        %v1531 = vpop.f32.mrb[0].mxu0
        %v1532 = vadd.f32 0.0, %v1531
        %v1533 = vpop.f32.mrb[0].mxu0
        %v1534 = vpop.f32.mrb[0].mxu0
        %v1535 = vadd.f32 0.0, %v1534
        %v1536 = vpop.f32.mrb[0].mxu0
        %1537 = vdwg.mxu0
        %v1538 = vmul.f32 %v1488, %v1314
        %v1539 = vmul.f32 %v1491, %v1314
        %v1540 = vmul.f32 %v1532, %v1314
        %v1541 = vmul.f32 %v1535, %v1314
        %v1542 = vadd.f32 %v1306, %v1538
        %v1543 = vadd.f32 %v1307, %v1539
        %v1544 = vadd.f32 %v1308, %v1540
        %v1545 = vadd.f32 %v1309, %v1541
        %vm1546 = vcmp.ge.s32.totalorder %v836, 48
        %vm1547 = vcmp.lt.s32.totalorder %v836, 64
        %vm1548 = vmand %vm1546, %vm1547
        %v1549 = vsel %vm1548, 1, 0
        %v1550 = vcvt.s32.f32 %v1549
        %v1551 = vpack.c.bf16 %v1550, %v1550
        %v1552 = vmul.bf16 %v829, %v1551
        %v1553 = vmul.bf16 %v830, %v1551
        %1554 = vmatprep.subr.bf16.mxu0 0
        %1555 = vmatpush1.bf16.xpose.msra.mxu0 %v831
        %1556 = vmatprep.subr.bf16.mxu0 0
        %1557 = vmatpush1.bf16.xpose.msra.mxu0 0
        %1558 = vmatprep.subr.bf16.mxu0 0
        %1559 = vmatpush1.bf16.xpose.msra.mxu0 0
        %1560 = vmatprep.subr.bf16.mxu0 0
        %1561 = vmatpush1.bf16.xpose.msra.mxu0 0
        %1562 = vmatprep.subr.bf16.mxu0 0
        %1563 = vmatpush1.bf16.xpose.msra.mxu0 0
        %1564 = vmatprep.subr.bf16.mxu0 0
        %1565 = vmatpush1.bf16.xpose.msra.mxu0 0
        %1566 = vmatprep.subr.bf16.mxu0 0
        %1567 = vmatpush1.bf16.xpose.msra.mxu0 0
        %1568 = vmatprep.subr.bf16.mxu0 0
        %1569 = vmatpush1.bf16.xpose.msra.mxu0 0
        %1570 = vmatprep.subr.bf16.mxu0 0
        %1571 = vmatpush1.bf16.xpose.msra.mxu0 0
        %1572 = vmatprep.subr.bf16.mxu0 0
        %1573 = vmatpush1.bf16.xpose.msra.mxu0 0
        %1574 = vmatprep.subr.bf16.mxu0 0
        %1575 = vmatpush1.bf16.xpose.msra.mxu0 0
        %1576 = vmatprep.subr.bf16.mxu0 0
        %1577 = vmatpush1.bf16.xpose.msra.mxu0 0
        %1578 = vmatprep.subr.bf16.mxu0 0
        %1579 = vmatpush1.bf16.xpose.msra.mxu0 0
        %1580 = vmatprep.subr.bf16.mxu0 0
        %1581 = vmatpush1.bf16.xpose.msra.mxu0 0
        %1582 = vmatprep.subr.bf16.mxu0 0
        %1583 = vmatpush1.bf16.xpose.msra.mxu0 0
        %1584 = vmatprep.subr.bf16.mxu0 0
        %1585 = vmatpush1.bf16.xpose.msra.mxu0 0
        %1586 = vmatprep.mubr.bf16.mxu0 0
        %1587 = vmatmul.mubr.bf16.gmra.mrb[0].mxu0 %v1552
        %v1588 = vpop.f32.mrb[0].mxu0
        %v1589 = vadd.f32 0.0, %v1588
        %v1590 = vpop.f32.mrb[0].mxu0
        %v1591 = vpop.f32.mrb[0].mxu0
        %v1592 = vadd.f32 0.0, %v1591
        %v1593 = vpop.f32.mrb[0].mxu0
        %1594 = vdwg.mxu0
        %1595 = vmatprep.subr.bf16.mxu0 0
        %1596 = vmatpush1.bf16.xpose.msra.mxu0 %v832
        %1597 = vmatprep.subr.bf16.mxu0 0
        %1598 = vmatpush1.bf16.xpose.msra.mxu0 0
        %1599 = vmatprep.subr.bf16.mxu0 0
        %1600 = vmatpush1.bf16.xpose.msra.mxu0 0
        %1601 = vmatprep.subr.bf16.mxu0 0
        %1602 = vmatpush1.bf16.xpose.msra.mxu0 0
        %1603 = vmatprep.subr.bf16.mxu0 0
        %1604 = vmatpush1.bf16.xpose.msra.mxu0 0
        %1605 = vmatprep.subr.bf16.mxu0 0
        %1606 = vmatpush1.bf16.xpose.msra.mxu0 0
        %1607 = vmatprep.subr.bf16.mxu0 0
        %1608 = vmatpush1.bf16.xpose.msra.mxu0 0
        %1609 = vmatprep.subr.bf16.mxu0 0
        %1610 = vmatpush1.bf16.xpose.msra.mxu0 0
        %1611 = vmatprep.subr.bf16.mxu0 0
        %1612 = vmatpush1.bf16.xpose.msra.mxu0 0
        %1613 = vmatprep.subr.bf16.mxu0 0
        %1614 = vmatpush1.bf16.xpose.msra.mxu0 0
        %1615 = vmatprep.subr.bf16.mxu0 0
        %1616 = vmatpush1.bf16.xpose.msra.mxu0 0
        %1617 = vmatprep.subr.bf16.mxu0 0
        %1618 = vmatpush1.bf16.xpose.msra.mxu0 0
        %1619 = vmatprep.subr.bf16.mxu0 0
        %1620 = vmatpush1.bf16.xpose.msra.mxu0 0
        %1621 = vmatprep.subr.bf16.mxu0 0
        %1622 = vmatpush1.bf16.xpose.msra.mxu0 0
        %1623 = vmatprep.subr.bf16.mxu0 0
        %1624 = vmatpush1.bf16.xpose.msra.mxu0 0
        %1625 = vmatprep.subr.bf16.mxu0 0
        %1626 = vmatpush1.bf16.xpose.msra.mxu0 0
        %1627 = vmatprep.mubr.bf16.mxu0 0
        %1628 = vmatmul.mubr.bf16.gmra.mrb[0].mxu0 %v1553
        %v1629 = vpop.f32.mrb[0].mxu0
        %v1630 = vadd.f32 0.0, %v1629
        %v1631 = vpop.f32.mrb[0].mxu0
        %v1632 = vpop.f32.mrb[0].mxu0
        %v1633 = vadd.f32 0.0, %v1632
        %v1634 = vpop.f32.mrb[0].mxu0
        %1635 = vdwg.mxu0
        %v1636 = vmul.f32 %v1589, 0.25
        %v1637 = vmul.f32 %v1592, 0.25
        %v1638 = vmul.f32 %v1630, 0.25
        %v1639 = vmul.f32 %v1633, 0.25
        %v1640 = vsel %vm931, %v1636, -inf
        %1641 = vmax.xlane.f32.xlu0 %v1640
        %v1642 = vpop.xlane.xlu0 %1641
        %v1643 = vsel %vm931, %v1637, -inf
        %1644 = vmax.xlane.f32.xlu0 %v1643
        %v1645 = vpop.xlane.xlu0 %1644
        %v1646 = vsel %vm931, %v1638, -inf
        %1647 = vmax.xlane.f32.xlu0 %v1646
        %v1648 = vpop.xlane.xlu0 %1647
        %v1649 = vsel %vm931, %v1639, -inf
        %1650 = vmax.xlane.f32.xlu0 %v1649
        %v1651 = vpop.xlane.xlu0 %1650
        %v1652 = vsub.f32 %v1636, %v1642
        %v1653 = vsub.f32 %v1637, %v1645
        %v1654 = vsub.f32 %v1638, %v1648
        %v1655 = vsub.f32 %v1639, %v1651
        %v1656 = vmul.f32 %v1652, 1.442695
        %v1657 = vpow.pop %v1656
        %v1658 = vmul.f32 %v1653, 1.442695
        %v1659 = vpow.pop %v1658
        %v1660 = vmul.f32 %v1654, 1.442695
        %v1661 = vpow.pop %v1660
        %v1662 = vmul.f32 %v1655, 1.442695
        %v1663 = vpow.pop %v1662
        %v1664 = vsel %vm931, %v1657, 0.0
        %1665 = vadd.xlane.f32.xlu0 %v1664
        %v1666 = vpop.xlane.xlu0 %1665
        %v1667 = vsel %vm931, %v1659, 0.0
        %1668 = vadd.xlane.f32.xlu0 %v1667
        %v1669 = vpop.xlane.xlu0 %1668
        %v1670 = vsel %vm931, %v1661, 0.0
        %1671 = vadd.xlane.f32.xlu0 %v1670
        %v1672 = vpop.xlane.xlu0 %1671
        %v1673 = vsel %vm931, %v1663, 0.0
        %1674 = vadd.xlane.f32.xlu0 %v1673
        %v1675 = vpop.xlane.xlu0 %1674
        %v1676 = vrcp.pop %v1666
        %v1677 = vrcp.pop %v1669
        %v1678 = vrcp.pop %v1672
        %v1679 = vrcp.pop %v1675
        %v1680 = vmul.f32 %v1657, %v1676
        %v1681 = vmul.f32 %v1659, %v1677
        %v1682 = vmul.f32 %v1661, %v1678
        %v1683 = vmul.f32 %v1663, %v1679
        %v1684 = vpack.c.bf16 %v1681, %v1680
        %v1685 = vpack.c.bf16 %v1683, %v1682
        %v1687 = vsel %vm931, %v1684, 0
        %1689 = vmatprep.subr.bf16.mxu0 0
        %1690 = vmatpush1.bf16.msra.mxu0 %v833
        %1691 = vmatprep.subr.bf16.mxu0 0
        %1692 = vmatpush1.bf16.msra.mxu0 0
        %1693 = vmatprep.subr.bf16.mxu0 0
        %1694 = vmatpush1.bf16.msra.mxu0 0
        %1695 = vmatprep.subr.bf16.mxu0 0
        %1696 = vmatpush1.bf16.msra.mxu0 0
        %1697 = vmatprep.subr.bf16.mxu0 0
        %1698 = vmatpush1.bf16.msra.mxu0 0
        %1699 = vmatprep.subr.bf16.mxu0 0
        %1700 = vmatpush1.bf16.msra.mxu0 0
        %1701 = vmatprep.subr.bf16.mxu0 0
        %1702 = vmatpush1.bf16.msra.mxu0 0
        %1703 = vmatprep.subr.bf16.mxu0 0
        %1704 = vmatpush1.bf16.msra.mxu0 0
        %1705 = vmatprep.subr.bf16.mxu0 0
        %1706 = vmatpush1.bf16.msra.mxu0 0
        %1707 = vmatprep.subr.bf16.mxu0 0
        %1708 = vmatpush1.bf16.msra.mxu0 0
        %1709 = vmatprep.subr.bf16.mxu0 0
        %1710 = vmatpush1.bf16.msra.mxu0 0
        %1711 = vmatprep.subr.bf16.mxu0 0
        %1712 = vmatpush1.bf16.msra.mxu0 0
        %1713 = vmatprep.subr.bf16.mxu0 0
        %1714 = vmatpush1.bf16.msra.mxu0 0
        %1715 = vmatprep.subr.bf16.mxu0 0
        %1716 = vmatpush1.bf16.msra.mxu0 0
        %1717 = vmatprep.subr.bf16.mxu0 0
        %1718 = vmatpush1.bf16.msra.mxu0 0
        %1719 = vmatprep.subr.bf16.mxu0 0
        %1720 = vmatpush1.bf16.msra.mxu0 0
        %1721 = vmatprep.mubr.bf16.mxu0 0
        %1722 = vmatmul.mubr.bf16.gmra.mrb[0].mxu0 %v1687
        %v1723 = vpop.f32.mrb[0].mxu0
        %v1724 = vadd.f32 0.0, %v1723
        %v1725 = vpop.f32.mrb[0].mxu0
        %v1726 = vpop.f32.mrb[0].mxu0
        %v1727 = vadd.f32 0.0, %v1726
        %v1728 = vpop.f32.mrb[0].mxu0
        %1729 = vdwg.mxu0
        %v1731 = vsel %vm931, %v1685, 0
        %1733 = vmatprep.subr.bf16.mxu0 0
        %1734 = vmatpush1.bf16.msra.mxu0 %v834
        %1735 = vmatprep.subr.bf16.mxu0 0
        %1736 = vmatpush1.bf16.msra.mxu0 0
        %1737 = vmatprep.subr.bf16.mxu0 0
        %1738 = vmatpush1.bf16.msra.mxu0 0
        %1739 = vmatprep.subr.bf16.mxu0 0
        %1740 = vmatpush1.bf16.msra.mxu0 0
        %1741 = vmatprep.subr.bf16.mxu0 0
        %1742 = vmatpush1.bf16.msra.mxu0 0
        %1743 = vmatprep.subr.bf16.mxu0 0
        %1744 = vmatpush1.bf16.msra.mxu0 0
        %1745 = vmatprep.subr.bf16.mxu0 0
        %1746 = vmatpush1.bf16.msra.mxu0 0
        %1747 = vmatprep.subr.bf16.mxu0 0
        %1748 = vmatpush1.bf16.msra.mxu0 0
        %1749 = vmatprep.subr.bf16.mxu0 0
        %1750 = vmatpush1.bf16.msra.mxu0 0
        %1751 = vmatprep.subr.bf16.mxu0 0
        %1752 = vmatpush1.bf16.msra.mxu0 0
        %1753 = vmatprep.subr.bf16.mxu0 0
        %1754 = vmatpush1.bf16.msra.mxu0 0
        %1755 = vmatprep.subr.bf16.mxu0 0
        %1756 = vmatpush1.bf16.msra.mxu0 0
        %1757 = vmatprep.subr.bf16.mxu0 0
        %1758 = vmatpush1.bf16.msra.mxu0 0
        %1759 = vmatprep.subr.bf16.mxu0 0
        %1760 = vmatpush1.bf16.msra.mxu0 0
        %1761 = vmatprep.subr.bf16.mxu0 0
        %1762 = vmatpush1.bf16.msra.mxu0 0
        %1763 = vmatprep.subr.bf16.mxu0 0
        %1764 = vmatpush1.bf16.msra.mxu0 0
        %1765 = vmatprep.mubr.bf16.mxu0 0
        %1766 = vmatmul.mubr.bf16.gmra.mrb[0].mxu0 %v1731
        %v1767 = vpop.f32.mrb[0].mxu0
        %v1768 = vadd.f32 0.0, %v1767
        %v1769 = vpop.f32.mrb[0].mxu0
        %v1770 = vpop.f32.mrb[0].mxu0
        %v1771 = vadd.f32 0.0, %v1770
        %v1772 = vpop.f32.mrb[0].mxu0
        %1773 = vdwg.mxu0
        %v1774 = vmul.f32 %v1724, %v1550
        %v1775 = vmul.f32 %v1727, %v1550
        %v1776 = vmul.f32 %v1768, %v1550
        %v1777 = vmul.f32 %v1771, %v1550
        %v1778 = vadd.f32 %v1542, %v1774
        %v1779 = vadd.f32 %v1543, %v1775
        %v1780 = vadd.f32 %v1544, %v1776
        %v1781 = vadd.f32 %v1545, %v1777
        %vm1782 = vcmp.ge.s32.totalorder %v836, 64
        %vm1783 = vcmp.lt.s32.totalorder %v836, 80
        %vm1784 = vmand %vm1782, %vm1783
        %v1785 = vsel %vm1784, 1, 0
        %v1786 = vcvt.s32.f32 %v1785
        %v1787 = vpack.c.bf16 %v1786, %v1786
        %v1788 = vmul.bf16 %v829, %v1787
        %v1789 = vmul.bf16 %v830, %v1787
        %1790 = vmatprep.subr.bf16.mxu0 0
        %1791 = vmatpush1.bf16.xpose.msra.mxu0 %v831
        %1792 = vmatprep.subr.bf16.mxu0 0
        %1793 = vmatpush1.bf16.xpose.msra.mxu0 0
        %1794 = vmatprep.subr.bf16.mxu0 0
        %1795 = vmatpush1.bf16.xpose.msra.mxu0 0
        %1796 = vmatprep.subr.bf16.mxu0 0
        %1797 = vmatpush1.bf16.xpose.msra.mxu0 0
        %1798 = vmatprep.subr.bf16.mxu0 0
        %1799 = vmatpush1.bf16.xpose.msra.mxu0 0
        %1800 = vmatprep.subr.bf16.mxu0 0
        %1801 = vmatpush1.bf16.xpose.msra.mxu0 0
        %1802 = vmatprep.subr.bf16.mxu0 0
        %1803 = vmatpush1.bf16.xpose.msra.mxu0 0
        %1804 = vmatprep.subr.bf16.mxu0 0
        %1805 = vmatpush1.bf16.xpose.msra.mxu0 0
        %1806 = vmatprep.subr.bf16.mxu0 0
        %1807 = vmatpush1.bf16.xpose.msra.mxu0 0
        %1808 = vmatprep.subr.bf16.mxu0 0
        %1809 = vmatpush1.bf16.xpose.msra.mxu0 0
        %1810 = vmatprep.subr.bf16.mxu0 0
        %1811 = vmatpush1.bf16.xpose.msra.mxu0 0
        %1812 = vmatprep.subr.bf16.mxu0 0
        %1813 = vmatpush1.bf16.xpose.msra.mxu0 0
        %1814 = vmatprep.subr.bf16.mxu0 0
        %1815 = vmatpush1.bf16.xpose.msra.mxu0 0
        %1816 = vmatprep.subr.bf16.mxu0 0
        %1817 = vmatpush1.bf16.xpose.msra.mxu0 0
        %1818 = vmatprep.subr.bf16.mxu0 0
        %1819 = vmatpush1.bf16.xpose.msra.mxu0 0
        %1820 = vmatprep.subr.bf16.mxu0 0
        %1821 = vmatpush1.bf16.xpose.msra.mxu0 0
        %1822 = vmatprep.mubr.bf16.mxu0 0
        %1823 = vmatmul.mubr.bf16.gmra.mrb[0].mxu0 %v1788
        %v1824 = vpop.f32.mrb[0].mxu0
        %v1825 = vadd.f32 0.0, %v1824
        %v1826 = vpop.f32.mrb[0].mxu0
        %v1827 = vpop.f32.mrb[0].mxu0
        %v1828 = vadd.f32 0.0, %v1827
        %v1829 = vpop.f32.mrb[0].mxu0
        %1830 = vdwg.mxu0
        %1831 = vmatprep.subr.bf16.mxu0 0
        %1832 = vmatpush1.bf16.xpose.msra.mxu0 %v832
        %1833 = vmatprep.subr.bf16.mxu0 0
        %1834 = vmatpush1.bf16.xpose.msra.mxu0 0
        %1835 = vmatprep.subr.bf16.mxu0 0
        %1836 = vmatpush1.bf16.xpose.msra.mxu0 0
        %1837 = vmatprep.subr.bf16.mxu0 0
        %1838 = vmatpush1.bf16.xpose.msra.mxu0 0
        %1839 = vmatprep.subr.bf16.mxu0 0
        %1840 = vmatpush1.bf16.xpose.msra.mxu0 0
        %1841 = vmatprep.subr.bf16.mxu0 0
        %1842 = vmatpush1.bf16.xpose.msra.mxu0 0
        %1843 = vmatprep.subr.bf16.mxu0 0
        %1844 = vmatpush1.bf16.xpose.msra.mxu0 0
        %1845 = vmatprep.subr.bf16.mxu0 0
        %1846 = vmatpush1.bf16.xpose.msra.mxu0 0
        %1847 = vmatprep.subr.bf16.mxu0 0
        %1848 = vmatpush1.bf16.xpose.msra.mxu0 0
        %1849 = vmatprep.subr.bf16.mxu0 0
        %1850 = vmatpush1.bf16.xpose.msra.mxu0 0
        %1851 = vmatprep.subr.bf16.mxu0 0
        %1852 = vmatpush1.bf16.xpose.msra.mxu0 0
        %1853 = vmatprep.subr.bf16.mxu0 0
        %1854 = vmatpush1.bf16.xpose.msra.mxu0 0
        %1855 = vmatprep.subr.bf16.mxu0 0
        %1856 = vmatpush1.bf16.xpose.msra.mxu0 0
        %1857 = vmatprep.subr.bf16.mxu0 0
        %1858 = vmatpush1.bf16.xpose.msra.mxu0 0
        %1859 = vmatprep.subr.bf16.mxu0 0
        %1860 = vmatpush1.bf16.xpose.msra.mxu0 0
        %1861 = vmatprep.subr.bf16.mxu0 0
        %1862 = vmatpush1.bf16.xpose.msra.mxu0 0
        %1863 = vmatprep.mubr.bf16.mxu0 0
        %1864 = vmatmul.mubr.bf16.gmra.mrb[0].mxu0 %v1789
        %v1865 = vpop.f32.mrb[0].mxu0
        %v1866 = vadd.f32 0.0, %v1865
        %v1867 = vpop.f32.mrb[0].mxu0
        %v1868 = vpop.f32.mrb[0].mxu0
        %v1869 = vadd.f32 0.0, %v1868
        %v1870 = vpop.f32.mrb[0].mxu0
        %1871 = vdwg.mxu0
        %v1872 = vmul.f32 %v1825, 0.25
        %v1873 = vmul.f32 %v1828, 0.25
        %v1874 = vmul.f32 %v1866, 0.25
        %v1875 = vmul.f32 %v1869, 0.25
        %v1876 = vsel %vm931, %v1872, -inf
        %1877 = vmax.xlane.f32.xlu0 %v1876
        %v1878 = vpop.xlane.xlu0 %1877
        %v1879 = vsel %vm931, %v1873, -inf
        %1880 = vmax.xlane.f32.xlu0 %v1879
        %v1881 = vpop.xlane.xlu0 %1880
        %v1882 = vsel %vm931, %v1874, -inf
        %1883 = vmax.xlane.f32.xlu0 %v1882
        %v1884 = vpop.xlane.xlu0 %1883
        %v1885 = vsel %vm931, %v1875, -inf
        %1886 = vmax.xlane.f32.xlu0 %v1885
        %v1887 = vpop.xlane.xlu0 %1886
        %v1888 = vsub.f32 %v1872, %v1878
        %v1889 = vsub.f32 %v1873, %v1881
        %v1890 = vsub.f32 %v1874, %v1884
        %v1891 = vsub.f32 %v1875, %v1887
        %v1892 = vmul.f32 %v1888, 1.442695
        %v1893 = vpow.pop %v1892
        %v1894 = vmul.f32 %v1889, 1.442695
        %v1895 = vpow.pop %v1894
        %v1896 = vmul.f32 %v1890, 1.442695
        %v1897 = vpow.pop %v1896
        %v1898 = vmul.f32 %v1891, 1.442695
        %v1899 = vpow.pop %v1898
        %v1900 = vsel %vm931, %v1893, 0.0
        %1901 = vadd.xlane.f32.xlu0 %v1900
        %v1902 = vpop.xlane.xlu0 %1901
        %v1903 = vsel %vm931, %v1895, 0.0
        %1904 = vadd.xlane.f32.xlu0 %v1903
        %v1905 = vpop.xlane.xlu0 %1904
        %v1906 = vsel %vm931, %v1897, 0.0
        %1907 = vadd.xlane.f32.xlu0 %v1906
        %v1908 = vpop.xlane.xlu0 %1907
        %v1909 = vsel %vm931, %v1899, 0.0
        %1910 = vadd.xlane.f32.xlu0 %v1909
        %v1911 = vpop.xlane.xlu0 %1910
        %v1912 = vrcp.pop %v1902
        %v1913 = vrcp.pop %v1905
        %v1914 = vrcp.pop %v1908
        %v1915 = vrcp.pop %v1911
        %v1916 = vmul.f32 %v1893, %v1912
        %v1917 = vmul.f32 %v1895, %v1913
        %v1918 = vmul.f32 %v1897, %v1914
        %v1919 = vmul.f32 %v1899, %v1915
        %v1920 = vpack.c.bf16 %v1917, %v1916
        %v1921 = vpack.c.bf16 %v1919, %v1918
        %v1923 = vsel %vm931, %v1920, 0
        %1925 = vmatprep.subr.bf16.mxu0 0
        %1926 = vmatpush1.bf16.msra.mxu0 %v833
        %1927 = vmatprep.subr.bf16.mxu0 0
        %1928 = vmatpush1.bf16.msra.mxu0 0
        %1929 = vmatprep.subr.bf16.mxu0 0
        %1930 = vmatpush1.bf16.msra.mxu0 0
        %1931 = vmatprep.subr.bf16.mxu0 0
        %1932 = vmatpush1.bf16.msra.mxu0 0
        %1933 = vmatprep.subr.bf16.mxu0 0
        %1934 = vmatpush1.bf16.msra.mxu0 0
        %1935 = vmatprep.subr.bf16.mxu0 0
        %1936 = vmatpush1.bf16.msra.mxu0 0
        %1937 = vmatprep.subr.bf16.mxu0 0
        %1938 = vmatpush1.bf16.msra.mxu0 0
        %1939 = vmatprep.subr.bf16.mxu0 0
        %1940 = vmatpush1.bf16.msra.mxu0 0
        %1941 = vmatprep.subr.bf16.mxu0 0
        %1942 = vmatpush1.bf16.msra.mxu0 0
        %1943 = vmatprep.subr.bf16.mxu0 0
        %1944 = vmatpush1.bf16.msra.mxu0 0
        %1945 = vmatprep.subr.bf16.mxu0 0
        %1946 = vmatpush1.bf16.msra.mxu0 0
        %1947 = vmatprep.subr.bf16.mxu0 0
        %1948 = vmatpush1.bf16.msra.mxu0 0
        %1949 = vmatprep.subr.bf16.mxu0 0
        %1950 = vmatpush1.bf16.msra.mxu0 0
        %1951 = vmatprep.subr.bf16.mxu0 0
        %1952 = vmatpush1.bf16.msra.mxu0 0
        %1953 = vmatprep.subr.bf16.mxu0 0
        %1954 = vmatpush1.bf16.msra.mxu0 0
        %1955 = vmatprep.subr.bf16.mxu0 0
        %1956 = vmatpush1.bf16.msra.mxu0 0
        %1957 = vmatprep.mubr.bf16.mxu0 0
        %1958 = vmatmul.mubr.bf16.gmra.mrb[0].mxu0 %v1923
        %v1959 = vpop.f32.mrb[0].mxu0
        %v1960 = vadd.f32 0.0, %v1959
        %v1961 = vpop.f32.mrb[0].mxu0
        %v1962 = vpop.f32.mrb[0].mxu0
        %v1963 = vadd.f32 0.0, %v1962
        %v1964 = vpop.f32.mrb[0].mxu0
        %1965 = vdwg.mxu0
        %v1967 = vsel %vm931, %v1921, 0
        %1969 = vmatprep.subr.bf16.mxu0 0
        %1970 = vmatpush1.bf16.msra.mxu0 %v834
        %1971 = vmatprep.subr.bf16.mxu0 0
        %1972 = vmatpush1.bf16.msra.mxu0 0
        %1973 = vmatprep.subr.bf16.mxu0 0
        %1974 = vmatpush1.bf16.msra.mxu0 0
        %1975 = vmatprep.subr.bf16.mxu0 0
        %1976 = vmatpush1.bf16.msra.mxu0 0
        %1977 = vmatprep.subr.bf16.mxu0 0
        %1978 = vmatpush1.bf16.msra.mxu0 0
        %1979 = vmatprep.subr.bf16.mxu0 0
        %1980 = vmatpush1.bf16.msra.mxu0 0
        %1981 = vmatprep.subr.bf16.mxu0 0
        %1982 = vmatpush1.bf16.msra.mxu0 0
        %1983 = vmatprep.subr.bf16.mxu0 0
        %1984 = vmatpush1.bf16.msra.mxu0 0
        %1985 = vmatprep.subr.bf16.mxu0 0
        %1986 = vmatpush1.bf16.msra.mxu0 0
        %1987 = vmatprep.subr.bf16.mxu0 0
        %1988 = vmatpush1.bf16.msra.mxu0 0
        %1989 = vmatprep.subr.bf16.mxu0 0
        %1990 = vmatpush1.bf16.msra.mxu0 0
        %1991 = vmatprep.subr.bf16.mxu0 0
        %1992 = vmatpush1.bf16.msra.mxu0 0
        %1993 = vmatprep.subr.bf16.mxu0 0
        %1994 = vmatpush1.bf16.msra.mxu0 0
        %1995 = vmatprep.subr.bf16.mxu0 0
        %1996 = vmatpush1.bf16.msra.mxu0 0
        %1997 = vmatprep.subr.bf16.mxu0 0
        %1998 = vmatpush1.bf16.msra.mxu0 0
        %1999 = vmatprep.subr.bf16.mxu0 0
        %2000 = vmatpush1.bf16.msra.mxu0 0
        %2001 = vmatprep.mubr.bf16.mxu0 0
        %2002 = vmatmul.mubr.bf16.gmra.mrb[0].mxu0 %v1967
        %v2003 = vpop.f32.mrb[0].mxu0
        %v2004 = vadd.f32 0.0, %v2003
        %v2005 = vpop.f32.mrb[0].mxu0
        %v2006 = vpop.f32.mrb[0].mxu0
        %v2007 = vadd.f32 0.0, %v2006
        %v2008 = vpop.f32.mrb[0].mxu0
        %2009 = vdwg.mxu0
        %v2010 = vmul.f32 %v1960, %v1786
        %v2011 = vmul.f32 %v1963, %v1786
        %v2012 = vmul.f32 %v2004, %v1786
        %v2013 = vmul.f32 %v2007, %v1786
        %v2014 = vadd.f32 %v1778, %v2010
        %v2015 = vadd.f32 %v1779, %v2011
        %v2016 = vadd.f32 %v1780, %v2012
        %v2017 = vadd.f32 %v1781, %v2013
        %vm2018 = vcmp.ge.s32.totalorder %v836, 80
        %vm2019 = vcmp.lt.s32.totalorder %v836, 96
        %vm2020 = vmand %vm2018, %vm2019
        %v2021 = vsel %vm2020, 1, 0
        %v2022 = vcvt.s32.f32 %v2021
        %v2023 = vpack.c.bf16 %v2022, %v2022
        %v2024 = vmul.bf16 %v829, %v2023
        %v2025 = vmul.bf16 %v830, %v2023
        %2026 = vmatprep.subr.bf16.mxu0 0
        %2027 = vmatpush1.bf16.xpose.msra.mxu0 %v831
        %2028 = vmatprep.subr.bf16.mxu0 0
        %2029 = vmatpush1.bf16.xpose.msra.mxu0 0
        %2030 = vmatprep.subr.bf16.mxu0 0
        %2031 = vmatpush1.bf16.xpose.msra.mxu0 0
        %2032 = vmatprep.subr.bf16.mxu0 0
        %2033 = vmatpush1.bf16.xpose.msra.mxu0 0
        %2034 = vmatprep.subr.bf16.mxu0 0
        %2035 = vmatpush1.bf16.xpose.msra.mxu0 0
        %2036 = vmatprep.subr.bf16.mxu0 0
        %2037 = vmatpush1.bf16.xpose.msra.mxu0 0
        %2038 = vmatprep.subr.bf16.mxu0 0
        %2039 = vmatpush1.bf16.xpose.msra.mxu0 0
        %2040 = vmatprep.subr.bf16.mxu0 0
        %2041 = vmatpush1.bf16.xpose.msra.mxu0 0
        %2042 = vmatprep.subr.bf16.mxu0 0
        %2043 = vmatpush1.bf16.xpose.msra.mxu0 0
        %2044 = vmatprep.subr.bf16.mxu0 0
        %2045 = vmatpush1.bf16.xpose.msra.mxu0 0
        %2046 = vmatprep.subr.bf16.mxu0 0
        %2047 = vmatpush1.bf16.xpose.msra.mxu0 0
        %2048 = vmatprep.subr.bf16.mxu0 0
        %2049 = vmatpush1.bf16.xpose.msra.mxu0 0
        %2050 = vmatprep.subr.bf16.mxu0 0
        %2051 = vmatpush1.bf16.xpose.msra.mxu0 0
        %2052 = vmatprep.subr.bf16.mxu0 0
        %2053 = vmatpush1.bf16.xpose.msra.mxu0 0
        %2054 = vmatprep.subr.bf16.mxu0 0
        %2055 = vmatpush1.bf16.xpose.msra.mxu0 0
        %2056 = vmatprep.subr.bf16.mxu0 0
        %2057 = vmatpush1.bf16.xpose.msra.mxu0 0
        %2058 = vmatprep.mubr.bf16.mxu0 0
        %2059 = vmatmul.mubr.bf16.gmra.mrb[0].mxu0 %v2024
        %v2060 = vpop.f32.mrb[0].mxu0
        %v2061 = vadd.f32 0.0, %v2060
        %v2062 = vpop.f32.mrb[0].mxu0
        %v2063 = vpop.f32.mrb[0].mxu0
        %v2064 = vadd.f32 0.0, %v2063
        %v2065 = vpop.f32.mrb[0].mxu0
        %2066 = vdwg.mxu0
        %2067 = vmatprep.subr.bf16.mxu0 0
        %2068 = vmatpush1.bf16.xpose.msra.mxu0 %v832
        %2069 = vmatprep.subr.bf16.mxu0 0
        %2070 = vmatpush1.bf16.xpose.msra.mxu0 0
        %2071 = vmatprep.subr.bf16.mxu0 0
        %2072 = vmatpush1.bf16.xpose.msra.mxu0 0
        %2073 = vmatprep.subr.bf16.mxu0 0
        %2074 = vmatpush1.bf16.xpose.msra.mxu0 0
        %2075 = vmatprep.subr.bf16.mxu0 0
        %2076 = vmatpush1.bf16.xpose.msra.mxu0 0
        %2077 = vmatprep.subr.bf16.mxu0 0
        %2078 = vmatpush1.bf16.xpose.msra.mxu0 0
        %2079 = vmatprep.subr.bf16.mxu0 0
        %2080 = vmatpush1.bf16.xpose.msra.mxu0 0
        %2081 = vmatprep.subr.bf16.mxu0 0
        %2082 = vmatpush1.bf16.xpose.msra.mxu0 0
        %2083 = vmatprep.subr.bf16.mxu0 0
        %2084 = vmatpush1.bf16.xpose.msra.mxu0 0
        %2085 = vmatprep.subr.bf16.mxu0 0
        %2086 = vmatpush1.bf16.xpose.msra.mxu0 0
        %2087 = vmatprep.subr.bf16.mxu0 0
        %2088 = vmatpush1.bf16.xpose.msra.mxu0 0
        %2089 = vmatprep.subr.bf16.mxu0 0
        %2090 = vmatpush1.bf16.xpose.msra.mxu0 0
        %2091 = vmatprep.subr.bf16.mxu0 0
        %2092 = vmatpush1.bf16.xpose.msra.mxu0 0
        %2093 = vmatprep.subr.bf16.mxu0 0
        %2094 = vmatpush1.bf16.xpose.msra.mxu0 0
        %2095 = vmatprep.subr.bf16.mxu0 0
        %2096 = vmatpush1.bf16.xpose.msra.mxu0 0
        %2097 = vmatprep.subr.bf16.mxu0 0
        %2098 = vmatpush1.bf16.xpose.msra.mxu0 0
        %2099 = vmatprep.mubr.bf16.mxu0 0
        %2100 = vmatmul.mubr.bf16.gmra.mrb[0].mxu0 %v2025
        %v2101 = vpop.f32.mrb[0].mxu0
        %v2102 = vadd.f32 0.0, %v2101
        %v2103 = vpop.f32.mrb[0].mxu0
        %v2104 = vpop.f32.mrb[0].mxu0
        %v2105 = vadd.f32 0.0, %v2104
        %v2106 = vpop.f32.mrb[0].mxu0
        %2107 = vdwg.mxu0
        %v2108 = vmul.f32 %v2061, 0.25
        %v2109 = vmul.f32 %v2064, 0.25
        %v2110 = vmul.f32 %v2102, 0.25
        %v2111 = vmul.f32 %v2105, 0.25
        %v2112 = vsel %vm931, %v2108, -inf
        %2113 = vmax.xlane.f32.xlu0 %v2112
        %v2114 = vpop.xlane.xlu0 %2113
        %v2115 = vsel %vm931, %v2109, -inf
        %2116 = vmax.xlane.f32.xlu0 %v2115
        %v2117 = vpop.xlane.xlu0 %2116
        %v2118 = vsel %vm931, %v2110, -inf
        %2119 = vmax.xlane.f32.xlu0 %v2118
        %v2120 = vpop.xlane.xlu0 %2119
        %v2121 = vsel %vm931, %v2111, -inf
        %2122 = vmax.xlane.f32.xlu0 %v2121
        %v2123 = vpop.xlane.xlu0 %2122
        %v2124 = vsub.f32 %v2108, %v2114
        %v2125 = vsub.f32 %v2109, %v2117
        %v2126 = vsub.f32 %v2110, %v2120
        %v2127 = vsub.f32 %v2111, %v2123
        %v2128 = vmul.f32 %v2124, 1.442695
        %v2129 = vpow.pop %v2128
        %v2130 = vmul.f32 %v2125, 1.442695
        %v2131 = vpow.pop %v2130
        %v2132 = vmul.f32 %v2126, 1.442695
        %v2133 = vpow.pop %v2132
        %v2134 = vmul.f32 %v2127, 1.442695
        %v2135 = vpow.pop %v2134
        %v2136 = vsel %vm931, %v2129, 0.0
        %2137 = vadd.xlane.f32.xlu0 %v2136
        %v2138 = vpop.xlane.xlu0 %2137
        %v2139 = vsel %vm931, %v2131, 0.0
        %2140 = vadd.xlane.f32.xlu0 %v2139
        %v2141 = vpop.xlane.xlu0 %2140
        %v2142 = vsel %vm931, %v2133, 0.0
        %2143 = vadd.xlane.f32.xlu0 %v2142
        %v2144 = vpop.xlane.xlu0 %2143
        %v2145 = vsel %vm931, %v2135, 0.0
        %2146 = vadd.xlane.f32.xlu0 %v2145
        %v2147 = vpop.xlane.xlu0 %2146
        %v2148 = vrcp.pop %v2138
        %v2149 = vrcp.pop %v2141
        %v2150 = vrcp.pop %v2144
        %v2151 = vrcp.pop %v2147
        %v2152 = vmul.f32 %v2129, %v2148
        %v2153 = vmul.f32 %v2131, %v2149
        %v2154 = vmul.f32 %v2133, %v2150
        %v2155 = vmul.f32 %v2135, %v2151
        %v2156 = vpack.c.bf16 %v2153, %v2152
        %v2157 = vpack.c.bf16 %v2155, %v2154
        %v2159 = vsel %vm931, %v2156, 0
        %2161 = vmatprep.subr.bf16.mxu0 0
        %2162 = vmatpush1.bf16.msra.mxu0 %v833
        %2163 = vmatprep.subr.bf16.mxu0 0
        %2164 = vmatpush1.bf16.msra.mxu0 0
        %2165 = vmatprep.subr.bf16.mxu0 0
        %2166 = vmatpush1.bf16.msra.mxu0 0
        %2167 = vmatprep.subr.bf16.mxu0 0
        %2168 = vmatpush1.bf16.msra.mxu0 0
        %2169 = vmatprep.subr.bf16.mxu0 0
        %2170 = vmatpush1.bf16.msra.mxu0 0
        %2171 = vmatprep.subr.bf16.mxu0 0
        %2172 = vmatpush1.bf16.msra.mxu0 0
        %2173 = vmatprep.subr.bf16.mxu0 0
        %2174 = vmatpush1.bf16.msra.mxu0 0
        %2175 = vmatprep.subr.bf16.mxu0 0
        %2176 = vmatpush1.bf16.msra.mxu0 0
        %2177 = vmatprep.subr.bf16.mxu0 0
        %2178 = vmatpush1.bf16.msra.mxu0 0
        %2179 = vmatprep.subr.bf16.mxu0 0
        %2180 = vmatpush1.bf16.msra.mxu0 0
        %2181 = vmatprep.subr.bf16.mxu0 0
        %2182 = vmatpush1.bf16.msra.mxu0 0
        %2183 = vmatprep.subr.bf16.mxu0 0
        %2184 = vmatpush1.bf16.msra.mxu0 0
        %2185 = vmatprep.subr.bf16.mxu0 0
        %2186 = vmatpush1.bf16.msra.mxu0 0
        %2187 = vmatprep.subr.bf16.mxu0 0
        %2188 = vmatpush1.bf16.msra.mxu0 0
        %2189 = vmatprep.subr.bf16.mxu0 0
        %2190 = vmatpush1.bf16.msra.mxu0 0
        %2191 = vmatprep.subr.bf16.mxu0 0
        %2192 = vmatpush1.bf16.msra.mxu0 0
        %2193 = vmatprep.mubr.bf16.mxu0 0
        %2194 = vmatmul.mubr.bf16.gmra.mrb[0].mxu0 %v2159
        %v2195 = vpop.f32.mrb[0].mxu0
        %v2196 = vadd.f32 0.0, %v2195
        %v2197 = vpop.f32.mrb[0].mxu0
        %v2198 = vpop.f32.mrb[0].mxu0
        %v2199 = vadd.f32 0.0, %v2198
        %v2200 = vpop.f32.mrb[0].mxu0
        %2201 = vdwg.mxu0
        %v2203 = vsel %vm931, %v2157, 0
        %2205 = vmatprep.subr.bf16.mxu0 0
        %2206 = vmatpush1.bf16.msra.mxu0 %v834
        %2207 = vmatprep.subr.bf16.mxu0 0
        %2208 = vmatpush1.bf16.msra.mxu0 0
        %2209 = vmatprep.subr.bf16.mxu0 0
        %2210 = vmatpush1.bf16.msra.mxu0 0
        %2211 = vmatprep.subr.bf16.mxu0 0
        %2212 = vmatpush1.bf16.msra.mxu0 0
        %2213 = vmatprep.subr.bf16.mxu0 0
        %2214 = vmatpush1.bf16.msra.mxu0 0
        %2215 = vmatprep.subr.bf16.mxu0 0
        %2216 = vmatpush1.bf16.msra.mxu0 0
        %2217 = vmatprep.subr.bf16.mxu0 0
        %2218 = vmatpush1.bf16.msra.mxu0 0
        %2219 = vmatprep.subr.bf16.mxu0 0
        %2220 = vmatpush1.bf16.msra.mxu0 0
        %2221 = vmatprep.subr.bf16.mxu0 0
        %2222 = vmatpush1.bf16.msra.mxu0 0
        %2223 = vmatprep.subr.bf16.mxu0 0
        %2224 = vmatpush1.bf16.msra.mxu0 0
        %2225 = vmatprep.subr.bf16.mxu0 0
        %2226 = vmatpush1.bf16.msra.mxu0 0
        %2227 = vmatprep.subr.bf16.mxu0 0
        %2228 = vmatpush1.bf16.msra.mxu0 0
        %2229 = vmatprep.subr.bf16.mxu0 0
        %2230 = vmatpush1.bf16.msra.mxu0 0
        %2231 = vmatprep.subr.bf16.mxu0 0
        %2232 = vmatpush1.bf16.msra.mxu0 0
        %2233 = vmatprep.subr.bf16.mxu0 0
        %2234 = vmatpush1.bf16.msra.mxu0 0
        %2235 = vmatprep.subr.bf16.mxu0 0
        %2236 = vmatpush1.bf16.msra.mxu0 0
        %2237 = vmatprep.mubr.bf16.mxu0 0
        %2238 = vmatmul.mubr.bf16.gmra.mrb[0].mxu0 %v2203
        %v2239 = vpop.f32.mrb[0].mxu0
        %v2240 = vadd.f32 0.0, %v2239
        %v2241 = vpop.f32.mrb[0].mxu0
        %v2242 = vpop.f32.mrb[0].mxu0
        %v2243 = vadd.f32 0.0, %v2242
        %v2244 = vpop.f32.mrb[0].mxu0
        %2245 = vdwg.mxu0
        %v2246 = vmul.f32 %v2196, %v2022
        %v2247 = vmul.f32 %v2199, %v2022
        %v2248 = vmul.f32 %v2240, %v2022
        %v2249 = vmul.f32 %v2243, %v2022
        %v2250 = vadd.f32 %v2014, %v2246
        %v2251 = vadd.f32 %v2015, %v2247
        %v2252 = vadd.f32 %v2016, %v2248
        %v2253 = vadd.f32 %v2017, %v2249
        %vm2254 = vcmp.ge.s32.totalorder %v836, 96
        %vm2255 = vcmp.lt.s32.totalorder %v836, 112
        %vm2256 = vmand %vm2254, %vm2255
        %v2257 = vsel %vm2256, 1, 0
        %v2258 = vcvt.s32.f32 %v2257
        %v2259 = vpack.c.bf16 %v2258, %v2258
        %v2260 = vmul.bf16 %v829, %v2259
        %v2261 = vmul.bf16 %v830, %v2259
        %2262 = vmatprep.subr.bf16.mxu0 0
        %2263 = vmatpush1.bf16.xpose.msra.mxu0 %v831
        %2264 = vmatprep.subr.bf16.mxu0 0
        %2265 = vmatpush1.bf16.xpose.msra.mxu0 0
        %2266 = vmatprep.subr.bf16.mxu0 0
        %2267 = vmatpush1.bf16.xpose.msra.mxu0 0
        %2268 = vmatprep.subr.bf16.mxu0 0
        %2269 = vmatpush1.bf16.xpose.msra.mxu0 0
        %2270 = vmatprep.subr.bf16.mxu0 0
        %2271 = vmatpush1.bf16.xpose.msra.mxu0 0
        %2272 = vmatprep.subr.bf16.mxu0 0
        %2273 = vmatpush1.bf16.xpose.msra.mxu0 0
        %2274 = vmatprep.subr.bf16.mxu0 0
        %2275 = vmatpush1.bf16.xpose.msra.mxu0 0
        %2276 = vmatprep.subr.bf16.mxu0 0
        %2277 = vmatpush1.bf16.xpose.msra.mxu0 0
        %2278 = vmatprep.subr.bf16.mxu0 0
        %2279 = vmatpush1.bf16.xpose.msra.mxu0 0
        %2280 = vmatprep.subr.bf16.mxu0 0
        %2281 = vmatpush1.bf16.xpose.msra.mxu0 0
        %2282 = vmatprep.subr.bf16.mxu0 0
        %2283 = vmatpush1.bf16.xpose.msra.mxu0 0
        %2284 = vmatprep.subr.bf16.mxu0 0
        %2285 = vmatpush1.bf16.xpose.msra.mxu0 0
        %2286 = vmatprep.subr.bf16.mxu0 0
        %2287 = vmatpush1.bf16.xpose.msra.mxu0 0
        %2288 = vmatprep.subr.bf16.mxu0 0
        %2289 = vmatpush1.bf16.xpose.msra.mxu0 0
        %2290 = vmatprep.subr.bf16.mxu0 0
        %2291 = vmatpush1.bf16.xpose.msra.mxu0 0
        %2292 = vmatprep.subr.bf16.mxu0 0
        %2293 = vmatpush1.bf16.xpose.msra.mxu0 0
        %2294 = vmatprep.mubr.bf16.mxu0 0
        %2295 = vmatmul.mubr.bf16.gmra.mrb[0].mxu0 %v2260
        %v2296 = vpop.f32.mrb[0].mxu0
        %v2297 = vadd.f32 0.0, %v2296
        %v2298 = vpop.f32.mrb[0].mxu0
        %v2299 = vpop.f32.mrb[0].mxu0
        %v2300 = vadd.f32 0.0, %v2299
        %v2301 = vpop.f32.mrb[0].mxu0
        %2302 = vdwg.mxu0
        %2303 = vmatprep.subr.bf16.mxu0 0
        %2304 = vmatpush1.bf16.xpose.msra.mxu0 %v832
        %2305 = vmatprep.subr.bf16.mxu0 0
        %2306 = vmatpush1.bf16.xpose.msra.mxu0 0
        %2307 = vmatprep.subr.bf16.mxu0 0
        %2308 = vmatpush1.bf16.xpose.msra.mxu0 0
        %2309 = vmatprep.subr.bf16.mxu0 0
        %2310 = vmatpush1.bf16.xpose.msra.mxu0 0
        %2311 = vmatprep.subr.bf16.mxu0 0
        %2312 = vmatpush1.bf16.xpose.msra.mxu0 0
        %2313 = vmatprep.subr.bf16.mxu0 0
        %2314 = vmatpush1.bf16.xpose.msra.mxu0 0
        %2315 = vmatprep.subr.bf16.mxu0 0
        %2316 = vmatpush1.bf16.xpose.msra.mxu0 0
        %2317 = vmatprep.subr.bf16.mxu0 0
        %2318 = vmatpush1.bf16.xpose.msra.mxu0 0
        %2319 = vmatprep.subr.bf16.mxu0 0
        %2320 = vmatpush1.bf16.xpose.msra.mxu0 0
        %2321 = vmatprep.subr.bf16.mxu0 0
        %2322 = vmatpush1.bf16.xpose.msra.mxu0 0
        %2323 = vmatprep.subr.bf16.mxu0 0
        %2324 = vmatpush1.bf16.xpose.msra.mxu0 0
        %2325 = vmatprep.subr.bf16.mxu0 0
        %2326 = vmatpush1.bf16.xpose.msra.mxu0 0
        %2327 = vmatprep.subr.bf16.mxu0 0
        %2328 = vmatpush1.bf16.xpose.msra.mxu0 0
        %2329 = vmatprep.subr.bf16.mxu0 0
        %2330 = vmatpush1.bf16.xpose.msra.mxu0 0
        %2331 = vmatprep.subr.bf16.mxu0 0
        %2332 = vmatpush1.bf16.xpose.msra.mxu0 0
        %2333 = vmatprep.subr.bf16.mxu0 0
        %2334 = vmatpush1.bf16.xpose.msra.mxu0 0
        %2335 = vmatprep.mubr.bf16.mxu0 0
        %2336 = vmatmul.mubr.bf16.gmra.mrb[0].mxu0 %v2261
        %v2337 = vpop.f32.mrb[0].mxu0
        %v2338 = vadd.f32 0.0, %v2337
        %v2339 = vpop.f32.mrb[0].mxu0
        %v2340 = vpop.f32.mrb[0].mxu0
        %v2341 = vadd.f32 0.0, %v2340
        %v2342 = vpop.f32.mrb[0].mxu0
        %2343 = vdwg.mxu0
        %v2344 = vmul.f32 %v2297, 0.25
        %v2345 = vmul.f32 %v2300, 0.25
        %v2346 = vmul.f32 %v2338, 0.25
        %v2347 = vmul.f32 %v2341, 0.25
        %v2348 = vsel %vm931, %v2344, -inf
        %2349 = vmax.xlane.f32.xlu0 %v2348
        %v2350 = vpop.xlane.xlu0 %2349
        %v2351 = vsel %vm931, %v2345, -inf
        %2352 = vmax.xlane.f32.xlu0 %v2351
        %v2353 = vpop.xlane.xlu0 %2352
        %v2354 = vsel %vm931, %v2346, -inf
        %2355 = vmax.xlane.f32.xlu0 %v2354
        %v2356 = vpop.xlane.xlu0 %2355
        %v2357 = vsel %vm931, %v2347, -inf
        %2358 = vmax.xlane.f32.xlu0 %v2357
        %v2359 = vpop.xlane.xlu0 %2358
        %v2360 = vsub.f32 %v2344, %v2350
        %v2361 = vsub.f32 %v2345, %v2353
        %v2362 = vsub.f32 %v2346, %v2356
        %v2363 = vsub.f32 %v2347, %v2359
        %v2364 = vmul.f32 %v2360, 1.442695
        %v2365 = vpow.pop %v2364
        %v2366 = vmul.f32 %v2361, 1.442695
        %v2367 = vpow.pop %v2366
        %v2368 = vmul.f32 %v2362, 1.442695
        %v2369 = vpow.pop %v2368
        %v2370 = vmul.f32 %v2363, 1.442695
        %v2371 = vpow.pop %v2370
        %v2372 = vsel %vm931, %v2365, 0.0
        %2373 = vadd.xlane.f32.xlu0 %v2372
        %v2374 = vpop.xlane.xlu0 %2373
        %v2375 = vsel %vm931, %v2367, 0.0
        %2376 = vadd.xlane.f32.xlu0 %v2375
        %v2377 = vpop.xlane.xlu0 %2376
        %v2378 = vsel %vm931, %v2369, 0.0
        %2379 = vadd.xlane.f32.xlu0 %v2378
        %v2380 = vpop.xlane.xlu0 %2379
        %v2381 = vsel %vm931, %v2371, 0.0
        %2382 = vadd.xlane.f32.xlu0 %v2381
        %v2383 = vpop.xlane.xlu0 %2382
        %v2384 = vrcp.pop %v2374
        %v2385 = vrcp.pop %v2377
        %v2386 = vrcp.pop %v2380
        %v2387 = vrcp.pop %v2383
        %v2388 = vmul.f32 %v2365, %v2384
        %v2389 = vmul.f32 %v2367, %v2385
        %v2390 = vmul.f32 %v2369, %v2386
        %v2391 = vmul.f32 %v2371, %v2387
        %v2392 = vpack.c.bf16 %v2389, %v2388
        %v2393 = vpack.c.bf16 %v2391, %v2390
        %v2395 = vsel %vm931, %v2392, 0
        %2397 = vmatprep.subr.bf16.mxu0 0
        %2398 = vmatpush1.bf16.msra.mxu0 %v833
        %2399 = vmatprep.subr.bf16.mxu0 0
        %2400 = vmatpush1.bf16.msra.mxu0 0
        %2401 = vmatprep.subr.bf16.mxu0 0
        %2402 = vmatpush1.bf16.msra.mxu0 0
        %2403 = vmatprep.subr.bf16.mxu0 0
        %2404 = vmatpush1.bf16.msra.mxu0 0
        %2405 = vmatprep.subr.bf16.mxu0 0
        %2406 = vmatpush1.bf16.msra.mxu0 0
        %2407 = vmatprep.subr.bf16.mxu0 0
        %2408 = vmatpush1.bf16.msra.mxu0 0
        %2409 = vmatprep.subr.bf16.mxu0 0
        %2410 = vmatpush1.bf16.msra.mxu0 0
        %2411 = vmatprep.subr.bf16.mxu0 0
        %2412 = vmatpush1.bf16.msra.mxu0 0
        %2413 = vmatprep.subr.bf16.mxu0 0
        %2414 = vmatpush1.bf16.msra.mxu0 0
        %2415 = vmatprep.subr.bf16.mxu0 0
        %2416 = vmatpush1.bf16.msra.mxu0 0
        %2417 = vmatprep.subr.bf16.mxu0 0
        %2418 = vmatpush1.bf16.msra.mxu0 0
        %2419 = vmatprep.subr.bf16.mxu0 0
        %2420 = vmatpush1.bf16.msra.mxu0 0
        %2421 = vmatprep.subr.bf16.mxu0 0
        %2422 = vmatpush1.bf16.msra.mxu0 0
        %2423 = vmatprep.subr.bf16.mxu0 0
        %2424 = vmatpush1.bf16.msra.mxu0 0
        %2425 = vmatprep.subr.bf16.mxu0 0
        %2426 = vmatpush1.bf16.msra.mxu0 0
        %2427 = vmatprep.subr.bf16.mxu0 0
        %2428 = vmatpush1.bf16.msra.mxu0 0
        %2429 = vmatprep.mubr.bf16.mxu0 0
        %2430 = vmatmul.mubr.bf16.gmra.mrb[0].mxu0 %v2395
        %v2431 = vpop.f32.mrb[0].mxu0
        %v2432 = vadd.f32 0.0, %v2431
        %v2433 = vpop.f32.mrb[0].mxu0
        %v2434 = vpop.f32.mrb[0].mxu0
        %v2435 = vadd.f32 0.0, %v2434
        %v2436 = vpop.f32.mrb[0].mxu0
        %2437 = vdwg.mxu0
        %v2439 = vsel %vm931, %v2393, 0
        %2441 = vmatprep.subr.bf16.mxu0 0
        %2442 = vmatpush1.bf16.msra.mxu0 %v834
        %2443 = vmatprep.subr.bf16.mxu0 0
        %2444 = vmatpush1.bf16.msra.mxu0 0
        %2445 = vmatprep.subr.bf16.mxu0 0
        %2446 = vmatpush1.bf16.msra.mxu0 0
        %2447 = vmatprep.subr.bf16.mxu0 0
        %2448 = vmatpush1.bf16.msra.mxu0 0
        %2449 = vmatprep.subr.bf16.mxu0 0
        %2450 = vmatpush1.bf16.msra.mxu0 0
        %2451 = vmatprep.subr.bf16.mxu0 0
        %2452 = vmatpush1.bf16.msra.mxu0 0
        %2453 = vmatprep.subr.bf16.mxu0 0
        %2454 = vmatpush1.bf16.msra.mxu0 0
        %2455 = vmatprep.subr.bf16.mxu0 0
        %2456 = vmatpush1.bf16.msra.mxu0 0
        %2457 = vmatprep.subr.bf16.mxu0 0
        %2458 = vmatpush1.bf16.msra.mxu0 0
        %2459 = vmatprep.subr.bf16.mxu0 0
        %2460 = vmatpush1.bf16.msra.mxu0 0
        %2461 = vmatprep.subr.bf16.mxu0 0
        %2462 = vmatpush1.bf16.msra.mxu0 0
        %2463 = vmatprep.subr.bf16.mxu0 0
        %2464 = vmatpush1.bf16.msra.mxu0 0
        %2465 = vmatprep.subr.bf16.mxu0 0
        %2466 = vmatpush1.bf16.msra.mxu0 0
        %2467 = vmatprep.subr.bf16.mxu0 0
        %2468 = vmatpush1.bf16.msra.mxu0 0
        %2469 = vmatprep.subr.bf16.mxu0 0
        %2470 = vmatpush1.bf16.msra.mxu0 0
        %2471 = vmatprep.subr.bf16.mxu0 0
        %2472 = vmatpush1.bf16.msra.mxu0 0
        %2473 = vmatprep.mubr.bf16.mxu0 0
        %2474 = vmatmul.mubr.bf16.gmra.mrb[0].mxu0 %v2439
        %v2475 = vpop.f32.mrb[0].mxu0
        %v2476 = vadd.f32 0.0, %v2475
        %v2477 = vpop.f32.mrb[0].mxu0
        %v2478 = vpop.f32.mrb[0].mxu0
        %v2479 = vadd.f32 0.0, %v2478
        %v2480 = vpop.f32.mrb[0].mxu0
        %2481 = vdwg.mxu0
        %v2482 = vmul.f32 %v2432, %v2258
        %v2483 = vmul.f32 %v2435, %v2258
        %v2484 = vmul.f32 %v2476, %v2258
        %v2485 = vmul.f32 %v2479, %v2258
        %v2486 = vadd.f32 %v2250, %v2482
        %v2487 = vadd.f32 %v2251, %v2483
        %v2488 = vadd.f32 %v2252, %v2484
        %v2489 = vadd.f32 %v2253, %v2485
        %vm2490 = vcmp.ge.s32.totalorder %v836, 112
        %vm2491 = vcmp.lt.s32.totalorder %v836, 128
        %vm2492 = vmand %vm2490, %vm2491
        %v2493 = vsel %vm2492, 1, 0
        %v2494 = vcvt.s32.f32 %v2493
        %v2495 = vpack.c.bf16 %v2494, %v2494
        %v2496 = vmul.bf16 %v829, %v2495
        %v2497 = vmul.bf16 %v830, %v2495
        %2498 = vmatprep.subr.bf16.mxu0 0
        %2499 = vmatpush1.bf16.xpose.msra.mxu0 %v831
        %2500 = vmatprep.subr.bf16.mxu0 0
        %2501 = vmatpush1.bf16.xpose.msra.mxu0 0
        %2502 = vmatprep.subr.bf16.mxu0 0
        %2503 = vmatpush1.bf16.xpose.msra.mxu0 0
        %2504 = vmatprep.subr.bf16.mxu0 0
        %2505 = vmatpush1.bf16.xpose.msra.mxu0 0
        %2506 = vmatprep.subr.bf16.mxu0 0
        %2507 = vmatpush1.bf16.xpose.msra.mxu0 0
        %2508 = vmatprep.subr.bf16.mxu0 0
        %2509 = vmatpush1.bf16.xpose.msra.mxu0 0
        %2510 = vmatprep.subr.bf16.mxu0 0
        %2511 = vmatpush1.bf16.xpose.msra.mxu0 0
        %2512 = vmatprep.subr.bf16.mxu0 0
        %2513 = vmatpush1.bf16.xpose.msra.mxu0 0
        %2514 = vmatprep.subr.bf16.mxu0 0
        %2515 = vmatpush1.bf16.xpose.msra.mxu0 0
        %2516 = vmatprep.subr.bf16.mxu0 0
        %2517 = vmatpush1.bf16.xpose.msra.mxu0 0
        %2518 = vmatprep.subr.bf16.mxu0 0
        %2519 = vmatpush1.bf16.xpose.msra.mxu0 0
        %2520 = vmatprep.subr.bf16.mxu0 0
        %2521 = vmatpush1.bf16.xpose.msra.mxu0 0
        %2522 = vmatprep.subr.bf16.mxu0 0
        %2523 = vmatpush1.bf16.xpose.msra.mxu0 0
        %2524 = vmatprep.subr.bf16.mxu0 0
        %2525 = vmatpush1.bf16.xpose.msra.mxu0 0
        %2526 = vmatprep.subr.bf16.mxu0 0
        %2527 = vmatpush1.bf16.xpose.msra.mxu0 0
        %2528 = vmatprep.subr.bf16.mxu0 0
        %2529 = vmatpush1.bf16.xpose.msra.mxu0 0
        %2530 = vmatprep.mubr.bf16.mxu0 0
        %2531 = vmatmul.mubr.bf16.gmra.mrb[0].mxu0 %v2496
        %v2532 = vpop.f32.mrb[0].mxu0
        %v2533 = vadd.f32 0.0, %v2532
        %v2534 = vpop.f32.mrb[0].mxu0
        %v2535 = vpop.f32.mrb[0].mxu0
        %v2536 = vadd.f32 0.0, %v2535
        %v2537 = vpop.f32.mrb[0].mxu0
        %2538 = vdwg.mxu0
        %2539 = vmatprep.subr.bf16.mxu0 0
        %2540 = vmatpush1.bf16.xpose.msra.mxu0 %v832
        %2541 = vmatprep.subr.bf16.mxu0 0
        %2542 = vmatpush1.bf16.xpose.msra.mxu0 0
        %2543 = vmatprep.subr.bf16.mxu0 0
        %2544 = vmatpush1.bf16.xpose.msra.mxu0 0
        %2545 = vmatprep.subr.bf16.mxu0 0
        %2546 = vmatpush1.bf16.xpose.msra.mxu0 0
        %2547 = vmatprep.subr.bf16.mxu0 0
        %2548 = vmatpush1.bf16.xpose.msra.mxu0 0
        %2549 = vmatprep.subr.bf16.mxu0 0
        %2550 = vmatpush1.bf16.xpose.msra.mxu0 0
        %2551 = vmatprep.subr.bf16.mxu0 0
        %2552 = vmatpush1.bf16.xpose.msra.mxu0 0
        %2553 = vmatprep.subr.bf16.mxu0 0
        %2554 = vmatpush1.bf16.xpose.msra.mxu0 0
        %2555 = vmatprep.subr.bf16.mxu0 0
        %2556 = vmatpush1.bf16.xpose.msra.mxu0 0
        %2557 = vmatprep.subr.bf16.mxu0 0
        %2558 = vmatpush1.bf16.xpose.msra.mxu0 0
        %2559 = vmatprep.subr.bf16.mxu0 0
        %2560 = vmatpush1.bf16.xpose.msra.mxu0 0
        %2561 = vmatprep.subr.bf16.mxu0 0
        %2562 = vmatpush1.bf16.xpose.msra.mxu0 0
        %2563 = vmatprep.subr.bf16.mxu0 0
        %2564 = vmatpush1.bf16.xpose.msra.mxu0 0
        %2565 = vmatprep.subr.bf16.mxu0 0
        %2566 = vmatpush1.bf16.xpose.msra.mxu0 0
        %2567 = vmatprep.subr.bf16.mxu0 0
        %2568 = vmatpush1.bf16.xpose.msra.mxu0 0
        %2569 = vmatprep.subr.bf16.mxu0 0
        %2570 = vmatpush1.bf16.xpose.msra.mxu0 0
        %2571 = vmatprep.mubr.bf16.mxu0 0
        %2572 = vmatmul.mubr.bf16.gmra.mrb[0].mxu0 %v2497
        %v2573 = vpop.f32.mrb[0].mxu0
        %v2574 = vadd.f32 0.0, %v2573
        %v2575 = vpop.f32.mrb[0].mxu0
        %v2576 = vpop.f32.mrb[0].mxu0
        %v2577 = vadd.f32 0.0, %v2576
        %v2578 = vpop.f32.mrb[0].mxu0
        %2579 = vdwg.mxu0
        %v2580 = vmul.f32 %v2533, 0.25
        %v2581 = vmul.f32 %v2536, 0.25
        %v2582 = vmul.f32 %v2574, 0.25
        %v2583 = vmul.f32 %v2577, 0.25
        %v2584 = vsel %vm931, %v2580, -inf
        %2585 = vmax.xlane.f32.xlu0 %v2584
        %v2586 = vpop.xlane.xlu0 %2585
        %v2587 = vsel %vm931, %v2581, -inf
        %2588 = vmax.xlane.f32.xlu0 %v2587
        %v2589 = vpop.xlane.xlu0 %2588
        %v2590 = vsel %vm931, %v2582, -inf
        %2591 = vmax.xlane.f32.xlu0 %v2590
        %v2592 = vpop.xlane.xlu0 %2591
        %v2593 = vsel %vm931, %v2583, -inf
        %2594 = vmax.xlane.f32.xlu0 %v2593
        %v2595 = vpop.xlane.xlu0 %2594
        %v2596 = vsub.f32 %v2580, %v2586
        %v2597 = vsub.f32 %v2581, %v2589
        %v2598 = vsub.f32 %v2582, %v2592
        %v2599 = vsub.f32 %v2583, %v2595
        %v2600 = vmul.f32 %v2596, 1.442695
        %v2601 = vpow.pop %v2600
        %v2602 = vmul.f32 %v2597, 1.442695
        %v2603 = vpow.pop %v2602
        %v2604 = vmul.f32 %v2598, 1.442695
        %v2605 = vpow.pop %v2604
        %v2606 = vmul.f32 %v2599, 1.442695
        %v2607 = vpow.pop %v2606
        %v2608 = vsel %vm931, %v2601, 0.0
        %2609 = vadd.xlane.f32.xlu0 %v2608
        %v2610 = vpop.xlane.xlu0 %2609
        %v2611 = vsel %vm931, %v2603, 0.0
        %2612 = vadd.xlane.f32.xlu0 %v2611
        %v2613 = vpop.xlane.xlu0 %2612
        %v2614 = vsel %vm931, %v2605, 0.0
        %2615 = vadd.xlane.f32.xlu0 %v2614
        %v2616 = vpop.xlane.xlu0 %2615
        %v2617 = vsel %vm931, %v2607, 0.0
        %2618 = vadd.xlane.f32.xlu0 %v2617
        %v2619 = vpop.xlane.xlu0 %2618
        %v2620 = vrcp.pop %v2610
        %v2621 = vrcp.pop %v2613
        %v2622 = vrcp.pop %v2616
        %v2623 = vrcp.pop %v2619
        %v2624 = vmul.f32 %v2601, %v2620
        %v2625 = vmul.f32 %v2603, %v2621
        %v2626 = vmul.f32 %v2605, %v2622
        %v2627 = vmul.f32 %v2607, %v2623
        %v2628 = vpack.c.bf16 %v2625, %v2624
        %v2629 = vpack.c.bf16 %v2627, %v2626
        %v2631 = vsel %vm931, %v2628, 0
        %2633 = vmatprep.subr.bf16.mxu0 0
        %2634 = vmatpush1.bf16.msra.mxu0 %v833
        %2635 = vmatprep.subr.bf16.mxu0 0
        %2636 = vmatpush1.bf16.msra.mxu0 0
        %2637 = vmatprep.subr.bf16.mxu0 0
        %2638 = vmatpush1.bf16.msra.mxu0 0
        %2639 = vmatprep.subr.bf16.mxu0 0
        %2640 = vmatpush1.bf16.msra.mxu0 0
        %2641 = vmatprep.subr.bf16.mxu0 0
        %2642 = vmatpush1.bf16.msra.mxu0 0
        %2643 = vmatprep.subr.bf16.mxu0 0
        %2644 = vmatpush1.bf16.msra.mxu0 0
        %2645 = vmatprep.subr.bf16.mxu0 0
        %2646 = vmatpush1.bf16.msra.mxu0 0
        %2647 = vmatprep.subr.bf16.mxu0 0
        %2648 = vmatpush1.bf16.msra.mxu0 0
        %2649 = vmatprep.subr.bf16.mxu0 0
        %2650 = vmatpush1.bf16.msra.mxu0 0
        %2651 = vmatprep.subr.bf16.mxu0 0
        %2652 = vmatpush1.bf16.msra.mxu0 0
        %2653 = vmatprep.subr.bf16.mxu0 0
        %2654 = vmatpush1.bf16.msra.mxu0 0
        %2655 = vmatprep.subr.bf16.mxu0 0
        %2656 = vmatpush1.bf16.msra.mxu0 0
        %2657 = vmatprep.subr.bf16.mxu0 0
        %2658 = vmatpush1.bf16.msra.mxu0 0
        %2659 = vmatprep.subr.bf16.mxu0 0
        %2660 = vmatpush1.bf16.msra.mxu0 0
        %2661 = vmatprep.subr.bf16.mxu0 0
        %2662 = vmatpush1.bf16.msra.mxu0 0
        %2663 = vmatprep.subr.bf16.mxu0 0
        %2664 = vmatpush1.bf16.msra.mxu0 0
        %2665 = vmatprep.mubr.bf16.mxu0 0
        %2666 = vmatmul.mubr.bf16.gmra.mrb[0].mxu0 %v2631
        %v2667 = vpop.f32.mrb[0].mxu0
        %v2668 = vadd.f32 0.0, %v2667
        %v2669 = vpop.f32.mrb[0].mxu0
        %v2670 = vpop.f32.mrb[0].mxu0
        %v2671 = vadd.f32 0.0, %v2670
        %v2672 = vpop.f32.mrb[0].mxu0
        %2673 = vdwg.mxu0
        %v2675 = vsel %vm931, %v2629, 0
        %2677 = vmatprep.subr.bf16.mxu0 0
        %2678 = vmatpush1.bf16.msra.mxu0 %v834
        %2679 = vmatprep.subr.bf16.mxu0 0
        %2680 = vmatpush1.bf16.msra.mxu0 0
        %2681 = vmatprep.subr.bf16.mxu0 0
        %2682 = vmatpush1.bf16.msra.mxu0 0
        %2683 = vmatprep.subr.bf16.mxu0 0
        %2684 = vmatpush1.bf16.msra.mxu0 0
        %2685 = vmatprep.subr.bf16.mxu0 0
        %2686 = vmatpush1.bf16.msra.mxu0 0
        %2687 = vmatprep.subr.bf16.mxu0 0
        %2688 = vmatpush1.bf16.msra.mxu0 0
        %2689 = vmatprep.subr.bf16.mxu0 0
        %2690 = vmatpush1.bf16.msra.mxu0 0
        %2691 = vmatprep.subr.bf16.mxu0 0
        %2692 = vmatpush1.bf16.msra.mxu0 0
        %2693 = vmatprep.subr.bf16.mxu0 0
        %2694 = vmatpush1.bf16.msra.mxu0 0
        %2695 = vmatprep.subr.bf16.mxu0 0
        %2696 = vmatpush1.bf16.msra.mxu0 0
        %2697 = vmatprep.subr.bf16.mxu0 0
        %2698 = vmatpush1.bf16.msra.mxu0 0
        %2699 = vmatprep.subr.bf16.mxu0 0
        %2700 = vmatpush1.bf16.msra.mxu0 0
        %2701 = vmatprep.subr.bf16.mxu0 0
        %2702 = vmatpush1.bf16.msra.mxu0 0
        %2703 = vmatprep.subr.bf16.mxu0 0
        %2704 = vmatpush1.bf16.msra.mxu0 0
        %2705 = vmatprep.subr.bf16.mxu0 0
        %2706 = vmatpush1.bf16.msra.mxu0 0
        %2707 = vmatprep.subr.bf16.mxu0 0
        %2708 = vmatpush1.bf16.msra.mxu0 0
        %2709 = vmatprep.mubr.bf16.mxu0 0
        %2710 = vmatmul.mubr.bf16.gmra.mrb[0].mxu0 %v2675
        %v2711 = vpop.f32.mrb[0].mxu0
        %v2712 = vadd.f32 0.0, %v2711
        %v2713 = vpop.f32.mrb[0].mxu0
        %v2714 = vpop.f32.mrb[0].mxu0
        %v2715 = vadd.f32 0.0, %v2714
        %v2716 = vpop.f32.mrb[0].mxu0
        %2717 = vdwg.mxu0
        %v2718 = vmul.f32 %v2668, %v2494
        %v2719 = vmul.f32 %v2671, %v2494
        %v2720 = vmul.f32 %v2712, %v2494
        %v2721 = vmul.f32 %v2715, %v2494
        %v2722 = vadd.f32 %v2486, %v2718
        %v2723 = vadd.f32 %v2487, %v2719
        %v2724 = vadd.f32 %v2488, %v2720
        %v2725 = vadd.f32 %v2489, %v2721
        %v2726 = vpack.c.bf16 %v2723, %v2722
        %v2727 = vpack.c.bf16 %v2725, %v2724
        %v2728 = vld [vmem:[#allocation7] sm:$0xf]
        %v2729 = vld [vmem:[#allocation7 + $0x4] sm:$0xf]
        %v2730 = vld [vmem:[#allocation7 + $0x8] sm:$0xf]
        %v2731 = vld [vmem:[#allocation7 + $0xc] sm:$0xf]
        %v2732 = vld [vmem:[#allocation7 + $0x10] sm:$0xf]
        %v2733 = vld [vmem:[#allocation7 + $0x14] sm:$0xf]
        %v2734 = vld [vmem:[#allocation7 + $0x18] sm:$0xf]
        %v2735 = vld [vmem:[#allocation7 + $0x1c] sm:$0xf]
        %v2736 = vld [vmem:[#allocation7 + $0x20] sm:$0xf]
        %v2737 = vld [vmem:[#allocation7 + $0x24] sm:$0xf]
        %v2738 = vld [vmem:[#allocation7 + $0x28] sm:$0xf]
        %v2739 = vld [vmem:[#allocation7 + $0x2c] sm:$0xf]
        %v2740 = vld [vmem:[#allocation7 + $0x30] sm:$0xf]
        %v2741 = vld [vmem:[#allocation7 + $0x34] sm:$0xf]
        %v2742 = vld [vmem:[#allocation7 + $0x38] sm:$0xf]
        %v2743 = vld [vmem:[#allocation7 + $0x3c] sm:$0xf]
        %v2760 = vunpack.c.l.b16 %v2728
        %v2761 = vunpack.c.l.b16 %v2729
        %v2762 = vunpack.c.l.b16 %v2730
        %v2763 = vunpack.c.l.b16 %v2731
        %v2764 = vunpack.c.l.b16 %v2732
        %v2765 = vunpack.c.l.b16 %v2733
        %v2766 = vunpack.c.l.b16 %v2734
        %v2767 = vunpack.c.l.b16 %v2735
        %v2768 = vunpack.c.l.b16 %v2736
        %v2769 = vunpack.c.l.b16 %v2737
        %v2770 = vunpack.c.l.b16 %v2738
        %v2771 = vunpack.c.l.b16 %v2739
        %v2772 = vunpack.c.l.b16 %v2740
        %v2773 = vunpack.c.l.b16 %v2741
        %v2774 = vunpack.c.l.b16 %v2742
        %v2775 = vunpack.c.l.b16 %v2743
        %v2776 = vpack.c.b16 %v2761, %v2760
        %v2777 = vpack.c.b16 %v2763, %v2762
        %v2778 = vpack.c.b16 %v2765, %v2764
        %v2779 = vpack.c.b16 %v2767, %v2766
        %v2780 = vpack.c.b16 %v2769, %v2768
        %v2781 = vpack.c.b16 %v2771, %v2770
        %v2782 = vpack.c.b16 %v2773, %v2772
        %v2783 = vpack.c.b16 %v2775, %v2774
        %2792 = vmatprep.subr.bf16.mxu0 0
        %2793 = vmatpush1.bf16.msra.mxu0 %v2776
        %2794 = vmatprep.subr.bf16.mxu0 0
        %2795 = vmatpush1.bf16.msra.mxu0 %v2777
        %2796 = vmatprep.subr.bf16.mxu0 0
        %2797 = vmatpush1.bf16.msra.mxu0 %v2778
        %2798 = vmatprep.subr.bf16.mxu0 0
        %2799 = vmatpush1.bf16.msra.mxu0 %v2779
        %2800 = vmatprep.subr.bf16.mxu0 0
        %2801 = vmatpush1.bf16.msra.mxu0 %v2780
        %2802 = vmatprep.subr.bf16.mxu0 0
        %2803 = vmatpush1.bf16.msra.mxu0 %v2781
        %2804 = vmatprep.subr.bf16.mxu0 0
        %2805 = vmatpush1.bf16.msra.mxu0 %v2782
        %2806 = vmatprep.subr.bf16.mxu0 0
        %2807 = vmatpush1.bf16.msra.mxu0 %v2783
        %2808 = vmatprep.subr.bf16.mxu0 0
        %2809 = vmatpush1.bf16.msra.mxu0 0
        %2810 = vmatprep.subr.bf16.mxu0 0
        %2811 = vmatpush1.bf16.msra.mxu0 0
        %2812 = vmatprep.subr.bf16.mxu0 0
        %2813 = vmatpush1.bf16.msra.mxu0 0
        %2814 = vmatprep.subr.bf16.mxu0 0
        %2815 = vmatpush1.bf16.msra.mxu0 0
        %2816 = vmatprep.subr.bf16.mxu0 0
        %2817 = vmatpush1.bf16.msra.mxu0 0
        %2818 = vmatprep.subr.bf16.mxu0 0
        %2819 = vmatpush1.bf16.msra.mxu0 0
        %2820 = vmatprep.subr.bf16.mxu0 0
        %2821 = vmatpush1.bf16.msra.mxu0 0
        %2822 = vmatprep.subr.bf16.mxu0 0
        %2823 = vmatpush1.bf16.msra.mxu0 0
        %2824 = vmatprep.mubr.bf16.mxu0 0
        %2825 = vmatmul.mubr.bf16.gmra.mrb[0].mxu0 %v2726
        %v2826 = vpop.f32.mrb[0].mxu0
        %v2827 = vadd.f32 0.0, %v2826
        %v2828 = vpop.f32.mrb[0].mxu0
        %v2829 = vpop.f32.mrb[0].mxu0
        %v2830 = vadd.f32 0.0, %v2829
        %v2831 = vpop.f32.mrb[0].mxu0
        %2832 = vmatprep.mubr.bf16.mxu0 0
        %2833 = vmatmul.mubr.bf16.gmra.mrb[0].mxu0 %v2727
        %v2834 = vpop.f32.mrb[0].mxu0
        %v2835 = vadd.f32 0.0, %v2834
        %v2836 = vpop.f32.mrb[0].mxu0
        %v2837 = vpop.f32.mrb[0].mxu0
        %v2838 = vadd.f32 0.0, %v2837
        %v2839 = vpop.f32.mrb[0].mxu0
        %2840 = vdwg.mxu0
        %v2841 = vadd.f32 %v494, %v2827
        %v2842 = vadd.f32 %v495, %v2830
        %v2843 = vadd.f32 %v496, %v2835
        %v2844 = vadd.f32 %v497, %v2838
        %v2845 = vld [vmem:[%s5] sm:$0x1]
        %v2847 = vlaneseq
        %v2848 = vshrl.u32 %v2847, 7
        %v2849 = vsub.s32 0, %v2848
        %v2850 = vrot.slane %v2845, %v2849
        %v2852 = vadd.f32 %v2841, %v2850
        %v2853 = vadd.f32 %v2842, %v2850
        %v2854 = vadd.f32 %v2843, %v2850
        %v2855 = vadd.f32 %v2844, %v2850
        %v2856 = vld [vmem:[%s6] sm:$0x1]
        %v2857 = vld [vmem:[%s7] sm:$0x1]
        %2858 = vadd.xlane.f32.xlu0 %v2852
        %v2859 = vpop.xlane.xlu0 %2858
        %2860 = vadd.xlane.f32.xlu0 %v2853
        %v2861 = vpop.xlane.xlu0 %2860
        %2862 = vadd.xlane.f32.xlu0 %v2854
        %v2863 = vpop.xlane.xlu0 %2862
        %2864 = vadd.xlane.f32.xlu0 %v2855
        %v2865 = vpop.xlane.xlu0 %2864
        %v2866 = vmul.f32 %v2859, %v508
        %v2867 = vmul.f32 %v2861, %v508
        %v2868 = vmul.f32 %v2863, %v508
        %v2869 = vmul.f32 %v2865, %v508
        %v2870 = vsub.f32 %v2852, %v2866
        %v2871 = vsub.f32 %v2853, %v2867
        %v2872 = vsub.f32 %v2854, %v2868
        %v2873 = vsub.f32 %v2855, %v2869
        %v2874 = vmul.f32 %v2870, %v2870
        %v2875 = vmul.f32 %v2871, %v2871
        %v2876 = vmul.f32 %v2872, %v2872
        %v2877 = vmul.f32 %v2873, %v2873
        %2878 = vadd.xlane.f32.xlu0 %v2874
        %v2879 = vpop.xlane.xlu0 %2878
        %2880 = vadd.xlane.f32.xlu0 %v2875
        %v2881 = vpop.xlane.xlu0 %2880
        %2882 = vadd.xlane.f32.xlu0 %v2876
        %v2883 = vpop.xlane.xlu0 %2882
        %2884 = vadd.xlane.f32.xlu0 %v2877
        %v2885 = vpop.xlane.xlu0 %2884
        %v2886 = vmul.f32 %v2879, %v508
        %v2887 = vmul.f32 %v2881, %v508
        %v2888 = vmul.f32 %v2883, %v508
        %v2889 = vmul.f32 %v2885, %v508
        %v2890 = vadd.f32 %v2886, 1e-05
        %v2891 = vadd.f32 %v2887, 1e-05
        %v2892 = vadd.f32 %v2888, 1e-05
        %v2893 = vadd.f32 %v2889, 1e-05
        %v2894 = vrsqrt.pop %v2890
        %v2895 = vrsqrt.pop %v2891
        %v2896 = vrsqrt.pop %v2892
        %v2897 = vrsqrt.pop %v2893
        %v2898 = vmul.f32 %v2870, %v2894
        %v2899 = vmul.f32 %v2871, %v2895
        %v2900 = vmul.f32 %v2872, %v2896
        %v2901 = vmul.f32 %v2873, %v2897
        %v2903 = vlaneseq
        %v2904 = vshrl.u32 %v2903, 7
        %v2905 = vsub.s32 0, %v2904
        %v2906 = vrot.slane %v2856, %v2905
        %v2908 = vmul.f32 %v2898, %v2906
        %v2909 = vmul.f32 %v2899, %v2906
        %v2910 = vmul.f32 %v2900, %v2906
        %v2911 = vmul.f32 %v2901, %v2906
        %v2913 = vlaneseq
        %v2914 = vshrl.u32 %v2913, 7
        %v2915 = vsub.s32 0, %v2914
        %v2916 = vrot.slane %v2857, %v2915
        %v2918 = vadd.f32 %v2908, %v2916
        %v2919 = vadd.f32 %v2909, %v2916
        %v2920 = vadd.f32 %v2910, %v2916
        %v2921 = vadd.f32 %v2911, %v2916
        %v2922 = vpack.c.bf16 %v2919, %v2918
        %v2923 = vpack.c.bf16 %v2921, %v2920
        %v2924 = vld [vmem:[#allocation8] sm:$0xff]
        %v2925 = vld [vmem:[#allocation8 + $0x8] sm:$0xff]
        %v2926 = vld [vmem:[#allocation8 + $0x10] sm:$0xff]
        %v2927 = vld [vmem:[#allocation8 + $0x18] sm:$0xff]
        %v2928 = vld [vmem:[#allocation8 + $0x20] sm:$0xff]
        %v2929 = vld [vmem:[#allocation8 + $0x28] sm:$0xff]
        %v2930 = vld [vmem:[#allocation8 + $0x30] sm:$0xff]
        %v2931 = vld [vmem:[#allocation8 + $0x38] sm:$0xff]
        %v2932 = vld [vmem:[#allocation8 + $0x40] sm:$0xff]
        %v2933 = vld [vmem:[#allocation8 + $0x48] sm:$0xff]
        %v2934 = vld [vmem:[#allocation8 + $0x50] sm:$0xff]
        %v2935 = vld [vmem:[#allocation8 + $0x58] sm:$0xff]
        %v2936 = vld [vmem:[#allocation8 + $0x60] sm:$0xff]
        %v2937 = vld [vmem:[#allocation8 + $0x68] sm:$0xff]
        %v2938 = vld [vmem:[#allocation8 + $0x70] sm:$0xff]
        %v2939 = vld [vmem:[#allocation8 + $0x78] sm:$0xff]
        %v2940 = vld [vmem:[#allocation8 + $0x80] sm:$0xff]
        %v2941 = vld [vmem:[#allocation8 + $0x88] sm:$0xff]
        %v2942 = vld [vmem:[#allocation8 + $0x90] sm:$0xff]
        %v2943 = vld [vmem:[#allocation8 + $0x98] sm:$0xff]
        %v2944 = vld [vmem:[#allocation8 + $0xa0] sm:$0xff]
        %v2945 = vld [vmem:[#allocation8 + $0xa8] sm:$0xff]
        %v2946 = vld [vmem:[#allocation8 + $0xb0] sm:$0xff]
        %v2947 = vld [vmem:[#allocation8 + $0xb8] sm:$0xff]
        %v2948 = vld [vmem:[#allocation8 + $0xc0] sm:$0xff]
        %v2949 = vld [vmem:[#allocation8 + $0xc8] sm:$0xff]
        %v2950 = vld [vmem:[#allocation8 + $0xd0] sm:$0xff]
        %v2951 = vld [vmem:[#allocation8 + $0xd8] sm:$0xff]
        %v2952 = vld [vmem:[#allocation8 + $0xe0] sm:$0xff]
        %v2953 = vld [vmem:[#allocation8 + $0xe8] sm:$0xff]
        %v2954 = vld [vmem:[#allocation8 + $0xf0] sm:$0xff]
        %v2955 = vld [vmem:[#allocation8 + $0xf8] sm:$0xff]
        %v2956 = vld [vmem:[%s9] sm:$0xf]
        %v2958 = vlaneseq
        %v2959 = vshrl.u32 %v2958, 7
        %v2960 = vsub.s32 0, %v2959
        %v2961 = vrot.slane %v2956, %v2960
        %v2962 = vlaneseq
        %v2963 = vshrl.u32 %v2962, 7
        %v2964 = vsub.s32 1, %v2963
        %v2965 = vrot.slane %v2956, %v2964
        %v2966 = vlaneseq
        %v2967 = vshrl.u32 %v2966, 7
        %v2968 = vsub.s32 2, %v2967
        %v2969 = vrot.slane %v2956, %v2968
        %v2970 = vlaneseq
        %v2971 = vshrl.u32 %v2970, 7
        %v2972 = vsub.s32 3, %v2971
        %v2973 = vrot.slane %v2956, %v2972
        %v3010 = vunpack.c.l.b16 %v2924
        %v3011 = vunpack.c.h.b16 %v2924
        %v3012 = vunpack.c.l.b16 %v2925
        %v3013 = vunpack.c.h.b16 %v2925
        %v3014 = vunpack.c.l.b16 %v2926
        %v3015 = vunpack.c.h.b16 %v2926
        %v3016 = vunpack.c.l.b16 %v2927
        %v3017 = vunpack.c.h.b16 %v2927
        %v3018 = vunpack.c.l.b16 %v2928
        %v3019 = vunpack.c.h.b16 %v2928
        %v3020 = vunpack.c.l.b16 %v2929
        %v3021 = vunpack.c.h.b16 %v2929
        %v3022 = vunpack.c.l.b16 %v2930
        %v3023 = vunpack.c.h.b16 %v2930
        %v3024 = vunpack.c.l.b16 %v2931
        %v3025 = vunpack.c.h.b16 %v2931
        %v3026 = vunpack.c.l.b16 %v2932
        %v3027 = vunpack.c.h.b16 %v2932
        %v3028 = vunpack.c.l.b16 %v2933
        %v3029 = vunpack.c.h.b16 %v2933
        %v3030 = vunpack.c.l.b16 %v2934
        %v3031 = vunpack.c.h.b16 %v2934
        %v3032 = vunpack.c.l.b16 %v2935
        %v3033 = vunpack.c.h.b16 %v2935
        %v3034 = vunpack.c.l.b16 %v2936
        %v3035 = vunpack.c.h.b16 %v2936
        %v3036 = vunpack.c.l.b16 %v2937
        %v3037 = vunpack.c.h.b16 %v2937
        %v3038 = vunpack.c.l.b16 %v2938
        %v3039 = vunpack.c.h.b16 %v2938
        %v3040 = vunpack.c.l.b16 %v2939
        %v3041 = vunpack.c.h.b16 %v2939
        %v3042 = vunpack.c.l.b16 %v2940
        %v3043 = vunpack.c.h.b16 %v2940
        %v3044 = vunpack.c.l.b16 %v2941
        %v3045 = vunpack.c.h.b16 %v2941
        %v3046 = vunpack.c.l.b16 %v2942
        %v3047 = vunpack.c.h.b16 %v2942
        %v3048 = vunpack.c.l.b16 %v2943
        %v3049 = vunpack.c.h.b16 %v2943
        %v3050 = vunpack.c.l.b16 %v2944
        %v3051 = vunpack.c.h.b16 %v2944
        %v3052 = vunpack.c.l.b16 %v2945
        %v3053 = vunpack.c.h.b16 %v2945
        %v3054 = vunpack.c.l.b16 %v2946
        %v3055 = vunpack.c.h.b16 %v2946
        %v3056 = vunpack.c.l.b16 %v2947
        %v3057 = vunpack.c.h.b16 %v2947
        %v3058 = vunpack.c.l.b16 %v2948
        %v3059 = vunpack.c.h.b16 %v2948
        %v3060 = vunpack.c.l.b16 %v2949
        %v3061 = vunpack.c.h.b16 %v2949
        %v3062 = vunpack.c.l.b16 %v2950
        %v3063 = vunpack.c.h.b16 %v2950
        %v3064 = vunpack.c.l.b16 %v2951
        %v3065 = vunpack.c.h.b16 %v2951
        %v3066 = vunpack.c.l.b16 %v2952
        %v3067 = vunpack.c.h.b16 %v2952
        %v3068 = vunpack.c.l.b16 %v2953
        %v3069 = vunpack.c.h.b16 %v2953
        %v3070 = vunpack.c.l.b16 %v2954
        %v3071 = vunpack.c.h.b16 %v2954
        %v3072 = vunpack.c.l.b16 %v2955
        %v3073 = vunpack.c.h.b16 %v2955
        %v3074 = vpack.c.b16 %v3014, %v3010
        %v3075 = vpack.c.b16 %v3015, %v3011
        %v3076 = vpack.c.b16 %v3016, %v3012
        %v3077 = vpack.c.b16 %v3017, %v3013
        %v3078 = vpack.c.b16 %v3022, %v3018
        %v3079 = vpack.c.b16 %v3023, %v3019
        %v3080 = vpack.c.b16 %v3024, %v3020
        %v3081 = vpack.c.b16 %v3025, %v3021
        %v3082 = vpack.c.b16 %v3030, %v3026
        %v3083 = vpack.c.b16 %v3031, %v3027
        %v3084 = vpack.c.b16 %v3032, %v3028
        %v3085 = vpack.c.b16 %v3033, %v3029
        %v3086 = vpack.c.b16 %v3038, %v3034
        %v3087 = vpack.c.b16 %v3039, %v3035
        %v3088 = vpack.c.b16 %v3040, %v3036
        %v3089 = vpack.c.b16 %v3041, %v3037
        %v3090 = vpack.c.b16 %v3046, %v3042
        %v3091 = vpack.c.b16 %v3047, %v3043
        %v3092 = vpack.c.b16 %v3048, %v3044
        %v3093 = vpack.c.b16 %v3049, %v3045
        %v3094 = vpack.c.b16 %v3054, %v3050
        %v3095 = vpack.c.b16 %v3055, %v3051
        %v3096 = vpack.c.b16 %v3056, %v3052
        %v3097 = vpack.c.b16 %v3057, %v3053
        %v3098 = vpack.c.b16 %v3062, %v3058
        %v3099 = vpack.c.b16 %v3063, %v3059
        %v3100 = vpack.c.b16 %v3064, %v3060
        %v3101 = vpack.c.b16 %v3065, %v3061
        %v3102 = vpack.c.b16 %v3070, %v3066
        %v3103 = vpack.c.b16 %v3071, %v3067
        %v3104 = vpack.c.b16 %v3072, %v3068
        %v3105 = vpack.c.b16 %v3073, %v3069
        %3138 = vmatprep.subr.bf16.mxu0 %v3075
        %3139 = vmatpush1.bf16.msra.mxu0 %v3074
        %3140 = vmatprep.subr.bf16.mxu0 %v3079
        %3141 = vmatpush1.bf16.msra.mxu0 %v3078
        %3142 = vmatprep.subr.bf16.mxu0 %v3083
        %3143 = vmatpush1.bf16.msra.mxu0 %v3082
        %3144 = vmatprep.subr.bf16.mxu0 %v3087
        %3145 = vmatpush1.bf16.msra.mxu0 %v3086
        %3146 = vmatprep.subr.bf16.mxu0 %v3091
        %3147 = vmatpush1.bf16.msra.mxu0 %v3090
        %3148 = vmatprep.subr.bf16.mxu0 %v3095
        %3149 = vmatpush1.bf16.msra.mxu0 %v3094
        %3150 = vmatprep.subr.bf16.mxu0 %v3099
        %3151 = vmatpush1.bf16.msra.mxu0 %v3098
        %3152 = vmatprep.subr.bf16.mxu0 %v3103
        %3153 = vmatpush1.bf16.msra.mxu0 %v3102
        %3154 = vmatprep.subr.bf16.mxu0 0
        %3155 = vmatpush1.bf16.msra.mxu0 0
        %3156 = vmatprep.subr.bf16.mxu0 0
        %3157 = vmatpush1.bf16.msra.mxu0 0
        %3158 = vmatprep.subr.bf16.mxu0 0
        %3159 = vmatpush1.bf16.msra.mxu0 0
        %3160 = vmatprep.subr.bf16.mxu0 0
        %3161 = vmatpush1.bf16.msra.mxu0 0
        %3162 = vmatprep.subr.bf16.mxu0 0
        %3163 = vmatpush1.bf16.msra.mxu0 0
        %3164 = vmatprep.subr.bf16.mxu0 0
        %3165 = vmatpush1.bf16.msra.mxu0 0
        %3166 = vmatprep.subr.bf16.mxu0 0
        %3167 = vmatpush1.bf16.msra.mxu0 0
        %3168 = vmatprep.subr.bf16.mxu0 0
        %3169 = vmatpush1.bf16.msra.mxu0 0
        %3170 = vmatprep.mubr.bf16.mxu0 0
        %3171 = vmatmul.mubr.bf16.gmra.mrb[0].mxu0 %v2922
        %v3172 = vpop.f32.mrb[0].mxu0
        %v3173 = vadd.f32 %v2961, %v3172
        %v3174 = vpop.f32.mrb[0].mxu0
        %v3175 = vadd.f32 %v2965, %v3174
        %v3176 = vpop.f32.mrb[0].mxu0
        %v3177 = vadd.f32 %v2961, %v3176
        %v3178 = vpop.f32.mrb[0].mxu0
        %v3179 = vadd.f32 %v2965, %v3178
        %3180 = vmatprep.mubr.bf16.mxu0 0
        %3181 = vmatmul.mubr.bf16.gmra.mrb[0].mxu0 %v2923
        %v3182 = vpop.f32.mrb[0].mxu0
        %v3183 = vadd.f32 %v2961, %v3182
        %v3184 = vpop.f32.mrb[0].mxu0
        %v3185 = vadd.f32 %v2965, %v3184
        %v3186 = vpop.f32.mrb[0].mxu0
        %v3187 = vadd.f32 %v2961, %v3186
        %v3188 = vpop.f32.mrb[0].mxu0
        %v3189 = vadd.f32 %v2965, %v3188
        %3190 = vdwg.mxu0
        %3191 = vmatprep.subr.bf16.mxu0 %v3077
        %3192 = vmatpush1.bf16.msra.mxu0 %v3076
        %3193 = vmatprep.subr.bf16.mxu0 %v3081
        %3194 = vmatpush1.bf16.msra.mxu0 %v3080
        %3195 = vmatprep.subr.bf16.mxu0 %v3085
        %3196 = vmatpush1.bf16.msra.mxu0 %v3084
        %3197 = vmatprep.subr.bf16.mxu0 %v3089
        %3198 = vmatpush1.bf16.msra.mxu0 %v3088
        %3199 = vmatprep.subr.bf16.mxu0 %v3093
        %3200 = vmatpush1.bf16.msra.mxu0 %v3092
        %3201 = vmatprep.subr.bf16.mxu0 %v3097
        %3202 = vmatpush1.bf16.msra.mxu0 %v3096
        %3203 = vmatprep.subr.bf16.mxu0 %v3101
        %3204 = vmatpush1.bf16.msra.mxu0 %v3100
        %3205 = vmatprep.subr.bf16.mxu0 %v3105
        %3206 = vmatpush1.bf16.msra.mxu0 %v3104
        %3207 = vmatprep.subr.bf16.mxu0 0
        %3208 = vmatpush1.bf16.msra.mxu0 0
        %3209 = vmatprep.subr.bf16.mxu0 0
        %3210 = vmatpush1.bf16.msra.mxu0 0
        %3211 = vmatprep.subr.bf16.mxu0 0
        %3212 = vmatpush1.bf16.msra.mxu0 0
        %3213 = vmatprep.subr.bf16.mxu0 0
        %3214 = vmatpush1.bf16.msra.mxu0 0
        %3215 = vmatprep.subr.bf16.mxu0 0
        %3216 = vmatpush1.bf16.msra.mxu0 0
        %3217 = vmatprep.subr.bf16.mxu0 0
        %3218 = vmatpush1.bf16.msra.mxu0 0
        %3219 = vmatprep.subr.bf16.mxu0 0
        %3220 = vmatpush1.bf16.msra.mxu0 0
        %3221 = vmatprep.subr.bf16.mxu0 0
        %3222 = vmatpush1.bf16.msra.mxu0 0
        %3223 = vmatprep.mubr.bf16.mxu0 0
        %3224 = vmatmul.mubr.bf16.gmra.mrb[0].mxu0 %v2922
        %v3225 = vpop.f32.mrb[0].mxu0
        %v3226 = vadd.f32 %v2969, %v3225
        %v3227 = vpop.f32.mrb[0].mxu0
        %v3228 = vadd.f32 %v2973, %v3227
        %v3229 = vpop.f32.mrb[0].mxu0
        %v3230 = vadd.f32 %v2969, %v3229
        %v3231 = vpop.f32.mrb[0].mxu0
        %v3232 = vadd.f32 %v2973, %v3231
        %3233 = vmatprep.mubr.bf16.mxu0 0
        %3234 = vmatmul.mubr.bf16.gmra.mrb[0].mxu0 %v2923
        %v3235 = vpop.f32.mrb[0].mxu0
        %v3236 = vadd.f32 %v2969, %v3235
        %v3237 = vpop.f32.mrb[0].mxu0
        %v3238 = vadd.f32 %v2973, %v3237
        %v3239 = vpop.f32.mrb[0].mxu0
        %v3240 = vadd.f32 %v2969, %v3239
        %v3241 = vpop.f32.mrb[0].mxu0
        %v3242 = vadd.f32 %v2973, %v3241
        %3243 = vdwg.mxu0
        %v3244 = vmul.f32 %v3173, 0.5
        %v3245 = vmul.f32 %v3175, 0.5
        %v3246 = vmul.f32 %v3226, 0.5
        %v3247 = vmul.f32 %v3228, 0.5
        %v3248 = vmul.f32 %v3177, 0.5
        %v3249 = vmul.f32 %v3179, 0.5
        %v3250 = vmul.f32 %v3230, 0.5
        %v3251 = vmul.f32 %v3232, 0.5
        %v3252 = vmul.f32 %v3183, 0.5
        %v3253 = vmul.f32 %v3185, 0.5
        %v3254 = vmul.f32 %v3236, 0.5
        %v3255 = vmul.f32 %v3238, 0.5
        %v3256 = vmul.f32 %v3187, 0.5
        %v3257 = vmul.f32 %v3189, 0.5
        %v3258 = vmul.f32 %v3240, 0.5
        %v3259 = vmul.f32 %v3242, 0.5
        %v3260 = vmul.f32 %v3173, 0.044715
        %v3261 = vmul.f32 %v3175, 0.044715
        %v3262 = vmul.f32 %v3226, 0.044715
        %v3263 = vmul.f32 %v3228, 0.044715
        %v3264 = vmul.f32 %v3177, 0.044715
        %v3265 = vmul.f32 %v3179, 0.044715
        %v3266 = vmul.f32 %v3230, 0.044715
        %v3267 = vmul.f32 %v3232, 0.044715
        %v3268 = vmul.f32 %v3183, 0.044715
        %v3269 = vmul.f32 %v3185, 0.044715
        %v3270 = vmul.f32 %v3236, 0.044715
        %v3271 = vmul.f32 %v3238, 0.044715
        %v3272 = vmul.f32 %v3187, 0.044715
        %v3273 = vmul.f32 %v3189, 0.044715
        %v3274 = vmul.f32 %v3240, 0.044715
        %v3275 = vmul.f32 %v3242, 0.044715
        %v3276 = vmul.f32 %v3260, %v3173
        %v3277 = vmul.f32 %v3261, %v3175
        %v3278 = vmul.f32 %v3262, %v3226
        %v3279 = vmul.f32 %v3263, %v3228
        %v3280 = vmul.f32 %v3264, %v3177
        %v3281 = vmul.f32 %v3265, %v3179
        %v3282 = vmul.f32 %v3266, %v3230
        %v3283 = vmul.f32 %v3267, %v3232
        %v3284 = vmul.f32 %v3268, %v3183
        %v3285 = vmul.f32 %v3269, %v3185
        %v3286 = vmul.f32 %v3270, %v3236
        %v3287 = vmul.f32 %v3271, %v3238
        %v3288 = vmul.f32 %v3272, %v3187
        %v3289 = vmul.f32 %v3273, %v3189
        %v3290 = vmul.f32 %v3274, %v3240
        %v3291 = vmul.f32 %v3275, %v3242
        %v3292 = vmul.f32 %v3276, %v3173
        %v3293 = vmul.f32 %v3277, %v3175
        %v3294 = vmul.f32 %v3278, %v3226
        %v3295 = vmul.f32 %v3279, %v3228
        %v3296 = vmul.f32 %v3280, %v3177
        %v3297 = vmul.f32 %v3281, %v3179
        %v3298 = vmul.f32 %v3282, %v3230
        %v3299 = vmul.f32 %v3283, %v3232
        %v3300 = vmul.f32 %v3284, %v3183
        %v3301 = vmul.f32 %v3285, %v3185
        %v3302 = vmul.f32 %v3286, %v3236
        %v3303 = vmul.f32 %v3287, %v3238
        %v3304 = vmul.f32 %v3288, %v3187
        %v3305 = vmul.f32 %v3289, %v3189
        %v3306 = vmul.f32 %v3290, %v3240
        %v3307 = vmul.f32 %v3291, %v3242
        %v3308 = vadd.f32 %v3173, %v3292
        %v3309 = vadd.f32 %v3175, %v3293
        %v3310 = vadd.f32 %v3226, %v3294
        %v3311 = vadd.f32 %v3228, %v3295
        %v3312 = vadd.f32 %v3177, %v3296
        %v3313 = vadd.f32 %v3179, %v3297
        %v3314 = vadd.f32 %v3230, %v3298
        %v3315 = vadd.f32 %v3232, %v3299
        %v3316 = vadd.f32 %v3183, %v3300
        %v3317 = vadd.f32 %v3185, %v3301
        %v3318 = vadd.f32 %v3236, %v3302
        %v3319 = vadd.f32 %v3238, %v3303
        %v3320 = vadd.f32 %v3187, %v3304
        %v3321 = vadd.f32 %v3189, %v3305
        %v3322 = vadd.f32 %v3240, %v3306
        %v3323 = vadd.f32 %v3242, %v3307
        %v3324 = vmul.f32 %v3308, 0.7978846
        %v3325 = vmul.f32 %v3309, 0.7978846
        %v3326 = vmul.f32 %v3310, 0.7978846
        %v3327 = vmul.f32 %v3311, 0.7978846
        %v3328 = vmul.f32 %v3312, 0.7978846
        %v3329 = vmul.f32 %v3313, 0.7978846
        %v3330 = vmul.f32 %v3314, 0.7978846
        %v3331 = vmul.f32 %v3315, 0.7978846
        %v3332 = vmul.f32 %v3316, 0.7978846
        %v3333 = vmul.f32 %v3317, 0.7978846
        %v3334 = vmul.f32 %v3318, 0.7978846
        %v3335 = vmul.f32 %v3319, 0.7978846
        %v3336 = vmul.f32 %v3320, 0.7978846
        %v3337 = vmul.f32 %v3321, 0.7978846
        %v3338 = vmul.f32 %v3322, 0.7978846
        %v3339 = vmul.f32 %v3323, 0.7978846
        %v3340 = vtanh.pop %v3324
        %v3341 = vtanh.pop %v3325
        %v3342 = vtanh.pop %v3326
        %v3343 = vtanh.pop %v3327
        %v3344 = vtanh.pop %v3328
        %v3345 = vtanh.pop %v3329
        %v3346 = vtanh.pop %v3330
        %v3347 = vtanh.pop %v3331
        %v3348 = vtanh.pop %v3332
        %v3349 = vtanh.pop %v3333
        %v3350 = vtanh.pop %v3334
        %v3351 = vtanh.pop %v3335
        %v3352 = vtanh.pop %v3336
        %v3353 = vtanh.pop %v3337
        %v3354 = vtanh.pop %v3338
        %v3355 = vtanh.pop %v3339
        %v3356 = vadd.f32 %v3340, 1.0
        %v3357 = vadd.f32 %v3341, 1.0
        %v3358 = vadd.f32 %v3342, 1.0
        %v3359 = vadd.f32 %v3343, 1.0
        %v3360 = vadd.f32 %v3344, 1.0
        %v3361 = vadd.f32 %v3345, 1.0
        %v3362 = vadd.f32 %v3346, 1.0
        %v3363 = vadd.f32 %v3347, 1.0
        %v3364 = vadd.f32 %v3348, 1.0
        %v3365 = vadd.f32 %v3349, 1.0
        %v3366 = vadd.f32 %v3350, 1.0
        %v3367 = vadd.f32 %v3351, 1.0
        %v3368 = vadd.f32 %v3352, 1.0
        %v3369 = vadd.f32 %v3353, 1.0
        %v3370 = vadd.f32 %v3354, 1.0
        %v3371 = vadd.f32 %v3355, 1.0
        %v3372 = vmul.f32 %v3244, %v3356
        %v3373 = vmul.f32 %v3245, %v3357
        %v3374 = vmul.f32 %v3246, %v3358
        %v3375 = vmul.f32 %v3247, %v3359
        %v3376 = vmul.f32 %v3248, %v3360
        %v3377 = vmul.f32 %v3249, %v3361
        %v3378 = vmul.f32 %v3250, %v3362
        %v3379 = vmul.f32 %v3251, %v3363
        %v3380 = vmul.f32 %v3252, %v3364
        %v3381 = vmul.f32 %v3253, %v3365
        %v3382 = vmul.f32 %v3254, %v3366
        %v3383 = vmul.f32 %v3255, %v3367
        %v3384 = vmul.f32 %v3256, %v3368
        %v3385 = vmul.f32 %v3257, %v3369
        %v3386 = vmul.f32 %v3258, %v3370
        %v3387 = vmul.f32 %v3259, %v3371
        %v3388 = vpack.c.bf16 %v3376, %v3372
        %v3389 = vpack.c.bf16 %v3377, %v3373
        %v3390 = vpack.c.bf16 %v3378, %v3374
        %v3391 = vpack.c.bf16 %v3379, %v3375
        %v3392 = vpack.c.bf16 %v3384, %v3380
        %v3393 = vpack.c.bf16 %v3385, %v3381
        %v3394 = vpack.c.bf16 %v3386, %v3382
        %v3395 = vpack.c.bf16 %v3387, %v3383
        %v3396 = vld [vmem:[#allocation10] sm:$0xf]
        %v3397 = vld [vmem:[#allocation10 + $0x4] sm:$0xf]
        %v3398 = vld [vmem:[#allocation10 + $0x8] sm:$0xf]
        %v3399 = vld [vmem:[#allocation10 + $0xc] sm:$0xf]
        %v3400 = vld [vmem:[#allocation10 + $0x10] sm:$0xf]
        %v3401 = vld [vmem:[#allocation10 + $0x14] sm:$0xf]
        %v3402 = vld [vmem:[#allocation10 + $0x18] sm:$0xf]
        %v3403 = vld [vmem:[#allocation10 + $0x1c] sm:$0xf]
        %v3404 = vld [vmem:[#allocation10 + $0x20] sm:$0xf]
        %v3405 = vld [vmem:[#allocation10 + $0x24] sm:$0xf]
        %v3406 = vld [vmem:[#allocation10 + $0x28] sm:$0xf]
        %v3407 = vld [vmem:[#allocation10 + $0x2c] sm:$0xf]
        %v3408 = vld [vmem:[#allocation10 + $0x30] sm:$0xf]
        %v3409 = vld [vmem:[#allocation10 + $0x34] sm:$0xf]
        %v3410 = vld [vmem:[#allocation10 + $0x38] sm:$0xf]
        %v3411 = vld [vmem:[#allocation10 + $0x3c] sm:$0xf]
        %v3412 = vld [vmem:[#allocation10 + $0x40] sm:$0xf]
        %v3413 = vld [vmem:[#allocation10 + $0x44] sm:$0xf]
        %v3414 = vld [vmem:[#allocation10 + $0x48] sm:$0xf]
        %v3415 = vld [vmem:[#allocation10 + $0x4c] sm:$0xf]
        %v3416 = vld [vmem:[#allocation10 + $0x50] sm:$0xf]
        %v3417 = vld [vmem:[#allocation10 + $0x54] sm:$0xf]
        %v3418 = vld [vmem:[#allocation10 + $0x58] sm:$0xf]
        %v3419 = vld [vmem:[#allocation10 + $0x5c] sm:$0xf]
        %v3420 = vld [vmem:[#allocation10 + $0x60] sm:$0xf]
        %v3421 = vld [vmem:[#allocation10 + $0x64] sm:$0xf]
        %v3422 = vld [vmem:[#allocation10 + $0x68] sm:$0xf]
        %v3423 = vld [vmem:[#allocation10 + $0x6c] sm:$0xf]
        %v3424 = vld [vmem:[#allocation10 + $0x70] sm:$0xf]
        %v3425 = vld [vmem:[#allocation10 + $0x74] sm:$0xf]
        %v3426 = vld [vmem:[#allocation10 + $0x78] sm:$0xf]
        %v3427 = vld [vmem:[#allocation10 + $0x7c] sm:$0xf]
        %v3428 = vld [vmem:[#allocation10 + $0x80] sm:$0xf]
        %v3429 = vld [vmem:[#allocation10 + $0x84] sm:$0xf]
        %v3430 = vld [vmem:[#allocation10 + $0x88] sm:$0xf]
        %v3431 = vld [vmem:[#allocation10 + $0x8c] sm:$0xf]
        %v3432 = vld [vmem:[#allocation10 + $0x90] sm:$0xf]
        %v3433 = vld [vmem:[#allocation10 + $0x94] sm:$0xf]
        %v3434 = vld [vmem:[#allocation10 + $0x98] sm:$0xf]
        %v3435 = vld [vmem:[#allocation10 + $0x9c] sm:$0xf]
        %v3436 = vld [vmem:[#allocation10 + $0xa0] sm:$0xf]
        %v3437 = vld [vmem:[#allocation10 + $0xa4] sm:$0xf]
        %v3438 = vld [vmem:[#allocation10 + $0xa8] sm:$0xf]
        %v3439 = vld [vmem:[#allocation10 + $0xac] sm:$0xf]
        %v3440 = vld [vmem:[#allocation10 + $0xb0] sm:$0xf]
        %v3441 = vld [vmem:[#allocation10 + $0xb4] sm:$0xf]
        %v3442 = vld [vmem:[#allocation10 + $0xb8] sm:$0xf]
        %v3443 = vld [vmem:[#allocation10 + $0xbc] sm:$0xf]
        %v3444 = vld [vmem:[#allocation10 + $0xc0] sm:$0xf]
        %v3445 = vld [vmem:[#allocation10 + $0xc4] sm:$0xf]
        %v3446 = vld [vmem:[#allocation10 + $0xc8] sm:$0xf]
        %v3447 = vld [vmem:[#allocation10 + $0xcc] sm:$0xf]
        %v3448 = vld [vmem:[#allocation10 + $0xd0] sm:$0xf]
        %v3449 = vld [vmem:[#allocation10 + $0xd4] sm:$0xf]
        %v3450 = vld [vmem:[#allocation10 + $0xd8] sm:$0xf]
        %v3451 = vld [vmem:[#allocation10 + $0xdc] sm:$0xf]
        %v3452 = vld [vmem:[#allocation10 + $0xe0] sm:$0xf]
        %v3453 = vld [vmem:[#allocation10 + $0xe4] sm:$0xf]
        %v3454 = vld [vmem:[#allocation10 + $0xe8] sm:$0xf]
        %v3455 = vld [vmem:[#allocation10 + $0xec] sm:$0xf]
        %v3456 = vld [vmem:[#allocation10 + $0xf0] sm:$0xf]
        %v3457 = vld [vmem:[#allocation10 + $0xf4] sm:$0xf]
        %v3458 = vld [vmem:[#allocation10 + $0xf8] sm:$0xf]
        %v3459 = vld [vmem:[#allocation10 + $0xfc] sm:$0xf]
        %v3460 = vld [vmem:[%s11] sm:$0x1]
        %v3462 = vlaneseq
        %v3463 = vshrl.u32 %v3462, 7
        %v3464 = vsub.s32 0, %v3463
        %v3465 = vrot.slane %v3460, %v3464
        %v3531 = vunpack.c.l.b16 %v3396
        %v3532 = vunpack.c.l.b16 %v3397
        %v3533 = vunpack.c.l.b16 %v3398
        %v3534 = vunpack.c.l.b16 %v3399
        %v3535 = vunpack.c.l.b16 %v3400
        %v3536 = vunpack.c.l.b16 %v3401
        %v3537 = vunpack.c.l.b16 %v3402
        %v3538 = vunpack.c.l.b16 %v3403
        %v3539 = vunpack.c.l.b16 %v3404
        %v3540 = vunpack.c.l.b16 %v3405
        %v3541 = vunpack.c.l.b16 %v3406
        %v3542 = vunpack.c.l.b16 %v3407
        %v3543 = vunpack.c.l.b16 %v3408
        %v3544 = vunpack.c.l.b16 %v3409
        %v3545 = vunpack.c.l.b16 %v3410
        %v3546 = vunpack.c.l.b16 %v3411
        %v3547 = vunpack.c.l.b16 %v3412
        %v3548 = vunpack.c.l.b16 %v3413
        %v3549 = vunpack.c.l.b16 %v3414
        %v3550 = vunpack.c.l.b16 %v3415
        %v3551 = vunpack.c.l.b16 %v3416
        %v3552 = vunpack.c.l.b16 %v3417
        %v3553 = vunpack.c.l.b16 %v3418
        %v3554 = vunpack.c.l.b16 %v3419
        %v3555 = vunpack.c.l.b16 %v3420
        %v3556 = vunpack.c.l.b16 %v3421
        %v3557 = vunpack.c.l.b16 %v3422
        %v3558 = vunpack.c.l.b16 %v3423
        %v3559 = vunpack.c.l.b16 %v3424
        %v3560 = vunpack.c.l.b16 %v3425
        %v3561 = vunpack.c.l.b16 %v3426
        %v3562 = vunpack.c.l.b16 %v3427
        %v3563 = vunpack.c.l.b16 %v3428
        %v3564 = vunpack.c.l.b16 %v3429
        %v3565 = vunpack.c.l.b16 %v3430
        %v3566 = vunpack.c.l.b16 %v3431
        %v3567 = vunpack.c.l.b16 %v3432
        %v3568 = vunpack.c.l.b16 %v3433
        %v3569 = vunpack.c.l.b16 %v3434
        %v3570 = vunpack.c.l.b16 %v3435
        %v3571 = vunpack.c.l.b16 %v3436
        %v3572 = vunpack.c.l.b16 %v3437
        %v3573 = vunpack.c.l.b16 %v3438
        %v3574 = vunpack.c.l.b16 %v3439
        %v3575 = vunpack.c.l.b16 %v3440
        %v3576 = vunpack.c.l.b16 %v3441
        %v3577 = vunpack.c.l.b16 %v3442
        %v3578 = vunpack.c.l.b16 %v3443
        %v3579 = vunpack.c.l.b16 %v3444
        %v3580 = vunpack.c.l.b16 %v3445
        %v3581 = vunpack.c.l.b16 %v3446
        %v3582 = vunpack.c.l.b16 %v3447
        %v3583 = vunpack.c.l.b16 %v3448
        %v3584 = vunpack.c.l.b16 %v3449
        %v3585 = vunpack.c.l.b16 %v3450
        %v3586 = vunpack.c.l.b16 %v3451
        %v3587 = vunpack.c.l.b16 %v3452
        %v3588 = vunpack.c.l.b16 %v3453
        %v3589 = vunpack.c.l.b16 %v3454
        %v3590 = vunpack.c.l.b16 %v3455
        %v3591 = vunpack.c.l.b16 %v3456
        %v3592 = vunpack.c.l.b16 %v3457
        %v3593 = vunpack.c.l.b16 %v3458
        %v3594 = vunpack.c.l.b16 %v3459
        %v3595 = vpack.c.b16 %v3532, %v3531
        %v3596 = vpack.c.b16 %v3534, %v3533
        %v3597 = vpack.c.b16 %v3536, %v3535
        %v3598 = vpack.c.b16 %v3538, %v3537
        %v3599 = vpack.c.b16 %v3540, %v3539
        %v3600 = vpack.c.b16 %v3542, %v3541
        %v3601 = vpack.c.b16 %v3544, %v3543
        %v3602 = vpack.c.b16 %v3546, %v3545
        %v3603 = vpack.c.b16 %v3548, %v3547
        %v3604 = vpack.c.b16 %v3550, %v3549
        %v3605 = vpack.c.b16 %v3552, %v3551
        %v3606 = vpack.c.b16 %v3554, %v3553
        %v3607 = vpack.c.b16 %v3556, %v3555
        %v3608 = vpack.c.b16 %v3558, %v3557
        %v3609 = vpack.c.b16 %v3560, %v3559
        %v3610 = vpack.c.b16 %v3562, %v3561
        %v3611 = vpack.c.b16 %v3564, %v3563
        %v3612 = vpack.c.b16 %v3566, %v3565
        %v3613 = vpack.c.b16 %v3568, %v3567
        %v3614 = vpack.c.b16 %v3570, %v3569
        %v3615 = vpack.c.b16 %v3572, %v3571
        %v3616 = vpack.c.b16 %v3574, %v3573
        %v3617 = vpack.c.b16 %v3576, %v3575
        %v3618 = vpack.c.b16 %v3578, %v3577
        %v3619 = vpack.c.b16 %v3580, %v3579
        %v3620 = vpack.c.b16 %v3582, %v3581
        %v3621 = vpack.c.b16 %v3584, %v3583
        %v3622 = vpack.c.b16 %v3586, %v3585
        %v3623 = vpack.c.b16 %v3588, %v3587
        %v3624 = vpack.c.b16 %v3590, %v3589
        %v3625 = vpack.c.b16 %v3592, %v3591
        %v3626 = vpack.c.b16 %v3594, %v3593
        %3659 = vmatprep.subr.bf16.mxu0 0
        %3660 = vmatpush1.bf16.msra.mxu0 %v3595
        %3661 = vmatprep.subr.bf16.mxu0 0
        %3662 = vmatpush1.bf16.msra.mxu0 %v3596
        %3663 = vmatprep.subr.bf16.mxu0 0
        %3664 = vmatpush1.bf16.msra.mxu0 %v3597
        %3665 = vmatprep.subr.bf16.mxu0 0
        %3666 = vmatpush1.bf16.msra.mxu0 %v3598
        %3667 = vmatprep.subr.bf16.mxu0 0
        %3668 = vmatpush1.bf16.msra.mxu0 %v3599
        %3669 = vmatprep.subr.bf16.mxu0 0
        %3670 = vmatpush1.bf16.msra.mxu0 %v3600
        %3671 = vmatprep.subr.bf16.mxu0 0
        %3672 = vmatpush1.bf16.msra.mxu0 %v3601
        %3673 = vmatprep.subr.bf16.mxu0 0
        %3674 = vmatpush1.bf16.msra.mxu0 %v3602
        %3675 = vmatprep.subr.bf16.mxu0 0
        %3676 = vmatpush1.bf16.msra.mxu0 %v3603
        %3677 = vmatprep.subr.bf16.mxu0 0
        %3678 = vmatpush1.bf16.msra.mxu0 %v3604
        %3679 = vmatprep.subr.bf16.mxu0 0
        %3680 = vmatpush1.bf16.msra.mxu0 %v3605
        %3681 = vmatprep.subr.bf16.mxu0 0
        %3682 = vmatpush1.bf16.msra.mxu0 %v3606
        %3683 = vmatprep.subr.bf16.mxu0 0
        %3684 = vmatpush1.bf16.msra.mxu0 %v3607
        %3685 = vmatprep.subr.bf16.mxu0 0
        %3686 = vmatpush1.bf16.msra.mxu0 %v3608
        %3687 = vmatprep.subr.bf16.mxu0 0
        %3688 = vmatpush1.bf16.msra.mxu0 %v3609
        %3689 = vmatprep.subr.bf16.mxu0 0
        %3690 = vmatpush1.bf16.msra.mxu0 %v3610
        %3691 = vmatprep.mubr.bf16.mxu0 %v3389
        %3692 = vmatmul.mubr.bf16.gmra.mrb[0].mxu0 %v3388
        %v3693 = vpop.f32.mrb[0].mxu0
        %v3694 = vadd.f32 %v3465, %v3693
        %v3695 = vpop.f32.mrb[0].mxu0
        %v3696 = vpop.f32.mrb[0].mxu0
        %v3697 = vadd.f32 %v3465, %v3696
        %v3698 = vpop.f32.mrb[0].mxu0
        %3699 = vmatprep.mubr.bf16.mxu0 %v3393
        %3700 = vmatmul.mubr.bf16.gmra.mrb[0].mxu0 %v3392
        %v3701 = vpop.f32.mrb[0].mxu0
        %v3702 = vadd.f32 %v3465, %v3701
        %v3703 = vpop.f32.mrb[0].mxu0
        %v3704 = vpop.f32.mrb[0].mxu0
        %v3705 = vadd.f32 %v3465, %v3704
        %v3706 = vpop.f32.mrb[0].mxu0
        %3707 = vdwg.mxu0
        %3708 = vmatprep.subr.bf16.mxu0 0
        %3709 = vmatpush1.bf16.msra.mxu0 %v3611
        %3710 = vmatprep.subr.bf16.mxu0 0
        %3711 = vmatpush1.bf16.msra.mxu0 %v3612
        %3712 = vmatprep.subr.bf16.mxu0 0
        %3713 = vmatpush1.bf16.msra.mxu0 %v3613
        %3714 = vmatprep.subr.bf16.mxu0 0
        %3715 = vmatpush1.bf16.msra.mxu0 %v3614
        %3716 = vmatprep.subr.bf16.mxu0 0
        %3717 = vmatpush1.bf16.msra.mxu0 %v3615
        %3718 = vmatprep.subr.bf16.mxu0 0
        %3719 = vmatpush1.bf16.msra.mxu0 %v3616
        %3720 = vmatprep.subr.bf16.mxu0 0
        %3721 = vmatpush1.bf16.msra.mxu0 %v3617
        %3722 = vmatprep.subr.bf16.mxu0 0
        %3723 = vmatpush1.bf16.msra.mxu0 %v3618
        %3724 = vmatprep.subr.bf16.mxu0 0
        %3725 = vmatpush1.bf16.msra.mxu0 %v3619
        %3726 = vmatprep.subr.bf16.mxu0 0
        %3727 = vmatpush1.bf16.msra.mxu0 %v3620
        %3728 = vmatprep.subr.bf16.mxu0 0
        %3729 = vmatpush1.bf16.msra.mxu0 %v3621
        %3730 = vmatprep.subr.bf16.mxu0 0
        %3731 = vmatpush1.bf16.msra.mxu0 %v3622
        %3732 = vmatprep.subr.bf16.mxu0 0
        %3733 = vmatpush1.bf16.msra.mxu0 %v3623
        %3734 = vmatprep.subr.bf16.mxu0 0
        %3735 = vmatpush1.bf16.msra.mxu0 %v3624
        %3736 = vmatprep.subr.bf16.mxu0 0
        %3737 = vmatpush1.bf16.msra.mxu0 %v3625
        %3738 = vmatprep.subr.bf16.mxu0 0
        %3739 = vmatpush1.bf16.msra.mxu0 %v3626
        %3740 = vmatprep.mubr.bf16.mxu0 %v3391
        %3741 = vmatmul.mubr.bf16.gmra.mrb[0].mxu0 %v3390
        %v3742 = vpop.f32.mrb[0].mxu0
        %v3743 = vadd.f32 %v3694, %v3742
        %v3744 = vpop.f32.mrb[0].mxu0
        %v3745 = vpop.f32.mrb[0].mxu0
        %v3746 = vadd.f32 %v3697, %v3745
        %v3747 = vpop.f32.mrb[0].mxu0
        %3748 = vmatprep.mubr.bf16.mxu0 %v3395
        %3749 = vmatmul.mubr.bf16.gmra.mrb[0].mxu0 %v3394
        %v3750 = vpop.f32.mrb[0].mxu0
        %v3751 = vadd.f32 %v3702, %v3750
        %v3752 = vpop.f32.mrb[0].mxu0
        %v3753 = vpop.f32.mrb[0].mxu0
        %v3754 = vadd.f32 %v3705, %v3753
        %v3755 = vpop.f32.mrb[0].mxu0
        %3756 = vdwg.mxu0
        %v3757 = vadd.f32 %v2852, %v3743
        %v3758 = vadd.f32 %v2853, %v3746
        %v3759 = vadd.f32 %v2854, %v3751
        %v3760 = vadd.f32 %v2855, %v3754
        %3761 = vst [vmem:[%s490] sm:$0xff] %v3757
        %3762 = vst [vmem:[%s490 + $0x8] sm:$0xff] %v3758
        %3763 = vst [vmem:[%s490 + $0x10] sm:$0xff] %v3759
        %3764 = vst [vmem:[%s490 + $0x18] sm:$0xff] %v3760
        %s3765 = sand.u32 %s296, 1
        %s3766 = scalar_lea.sflag [#allocation4], %s3765
        %s3767 = sand.u32 %s296, 1
        %s3768 = smul.addr %s3767, 32
        %s3769 = scalar_lea.vmem [#allocation11], %s3768
        // Predicated region
        $region89: #{tpu_custom_call.1} parent=67 // pred_check
          %p3770 = pneg %p306
        $region90: #{tpu_custom_call.1} parent=67 // pred_check_branch
          %3772 = sbr.rel (%p3770) target = $region92
        $region91: #{tpu_custom_call.1} parent=67 // pred_region
          %s3773 = smul.u32 2, %s31
          %s3775 = ssub.s32 512, 512
          %3776 = vsyncadd %s3766, %s3775
          %s3777 = smul.addr %s3773, 2
          %s3778 = smul.addr %s3777, 128
          %s3779 = scalar_lea.hbm %s12, %s3778
          %s3780 = sshll.u32 %s3769, 4
          %s3781 = int_to_ptr.vmem [resolvable:$true] %s3780
          %3786 = dma.vmem_to_hbm [thread:$0]  %s3781, 512, %s3779, %s3766, 128, 128, 8
        $region92: #{tpu_custom_call.1} parent=67 // pred_fallthru
          _
      $region68: #{tpu_custom_call.1} parent=5 // pred_fallthru
        _
      %p3787 = scmp.le.s32.totalorder 2, %s26
      // Predicated region
      $region93: #{tpu_custom_call.1} parent=5 // pred_check
        %p3788 = pneg %p3787
      $region94: #{tpu_custom_call.1} parent=5 // pred_check_branch
        %3790 = sbr.rel (%p3788) target = $region96
      $region95: #{tpu_custom_call.1} parent=5 // pred_region
        %s3791 = ssub.s32 %s26, 2
        // Predicated region
        $region97: #{tpu_custom_call.1} parent=95 // pred_check
          %p3792 = pneg %p312
        $region98: #{tpu_custom_call.1} parent=95 // pred_check_branch
          %3794 = sbr.rel (%p3792) target = $region100
        $region99: #{tpu_custom_call.1} parent=95 // pred_region
          %s3795 = sand.u32 %s297, 1
          %s3796 = scalar_lea.sflag [#allocation4], %s3795
          %s3797 = sand.u32 %s297, 1
          %s3798 = smul.addr %s3797, 32
          %s3799 = scalar_lea.vmem [#allocation11], %s3798
          %3800 = dma.done %s3796, 512
        $region100: #{tpu_custom_call.1} parent=95 // pred_fallthru
          _
      $region96: #{tpu_custom_call.1} parent=5 // pred_fallthru
        _
    $region6: #{tpu_custom_call.1} parent=1 // loop_footer
      %s30 = sadd.s32 1, %s26
    $region7: #{tpu_custom_call.1} parent=1 // loop_footer_branch
      %25 = sbr.rel target = $region3
    $region8: #{tpu_custom_call.1} parent=1 // loop_exit
      _
    %3801 = vsyncpa [#allocation3], 1
    %s3802 = scalar_lea.sflag [#allocation3], 1
    %3803 = vsyncpa %s3802, 1
    %3804 = vsyncpa [#allocation6], 1
    %3805 = vsyncpa [#allocation9], 1
    %3806 = vsyncpa [#allocation4], 1
    %s3807 = scalar_lea.sflag [#allocation4], 1
    %3808 = vsyncpa %s3807, 1

</llo_original>
